<compile_context>
chip_gen: v7x
topology: tpu7x:2x2x1
jax: 0.10.0
libtpu: 0.0.40
codegen_flags: <defaults>
</compile_context>

<pallas_src>
import functools
import math

import jax
import jax.numpy as jnp
import numpy as np
from jax import lax
from jax.experimental import pallas as pl
from jax.experimental.pallas import tpu as pltpu


# ------------------------------ fused kernel -------------------------------- #

def _fused_forward_kernel(
    # row-tiled activations (bf16)
    x_ref, pos_ref,
    # broadcast tensors / weights (full-extent blocks)
    logc_ref,
    fc1w_ref, fc1b_ref, fc2w_ref, fc2b_ref,
    projw_ref, projb_ref,
    qwa_ref, qwb_ref, qb_ref,          # per-head [h, gdim, d] / [h, 1, d]
    kt_ref, v_ref, ffw1_ref,           # per-head [h, d, C] / [h, C, d] / [h, d, hd]
    ffb1_ref, ffw2_ref, ffb2_ref,
    outw_ref, outb_ref,
    # output (lane-dense, padded to 128 cols)
    o_ref,
    *, heads, hd):
    f32 = jnp.float32
    bf16 = jnp.bfloat16

    x = x_ref[...]                                     # bf16 [tm, din]
    pos = pos_ref[...]                                 # bf16 [tm, gdim]
    tm = x.shape[0]

    # ---- fc_in : Linear -> ReLU -> (Dropout=id) -> Linear ----
    h1 = jnp.maximum(
        jnp.dot(x, fc1w_ref[...], preferred_element_type=f32) + fc1b_ref[...], 0.0)
    x2 = jnp.dot(h1.astype(bf16), fc2w_ref[...],
                 preferred_element_type=f32) + fc2b_ref[...]

    # ---- global attention: projection (softmax scale folded into q weights) ----
    proj = (jnp.dot(x2.astype(bf16), projw_ref[...], preferred_element_type=f32)
            + projb_ref[...]).astype(bf16)             # [tm, gdim]

    logc = logc_ref[...]                               # f32 [1, C]

    def head_body(hh, f1_acc):
        # q for this head directly from per-head weight blocks (no lane slicing).
        q_h = (jnp.dot(proj, qwa_ref[hh], preferred_element_type=f32)
               + jnp.dot(pos, qwb_ref[hh], preferred_element_type=f32)
               + qb_ref[hh])                           # f32 [tm, d]
        dots = (jnp.dot(q_h.astype(bf16), kt_ref[hh],
                        preferred_element_type=f32) + logc)     # [tm, C]
        m = jnp.max(dots, axis=-1, keepdims=True)
        e = jnp.exp(dots - m)
        s = jnp.sum(e, axis=-1, keepdims=True)
        o_h = jnp.dot(e.astype(bf16), v_ref[hh], preferred_element_type=f32)
        o_h = o_h * pl.reciprocal(s, approx=True)      # softmax normalization (EUP)
        # first ff matmul accumulated per head -> head outputs never concatenated
        return f1_acc + jnp.dot(o_h.astype(bf16), ffw1_ref[hh],
                                preferred_element_type=f32)

    f1_acc = lax.fori_loop(0, heads, head_body,
                           jnp.zeros((tm, hd), f32), unroll=True)

    # ---- ff : Linear -> ReLU -> (Dropout=id) -> Linear -> ReLU -> (Dropout=id) ----
    f1 = jnp.maximum(f1_acc + ffb1_ref[...], 0.0)
    f2 = jnp.maximum(
        jnp.dot(f1.astype(bf16), ffw2_ref[...], preferred_element_type=f32)
        + ffb2_ref[...], 0.0)

    # ---- fc_out (lane-dense store: out columns padded to 128) ----
    o_ref[...] = (jnp.dot(f2.astype(bf16), outw_ref[...],
                          preferred_element_type=f32) + outb_ref[...])


# ------------------------------- wrapper ------------------------------------ #

def largegt_forward(p, seq, x, pos_enc, batch_idx, cfg):
    # fc_in_seq(seq) output is never consumed on the conv_type='global' path
    # (LargeGTLayer.forward ignores seq), so the dead MLP over seq is removed.
    del seq
    f32, bf16 = jnp.float32, jnp.bfloat16
    h = cfg["heads"]
    hid = cfg["hidden"]
    C = cfg["num_centroids"]
    gdim = cfg["global_dim"]
    out_dim = cfg["out"]
    d = hid
    hd = h * d

    n = int(batch_idx.shape[0])
    xg = x[:n]
    din = xg.shape[1]
    scale = 1.0 / math.sqrt(d)

    # centroid occupancy -> log-count bias (tiny [C] op, stays f32: may hold -inf)
    counts = jnp.zeros((C,), f32).at[p["c_idx"]].add(1.0)
    log_count = jnp.log(counts).reshape(1, C)

    # ---- grid-invariant codebook projections hoisted out of the kernel ----
    k = p["vq_k"] @ p["k_w"] + p["k_b"]                             # [C, hd]
    v = p["vq_v"] @ p["v_w"] + p["v_b"]                             # [C, hd]
    kt3 = k.reshape(C, h, d).transpose(1, 2, 0).astype(bf16)        # [h, d, C]
    v3 = v.reshape(C, h, d).transpose(1, 0, 2).astype(bf16)         # [h, C, d]

    # ---- one-time weight re-layouts: per-head, softmax scale folded in ----
    qwa3 = (p["q_w"][:gdim] * scale).reshape(gdim, h, d).transpose(1, 0, 2).astype(bf16)
    qwb3 = (p["q_w"][gdim:] * scale).reshape(gdim, h, d).transpose(1, 0, 2).astype(bf16)
    qb3 = (p["q_b"] * scale).reshape(1, h, d).transpose(1, 0, 2).astype(f32)   # [h,1,d]
    ffw13 = p["ff_w1"].reshape(h, d, hd).astype(bf16)               # [h, d, hd]

    fc1w = p["fc_in_w1"].astype(bf16)
    fc1b = p["fc_in_b1"].reshape(1, hid).astype(f32)
    fc2w = p["fc_in_w2"].astype(bf16)
    fc2b = p["fc_in_b2"].reshape(1, hid).astype(f32)
    projw = p["proj_w"].astype(bf16)
    projb = p["proj_b"].reshape(1, gdim).astype(f32)
    ffb1 = p["ff_b1"].reshape(1, hd).astype(f32)
    ffw2 = p["ff_w2"].astype(bf16)
    ffb2 = p["ff_b2"].reshape(1, hid).astype(f32)

    # lane-dense fc_out: pad the narrow (out_dim) axis to a multiple of 128
    out_pad = max(128, ((out_dim + 127) // 128) * 128)
    outw_pad = jnp.zeros((hid, out_pad), f32).at[:, :out_dim].set(p["out_w"]).astype(bf16)
    outb_pad = jnp.zeros((1, out_pad), f32).at[:, :out_dim].set(p["out_b"].reshape(1, -1))

    # ---- generation-aware row tile + VMEM budget ----
    try:
        vmem_cap = int(pltpu.get_tpu_info().vmem_capacity_bytes)
    except Exception:
        vmem_cap = 64 * 2 ** 20
    max_tile = 512 if vmem_cap >= 100 * 2 ** 20 else 256   # 256 on v7x (64 MiB VMEM)

    tm = max_tile
    while tm > 8 and -(-n // tm) < 2:    # aim for >= 2 grid steps (both TCs busy)
        tm //= 2
    n_pad = -(-n // tm) * tm
    grid = (n_pad // tm,)

    xg_b = xg.astype(bf16)
    pos_b = pos_enc[:n].astype(bf16)
    if n_pad != n:
        xg_b = jnp.pad(xg_b, ((0, n_pad - n), (0, 0)))
        pos_b = jnp.pad(pos_b, ((0, n_pad - n), (0, 0)))

    weight_ops = [log_count, fc1w, fc1b, fc2w, fc2b, projw, projb,
                  qwa3, qwb3, qb3, kt3, v3, ffw13, ffb1, ffw2, ffb2,
                  outw_pad, outb_pad]
    weight_bytes = sum(int(np.prod(a.shape)) * a.dtype.itemsize for a in weight_ops)
    tile_bytes = 2 * (tm * din * 2 + tm * gdim * 2) + 2 * tm * out_pad * 4
    interm_bytes = 8 * tm * max(hd, C, hid, out_pad) * 4
    vmem_limit = int(min(0.75 * vmem_cap,
                         max(32 * 2 ** 20,
                             2 * (weight_bytes + tile_bytes + interm_bytes))))

    row = lambda i: (i, 0)
    kernel = functools.partial(_fused_forward_kernel, heads=h, hd=hd)

    def run(weight_mode):
        def wfull(shape):
            rank = len(shape)
            idx = lambda i: (0,) * rank
            if weight_mode is None:
                return pl.BlockSpec(shape, idx)
            return pl.BlockSpec(shape, idx, pipeline_mode=weight_mode)

        in_specs = [
            pl.BlockSpec((tm, din), row),                 # x tile (bf16)
            pl.BlockSpec((tm, gdim), row),                # pos_enc tile (bf16)
            wfull((1, C)),                                # log_count
            wfull(fc1w.shape), wfull((1, hid)),           # fc_in w1 / b1
            wfull(fc2w.shape), wfull((1, hid)),           # fc_in w2 / b2
            wfull(projw.shape), wfull((1, gdim)),         # proj w / b
            wfull((h, gdim, d)), wfull((h, gdim, d)),     # q_wa / q_wb (per head)
            wfull((h, 1, d)),                             # q_b (per head)
            wfull((h, d, C)), wfull((h, C, d)),           # K^T / V (per head, hoisted)
            wfull((h, d, hd)),                            # ff_w1 (per head)
            wfull((1, hd)),                               # ff b1
            wfull(ffw2.shape), wfull((1, hid)),           # ff w2 / b2
            wfull((hid, out_pad)), wfull((1, out_pad)),   # fc_out w / b (lane-dense)
        ]
        return pl.pallas_call(
            kernel,
            out_shape=jax.ShapeDtypeStruct((n_pad, out_pad), f32),
            grid=grid,
            in_specs=in_specs,
            out_specs=pl.BlockSpec((tm, out_pad), row),
            compiler_params=pltpu.CompilerParams(
                dimension_semantics=("parallel",),
                vmem_limit_bytes=vmem_limit),
        )(xg_b, pos_b, log_count,
          fc1w, fc1b, fc2w, fc2b, projw, projb,
          qwa3, qwb3, qb3, kt3, v3, ffw13,
          ffb1, ffw2, ffb2, outw_pad, outb_pad)

    try:
        # Constant-index weight blocks need only a single VMEM buffer.
        y = run(pl.Buffered(1))
    except Exception:
        # Fallback if this jax version rejects buffer_count=1 for pipeline_mode.
        y = run(None)

    return y[:n, :out_dim]


# ------------------------------ parameters --------------------------------- #

def init_params(key, cfg):
    din = cfg["in_channels"]
    hid = cfg["hidden"]
    out = cfg["out"]
    gdim = cfg["global_dim"]
    h = cfg["heads"]
    C = cfg["num_centroids"]
    N = cfg["num_nodes"]
    hd = h * hid

    def dense(k, shape):
        return jax.random.normal(k, shape, dtype=jnp.float32) * 0.05

    keys = jax.random.split(key, 32)
    p = {
        # fc_in
        "fc_in_w1": dense(keys[0], (din, hid)), "fc_in_b1": dense(keys[1], (hid,)),
        "fc_in_w2": dense(keys[2], (hid, hid)), "fc_in_b2": dense(keys[3], (hid,)),
        # fc_in_seq exists in the module but its output is unused on the
        # 'global' conv path, so its weights are kept only for parity.
        "fc_seq_w1": dense(keys[4], (din, hid)), "fc_seq_b1": dense(keys[5], (hid,)),
        "fc_seq_w2": dense(keys[6], (hid, hid)), "fc_seq_b2": dense(keys[7], (hid,)),
        # LargeGTLayer global path
        "proj_w": dense(keys[8], (hid, gdim)), "proj_b": dense(keys[9], (gdim,)),
        "q_w": dense(keys[10], (2 * gdim, hd)), "q_b": dense(keys[11], (hd,)),
        "k_w": dense(keys[12], (2 * gdim, hd)), "k_b": dense(keys[13], (hd,)),
        "v_w": dense(keys[14], (gdim, hd)), "v_b": dense(keys[15], (hd,)),
        # VQ codebooks (stand-ins for VectorQuantizerEMA.get_k / get_v)
        "vq_k": dense(keys[16], (C, 2 * gdim)),
        "vq_v": dense(keys[17], (C, gdim)),
        # c_idx buffer: randint(0, num_centroids, (num_nodes,))
        "c_idx": jax.random.randint(keys[18], (N,), 0, C, dtype=jnp.int32),
        # ff block
        "ff_w1": dense(keys[19], (hd, hd)), "ff_b1": dense(keys[20], (hd,)),
        "ff_w2": dense(keys[21], (hd, hid)), "ff_b2": dense(keys[22], (hid,)),
        # fc_out
        "out_w": dense(keys[23], (hid, out)), "out_b": dense(keys[24], (out,)),
    }
    return p


# --------------------------- pure-jnp reference ------------------------------ #

def largegt_forward_ref(p, seq, x, pos_enc, batch_idx, cfg):
    h, hid, C = cfg["heads"], cfg["hidden"], cfg["num_centroids"]

    def lin(a, w, b):
        return a @ w + b

    x = lin(jnp.maximum(lin(x, p["fc_in_w1"], p["fc_in_b1"]), 0.0),
            p["fc_in_w2"], p["fc_in_b2"])
    n = batch_idx.shape[0]
    xg = x[:n]
    proj = lin(xg, p["proj_w"], p["proj_b"])
    q_x = jnp.concatenate([proj, pos_enc], axis=1)
    q = lin(q_x, p["q_w"], p["q_b"])
    k = lin(p["vq_k"], p["k_w"], p["k_b"])
    v = lin(p["vq_v"], p["v_w"], p["v_b"])
    d = hid
    qh = q.reshape(n, h, d).transpose(1, 0, 2)
    kh = k.reshape(C, h, d).transpose(1, 0, 2)
    vh = v.reshape(C, h, d).transpose(1, 0, 2)
    counts = jnp.zeros((C,), jnp.float32).at[p["c_idx"]].add(1.0)
    dots = jnp.einsum("hid,hjd->hij", qh, kh) / math.sqrt(d)
    dots = dots + jnp.log(counts).reshape(1, 1, C)
    attn = jax.nn.softmax(dots, axis=-1)
    out = jnp.einsum("hij,hjd->hid", attn, vh)
    out = out.transpose(1, 0, 2).reshape(n, h * d)
    out = jnp.maximum(lin(jnp.maximum(lin(out, p["ff_w1"], p["ff_b1"]), 0.0),
                          p["ff_w2"], p["ff_b2"]), 0.0)
    return lin(out, p["out_w"], p["out_b"])


# ---------------------------------- main ------------------------------------ #

if __name__ == "__main__":
    cfg = dict(
        num_nodes=32,
        in_channels=16,
        hidden=32,
        out=8,
        global_dim=16,
        heads=2,
        num_centroids=16,
        sample_node_len=2,   # seq_len = 3 * sample_node_len = 6
    )

    root = jax.random.PRNGKey(0)
    pkey, k_seq, k_x, k_pos = jax.random.split(root, 4)
    params = init_params(pkey, cfg)

    N = cfg["num_nodes"]
    seq = jax.random.normal(k_seq, (N, 3 * cfg["sample_node_len"],
                                    cfg["in_channels"]), dtype=jnp.float32)
    x = jax.random.normal(k_x, (N, cfg["in_channels"]), dtype=jnp.float32)
    pos_enc = jax.random.normal(k_pos, (N, cfg["global_dim"]), dtype=jnp.float32)
    batch_idx = jnp.arange(N, dtype=jnp.int32)

    y = largegt_forward(params, seq, x, pos_enc, batch_idx, cfg)
    y = jax.block_until_ready(y)

    y_ref = largegt_forward_ref(params, seq, x, pos_enc, batch_idx, cfg)
    assert y.shape == (N, cfg["out"]), y.shape
    # Tolerance accounts for bf16 matmul operands (f32 accumulation) and the EUP
    # approximate reciprocal used for the softmax normalization (eval-mode kernel).
    assert np.allclose(np.asarray(y), np.asarray(y_ref), rtol=5e-2, atol=2e-2), (
        "max abs diff = "
        + str(float(np.max(np.abs(np.asarray(y) - np.asarray(y_ref))))))

    print("KERNEL_OK")
</pallas_src>

<mosaic_0001>
module attributes {stable_mosaic.version = 11 : i64} {
  func.func @_fused_forward_kernel(%arg0: i32, %arg1: memref<16x16xbf16, #tpu.memory_space<vmem>>, %arg2: memref<16x16xbf16, #tpu.memory_space<vmem>>, %arg3: memref<1x16xf32, #tpu.memory_space<vmem>>, %arg4: memref<16x32xbf16, #tpu.memory_space<vmem>>, %arg5: memref<1x32xf32, #tpu.memory_space<vmem>>, %arg6: memref<32x32xbf16, #tpu.memory_space<vmem>>, %arg7: memref<1x32xf32, #tpu.memory_space<vmem>>, %arg8: memref<32x16xbf16, #tpu.memory_space<vmem>>, %arg9: memref<1x16xf32, #tpu.memory_space<vmem>>, %arg10: memref<2x16x32xbf16, #tpu.memory_space<vmem>>, %arg11: memref<2x16x32xbf16, #tpu.memory_space<vmem>>, %arg12: memref<2x1x32xf32, #tpu.memory_space<vmem>>, %arg13: memref<2x32x16xbf16, #tpu.memory_space<vmem>>, %arg14: memref<2x16x32xbf16, #tpu.memory_space<vmem>>, %arg15: memref<2x32x64xbf16, #tpu.memory_space<vmem>>, %arg16: memref<1x64xf32, #tpu.memory_space<vmem>>, %arg17: memref<64x32xbf16, #tpu.memory_space<vmem>>, %arg18: memref<1x32xf32, #tpu.memory_space<vmem>>, %arg19: memref<32x128xbf16, #tpu.memory_space<vmem>>, %arg20: memref<1x128xf32, #tpu.memory_space<vmem>>, %arg21: memref<16x128xf32, #tpu.memory_space<vmem>>) attributes {dimension_semantics = [#tpu.dimension_semantics<parallel>], iteration_bounds = array<i64: 2>, scalar_prefetch = 0 : i64, scratch_operands = 0 : i64, tpu.core_type = #tpu.core_type<tc>, window_params = [{transform_indices = @transform_0, window_bounds = array<i64: 16, 16>}, {transform_indices = @transform_1, window_bounds = array<i64: 16, 16>}, {pipeline_mode = #tpu.pipeline_mode<synchronous>, transform_indices = @transform_2, window_bounds = array<i64: 1, 16>}, {pipeline_mode = #tpu.pipeline_mode<synchronous>, transform_indices = @transform_3, window_bounds = array<i64: 16, 32>}, {pipeline_mode = #tpu.pipeline_mode<synchronous>, transform_indices = @transform_4, window_bounds = array<i64: 1, 32>}, {pipeline_mode = #tpu.pipeline_mode<synchronous>, transform_indices = @transform_5, window_bounds = array<i64: 32, 32>}, {pipeline_mode = #tpu.pipeline_mode<synchronous>, transform_indices = @transform_6, window_bounds = array<i64: 1, 32>}, {pipeline_mode = #tpu.pipeline_mode<synchronous>, transform_indices = @transform_7, window_bounds = array<i64: 32, 16>}, {pipeline_mode = #tpu.pipeline_mode<synchronous>, transform_indices = @transform_8, window_bounds = array<i64: 1, 16>}, {pipeline_mode = #tpu.pipeline_mode<synchronous>, transform_indices = @transform_9, window_bounds = array<i64: 2, 16, 32>}, {pipeline_mode = #tpu.pipeline_mode<synchronous>, transform_indices = @transform_10, window_bounds = array<i64: 2, 16, 32>}, {pipeline_mode = #tpu.pipeline_mode<synchronous>, transform_indices = @transform_11, window_bounds = array<i64: 2, 1, 32>}, {pipeline_mode = #tpu.pipeline_mode<synchronous>, transform_indices = @transform_12, window_bounds = array<i64: 2, 32, 16>}, {pipeline_mode = #tpu.pipeline_mode<synchronous>, transform_indices = @transform_13, window_bounds = array<i64: 2, 16, 32>}, {pipeline_mode = #tpu.pipeline_mode<synchronous>, transform_indices = @transform_14, window_bounds = array<i64: 2, 32, 64>}, {pipeline_mode = #tpu.pipeline_mode<synchronous>, transform_indices = @transform_15, window_bounds = array<i64: 1, 64>}, {pipeline_mode = #tpu.pipeline_mode<synchronous>, transform_indices = @transform_16, window_bounds = array<i64: 64, 32>}, {pipeline_mode = #tpu.pipeline_mode<synchronous>, transform_indices = @transform_17, window_bounds = array<i64: 1, 32>}, {pipeline_mode = #tpu.pipeline_mode<synchronous>, transform_indices = @transform_18, window_bounds = array<i64: 32, 128>}, {pipeline_mode = #tpu.pipeline_mode<synchronous>, transform_indices = @transform_19, window_bounds = array<i64: 1, 128>}, {transform_indices = @transform_20, window_bounds = array<i64: 16, 128>}]} {
    %c0 = arith.constant 0 : index
    %c0_0 = arith.constant 0 : index
    %0 = vector.load %arg1[%c0, %c0_0] : memref<16x16xbf16, #tpu.memory_space<vmem>>, vector<16x16xbf16>
    %c0_1 = arith.constant 0 : index
    %c0_2 = arith.constant 0 : index
    %1 = vector.load %arg2[%c0_1, %c0_2] : memref<16x16xbf16, #tpu.memory_space<vmem>>, vector<16x16xbf16>
    %c0_3 = arith.constant 0 : index
    %c0_4 = arith.constant 0 : index
    %2 = vector.load %arg4[%c0_3, %c0_4] : memref<16x32xbf16, #tpu.memory_space<vmem>>, vector<16x32xbf16>
    %cst = arith.constant dense<0.000000e+00> : vector<16x32xf32>
    %3 = tpu.matmul %0, %2, %cst {dimension_numbers = #tpu.dot_dimension_numbers<[1], [0], [0], [1], [0, 0, 1, 1], [], []>} : vector<16x16xbf16>, vector<16x32xbf16>, vector<16x32xf32> -> vector<16x32xf32>
    %c0_5 = arith.constant 0 : index
    %c0_6 = arith.constant 0 : index
    %4 = vector.load %arg5[%c0_5, %c0_6] : memref<1x32xf32, #tpu.memory_space<vmem>>, vector<1x32xf32>
    %5 = vector.broadcast %4 : vector<1x32xf32> to vector<16x32xf32>
    %6 = arith.addf %3, %5 : vector<16x32xf32>
    %cst_7 = arith.constant 0.000000e+00 : f32
    %7 = vector.broadcast %cst_7 : f32 to vector<16x32xf32>
    %8 = arith.maximumf %6, %7 : vector<16x32xf32>
    %9 = arith.truncf %8 : vector<16x32xf32> to vector<16x32xbf16>
    %c0_8 = arith.constant 0 : index
    %c0_9 = arith.constant 0 : index
    %10 = vector.load %arg6[%c0_8, %c0_9] : memref<32x32xbf16, #tpu.memory_space<vmem>>, vector<32x32xbf16>
    %cst_10 = arith.constant dense<0.000000e+00> : vector<16x32xf32>
    %11 = tpu.matmul %9, %10, %cst_10 {dimension_numbers = #tpu.dot_dimension_numbers<[1], [0], [0], [1], [0, 0, 1, 1], [], []>} : vector<16x32xbf16>, vector<32x32xbf16>, vector<16x32xf32> -> vector<16x32xf32>
    %c0_11 = arith.constant 0 : index
    %c0_12 = arith.constant 0 : index
    %12 = vector.load %arg7[%c0_11, %c0_12] : memref<1x32xf32, #tpu.memory_space<vmem>>, vector<1x32xf32>
    %13 = vector.broadcast %12 : vector<1x32xf32> to vector<16x32xf32>
    %14 = arith.addf %11, %13 : vector<16x32xf32>
    %15 = arith.truncf %14 : vector<16x32xf32> to vector<16x32xbf16>
    %c0_13 = arith.constant 0 : index
    %c0_14 = arith.constant 0 : index
    %16 = vector.load %arg8[%c0_13, %c0_14] : memref<32x16xbf16, #tpu.memory_space<vmem>>, vector<32x16xbf16>
    %cst_15 = arith.constant dense<0.000000e+00> : vector<16x16xf32>
    %17 = tpu.matmul %15, %16, %cst_15 {dimension_numbers = #tpu.dot_dimension_numbers<[1], [0], [0], [1], [0, 0, 1, 1], [], []>} : vector<16x32xbf16>, vector<32x16xbf16>, vector<16x16xf32> -> vector<16x16xf32>
    %c0_16 = arith.constant 0 : index
    %c0_17 = arith.constant 0 : index
    %18 = vector.load %arg9[%c0_16, %c0_17] : memref<1x16xf32, #tpu.memory_space<vmem>>, vector<1x16xf32>
    %19 = vector.broadcast %18 : vector<1x16xf32> to vector<16x16xf32>
    %20 = arith.addf %17, %19 : vector<16x16xf32>
    %21 = arith.truncf %20 : vector<16x16xf32> to vector<16x16xbf16>
    %c0_18 = arith.constant 0 : index
    %c0_19 = arith.constant 0 : index
    %22 = vector.load %arg3[%c0_18, %c0_19] : memref<1x16xf32, #tpu.memory_space<vmem>>, vector<1x16xf32>
    %cst_20 = arith.constant 0.000000e+00 : f32
    %23 = vector.broadcast %cst_20 : f32 to vector<16x64xf32>
    %c0_i32 = arith.constant 0 : i32
    %24 = arith.index_cast %c0_i32 : i32 to index
    %c0_21 = arith.constant 0 : index
    %c0_22 = arith.constant 0 : index
    %25 = vector.load %arg10[%24, %c0_21, %c0_22] : memref<2x16x32xbf16, #tpu.memory_space<vmem>>, vector<1x16x32xbf16>
    %26 = vector.shape_cast %25 : vector<1x16x32xbf16> to vector<16x32xbf16>
    %cst_23 = arith.constant dense<0.000000e+00> : vector<16x32xf32>
    %27 = tpu.matmul %21, %26, %cst_23 {dimension_numbers = #tpu.dot_dimension_numbers<[1], [0], [0], [1], [0, 0, 1, 1], [], []>} : vector<16x16xbf16>, vector<16x32xbf16>, vector<16x32xf32> -> vector<16x32xf32>
    %28 = arith.index_cast %c0_i32 : i32 to index
    %c0_24 = arith.constant 0 : index
    %c0_25 = arith.constant 0 : index
    %29 = vector.load %arg11[%28, %c0_24, %c0_25] : memref<2x16x32xbf16, #tpu.memory_space<vmem>>, vector<1x16x32xbf16>
    %30 = vector.shape_cast %29 : vector<1x16x32xbf16> to vector<16x32xbf16>
    %cst_26 = arith.constant dense<0.000000e+00> : vector<16x32xf32>
    %31 = tpu.matmul %1, %30, %cst_26 {dimension_numbers = #tpu.dot_dimension_numbers<[1], [0], [0], [1], [0, 0, 1, 1], [], []>} : vector<16x16xbf16>, vector<16x32xbf16>, vector<16x32xf32> -> vector<16x32xf32>
    %32 = arith.addf %27, %31 : vector<16x32xf32>
    %33 = arith.index_cast %c0_i32 : i32 to index
    %c0_27 = arith.constant 0 : index
    %c0_28 = arith.constant 0 : index
    %34 = vector.load %arg12[%33, %c0_27, %c0_28] : memref<2x1x32xf32, #tpu.memory_space<vmem>>, vector<1x1x32xf32>
    %35 = vector.shape_cast %34 : vector<1x1x32xf32> to vector<1x32xf32>
    %36 = vector.broadcast %35 : vector<1x32xf32> to vector<16x32xf32>
    %37 = arith.addf %32, %36 : vector<16x32xf32>
    %38 = arith.truncf %37 : vector<16x32xf32> to vector<16x32xbf16>
    %39 = arith.index_cast %c0_i32 : i32 to index
    %c0_29 = arith.constant 0 : index
    %c0_30 = arith.constant 0 : index
    %40 = vector.load %arg13[%39, %c0_29, %c0_30] : memref<2x32x16xbf16, #tpu.memory_space<vmem>>, vector<1x32x16xbf16>
    %41 = vector.shape_cast %40 : vector<1x32x16xbf16> to vector<32x16xbf16>
    %cst_31 = arith.constant dense<0.000000e+00> : vector<16x16xf32>
    %42 = tpu.matmul %38, %41, %cst_31 {dimension_numbers = #tpu.dot_dimension_numbers<[1], [0], [0], [1], [0, 0, 1, 1], [], []>} : vector<16x32xbf16>, vector<32x16xbf16>, vector<16x16xf32> -> vector<16x16xf32>
    %43 = vector.broadcast %22 : vector<1x16xf32> to vector<16x16xf32>
    %44 = arith.addf %42, %43 : vector<16x16xf32>
    %cst_32 = arith.constant dense<0xFF800000> : vector<16xf32>
    %45 = vector.multi_reduction <maximumf>, %44, %cst_32 [1] : vector<16x16xf32> to vector<16xf32>
    %46 = vector.shape_cast %45 : vector<16xf32> to vector<16x1xf32>
    %47 = vector.broadcast %46 : vector<16x1xf32> to vector<16x16xf32>
    %48 = arith.subf %44, %47 : vector<16x16xf32>
    %49 = math.exp %48 : vector<16x16xf32>
    %cst_33 = arith.constant dense<0.000000e+00> : vector<16xf32>
    %50 = vector.multi_reduction <add>, %49, %cst_33 [1] : vector<16x16xf32> to vector<16xf32>
    %51 = vector.shape_cast %50 : vector<16xf32> to vector<16x1xf32>
    %52 = arith.truncf %49 : vector<16x16xf32> to vector<16x16xbf16>
    %53 = arith.index_cast %c0_i32 : i32 to index
    %c0_34 = arith.constant 0 : index
    %c0_35 = arith.constant 0 : index
    %54 = vector.load %arg14[%53, %c0_34, %c0_35] : memref<2x16x32xbf16, #tpu.memory_space<vmem>>, vector<1x16x32xbf16>
    %55 = vector.shape_cast %54 : vector<1x16x32xbf16> to vector<16x32xbf16>
    %cst_36 = arith.constant dense<0.000000e+00> : vector<16x32xf32>
    %56 = tpu.matmul %52, %55, %cst_36 {dimension_numbers = #tpu.dot_dimension_numbers<[1], [0], [0], [1], [0, 0, 1, 1], [], []>} : vector<16x16xbf16>, vector<16x32xbf16>, vector<16x32xf32> -> vector<16x32xf32>
    %57 = tpu.reciprocal %51 {approx = true} : vector<16x1xf32> -> vector<16x1xf32>
    %58 = vector.broadcast %57 : vector<16x1xf32> to vector<16x32xf32>
    %59 = arith.mulf %56, %58 : vector<16x32xf32>
    %60 = arith.truncf %59 : vector<16x32xf32> to vector<16x32xbf16>
    %61 = arith.index_cast %c0_i32 : i32 to index
    %c0_37 = arith.constant 0 : index
    %c0_38 = arith.constant 0 : index
    %62 = vector.load %arg15[%61, %c0_37, %c0_38] : memref<2x32x64xbf16, #tpu.memory_space<vmem>>, vector<1x32x64xbf16>
    %63 = vector.shape_cast %62 : vector<1x32x64xbf16> to vector<32x64xbf16>
    %cst_39 = arith.constant dense<0.000000e+00> : vector<16x64xf32>
    %64 = tpu.matmul %60, %63, %cst_39 {dimension_numbers = #tpu.dot_dimension_numbers<[1], [0], [0], [1], [0, 0, 1, 1], [], []>} : vector<16x32xbf16>, vector<32x64xbf16>, vector<16x64xf32> -> vector<16x64xf32>
    %65 = arith.addf %23, %64 : vector<16x64xf32>
    %c1_i32 = arith.constant 1 : i32
    %66 = arith.index_cast %c1_i32 : i32 to index
    %c0_40 = arith.constant 0 : index
    %c0_41 = arith.constant 0 : index
    %67 = vector.load %arg10[%66, %c0_40, %c0_41] : memref<2x16x32xbf16, #tpu.memory_space<vmem>>, vector<1x16x32xbf16>
    %68 = vector.shape_cast %67 : vector<1x16x32xbf16> to vector<16x32xbf16>
    %cst_42 = arith.constant dense<0.000000e+00> : vector<16x32xf32>
    %69 = tpu.matmul %21, %68, %cst_42 {dimension_numbers = #tpu.dot_dimension_numbers<[1], [0], [0], [1], [0, 0, 1, 1], [], []>} : vector<16x16xbf16>, vector<16x32xbf16>, vector<16x32xf32> -> vector<16x32xf32>
    %70 = arith.index_cast %c1_i32 : i32 to index
    %c0_43 = arith.constant 0 : index
    %c0_44 = arith.constant 0 : index
    %71 = vector.load %arg11[%70, %c0_43, %c0_44] : memref<2x16x32xbf16, #tpu.memory_space<vmem>>, vector<1x16x32xbf16>
    %72 = vector.shape_cast %71 : vector<1x16x32xbf16> to vector<16x32xbf16>
    %cst_45 = arith.constant dense<0.000000e+00> : vector<16x32xf32>
    %73 = tpu.matmul %1, %72, %cst_45 {dimension_numbers = #tpu.dot_dimension_numbers<[1], [0], [0], [1], [0, 0, 1, 1], [], []>} : vector<16x16xbf16>, vector<16x32xbf16>, vector<16x32xf32> -> vector<16x32xf32>
    %74 = arith.addf %69, %73 : vector<16x32xf32>
    %75 = arith.index_cast %c1_i32 : i32 to index
    %c0_46 = arith.constant 0 : index
    %c0_47 = arith.constant 0 : index
    %76 = vector.load %arg12[%75, %c0_46, %c0_47] : memref<2x1x32xf32, #tpu.memory_space<vmem>>, vector<1x1x32xf32>
    %77 = vector.shape_cast %76 : vector<1x1x32xf32> to vector<1x32xf32>
    %78 = vector.broadcast %77 : vector<1x32xf32> to vector<16x32xf32>
    %79 = arith.addf %74, %78 : vector<16x32xf32>
    %80 = arith.truncf %79 : vector<16x32xf32> to vector<16x32xbf16>
    %81 = arith.index_cast %c1_i32 : i32 to index
    %c0_48 = arith.constant 0 : index
    %c0_49 = arith.constant 0 : index
    %82 = vector.load %arg13[%81, %c0_48, %c0_49] : memref<2x32x16xbf16, #tpu.memory_space<vmem>>, vector<1x32x16xbf16>
    %83 = vector.shape_cast %82 : vector<1x32x16xbf16> to vector<32x16xbf16>
    %cst_50 = arith.constant dense<0.000000e+00> : vector<16x16xf32>
    %84 = tpu.matmul %80, %83, %cst_50 {dimension_numbers = #tpu.dot_dimension_numbers<[1], [0], [0], [1], [0, 0, 1, 1], [], []>} : vector<16x32xbf16>, vector<32x16xbf16>, vector<16x16xf32> -> vector<16x16xf32>
    %85 = vector.broadcast %22 : vector<1x16xf32> to vector<16x16xf32>
    %86 = arith.addf %84, %85 : vector<16x16xf32>
    %cst_51 = arith.constant dense<0xFF800000> : vector<16xf32>
    %87 = vector.multi_reduction <maximumf>, %86, %cst_51 [1] : vector<16x16xf32> to vector<16xf32>
    %88 = vector.shape_cast %87 : vector<16xf32> to vector<16x1xf32>
    %89 = vector.broadcast %88 : vector<16x1xf32> to vector<16x16xf32>
    %90 = arith.subf %86, %89 : vector<16x16xf32>
    %91 = math.exp %90 : vector<16x16xf32>
    %cst_52 = arith.constant dense<0.000000e+00> : vector<16xf32>
    %92 = vector.multi_reduction <add>, %91, %cst_52 [1] : vector<16x16xf32> to vector<16xf32>
    %93 = vector.shape_cast %92 : vector<16xf32> to vector<16x1xf32>
    %94 = arith.truncf %91 : vector<16x16xf32> to vector<16x16xbf16>
    %95 = arith.index_cast %c1_i32 : i32 to index
    %c0_53 = arith.constant 0 : index
    %c0_54 = arith.constant 0 : index
    %96 = vector.load %arg14[%95, %c0_53, %c0_54] : memref<2x16x32xbf16, #tpu.memory_space<vmem>>, vector<1x16x32xbf16>
    %97 = vector.shape_cast %96 : vector<1x16x32xbf16> to vector<16x32xbf16>
    %cst_55 = arith.constant dense<0.000000e+00> : vector<16x32xf32>
    %98 = tpu.matmul %94, %97, %cst_55 {dimension_numbers = #tpu.dot_dimension_numbers<[1], [0], [0], [1], [0, 0, 1, 1], [], []>} : vector<16x16xbf16>, vector<16x32xbf16>, vector<16x32xf32> -> vector<16x32xf32>
    %99 = tpu.reciprocal %93 {approx = true} : vector<16x1xf32> -> vector<16x1xf32>
    %100 = vector.broadcast %99 : vector<16x1xf32> to vector<16x32xf32>
    %101 = arith.mulf %98, %100 : vector<16x32xf32>
    %102 = arith.truncf %101 : vector<16x32xf32> to vector<16x32xbf16>
    %103 = arith.index_cast %c1_i32 : i32 to index
    %c0_56 = arith.constant 0 : index
    %c0_57 = arith.constant 0 : index
    %104 = vector.load %arg15[%103, %c0_56, %c0_57] : memref<2x32x64xbf16, #tpu.memory_space<vmem>>, vector<1x32x64xbf16>
    %105 = vector.shape_cast %104 : vector<1x32x64xbf16> to vector<32x64xbf16>
    %cst_58 = arith.constant dense<0.000000e+00> : vector<16x64xf32>
    %106 = tpu.matmul %102, %105, %cst_58 {dimension_numbers = #tpu.dot_dimension_numbers<[1], [0], [0], [1], [0, 0, 1, 1], [], []>} : vector<16x32xbf16>, vector<32x64xbf16>, vector<16x64xf32> -> vector<16x64xf32>
    %107 = arith.addf %65, %106 : vector<16x64xf32>
    %c2_i32 = arith.constant 2 : i32
    %c0_59 = arith.constant 0 : index
    %c0_60 = arith.constant 0 : index
    %108 = vector.load %arg16[%c0_59, %c0_60] : memref<1x64xf32, #tpu.memory_space<vmem>>, vector<1x64xf32>
    %109 = vector.broadcast %108 : vector<1x64xf32> to vector<16x64xf32>
    %110 = arith.addf %107, %109 : vector<16x64xf32>
    %cst_61 = arith.constant 0.000000e+00 : f32
    %111 = vector.broadcast %cst_61 : f32 to vector<16x64xf32>
    %112 = arith.maximumf %110, %111 : vector<16x64xf32>
    %113 = arith.truncf %112 : vector<16x64xf32> to vector<16x64xbf16>
    %c0_62 = arith.constant 0 : index
    %c0_63 = arith.constant 0 : index
    %114 = vector.load %arg17[%c0_62, %c0_63] : memref<64x32xbf16, #tpu.memory_space<vmem>>, vector<64x32xbf16>
    %cst_64 = arith.constant dense<0.000000e+00> : vector<16x32xf32>
    %115 = tpu.matmul %113, %114, %cst_64 {dimension_numbers = #tpu.dot_dimension_numbers<[1], [0], [0], [1], [0, 0, 1, 1], [], []>} : vector<16x64xbf16>, vector<64x32xbf16>, vector<16x32xf32> -> vector<16x32xf32>
    %c0_65 = arith.constant 0 : index
    %c0_66 = arith.constant 0 : index
    %116 = vector.load %arg18[%c0_65, %c0_66] : memref<1x32xf32, #tpu.memory_space<vmem>>, vector<1x32xf32>
    %117 = vector.broadcast %116 : vector<1x32xf32> to vector<16x32xf32>
    %118 = arith.addf %115, %117 : vector<16x32xf32>
    %cst_67 = arith.constant 0.000000e+00 : f32
    %119 = vector.broadcast %cst_67 : f32 to vector<16x32xf32>
    %120 = arith.maximumf %118, %119 : vector<16x32xf32>
    %121 = arith.truncf %120 : vector<16x32xf32> to vector<16x32xbf16>
    %c0_68 = arith.constant 0 : index
    %c0_69 = arith.constant 0 : index
    %122 = vector.load %arg19[%c0_68, %c0_69] : memref<32x128xbf16, #tpu.memory_space<vmem>>, vector<32x128xbf16>
    %cst_70 = arith.constant dense<0.000000e+00> : vector<16x128xf32>
    %123 = tpu.matmul %121, %122, %cst_70 {dimension_numbers = #tpu.dot_dimension_numbers<[1], [0], [0], [1], [0, 0, 1, 1], [], []>} : vector<16x32xbf16>, vector<32x128xbf16>, vector<16x128xf32> -> vector<16x128xf32>
    %c0_71 = arith.constant 0 : index
    %c0_72 = arith.constant 0 : index
    %124 = vector.load %arg20[%c0_71, %c0_72] : memref<1x128xf32, #tpu.memory_space<vmem>>, vector<1x128xf32>
    %125 = vector.broadcast %124 : vector<1x128xf32> to vector<16x128xf32>
    %126 = arith.addf %123, %125 : vector<16x128xf32>
    %c0_73 = arith.constant 0 : index
    %c0_74 = arith.constant 0 : index
    %127 = vector.load %arg21[%c0_73, %c0_74] : memref<16x128xf32, #tpu.memory_space<vmem>>, vector<16x128xf32>
    tpu.vector_store %arg21[%c0_73, %c0_74], %126 {strides = array<i32>} : memref<16x128xf32, #tpu.memory_space<vmem>>, vector<16x128xf32>,
    return
  }
  func.func @transform_0(%arg0: i32) -> (i32, i32) {
    %c0_i32 = arith.constant 0 : i32
    %c0_i32_0 = arith.constant 0 : i32
    return %arg0, %c0_i32 : i32, i32
  }
  func.func @transform_1(%arg0: i32) -> (i32, i32) {
    %c0_i32 = arith.constant 0 : i32
    %c0_i32_0 = arith.constant 0 : i32
    return %arg0, %c0_i32 : i32, i32
  }
  func.func @transform_2(%arg0: i32) -> (i32, i32) {
    %c0_i32 = arith.constant 0 : i32
    %c0_i32_0 = arith.constant 0 : i32
    %c0_i32_1 = arith.constant 0 : i32
    return %c0_i32, %c0_i32_0 : i32, i32
  }
  func.func @transform_3(%arg0: i32) -> (i32, i32) {
    %c0_i32 = arith.constant 0 : i32
    %c0_i32_0 = arith.constant 0 : i32
    %c0_i32_1 = arith.constant 0 : i32
    return %c0_i32, %c0_i32_0 : i32, i32
  }
  func.func @transform_4(%arg0: i32) -> (i32, i32) {
    %c0_i32 = arith.constant 0 : i32
    %c0_i32_0 = arith.constant 0 : i32
    %c0_i32_1 = arith.constant 0 : i32
    return %c0_i32, %c0_i32_0 : i32, i32
  }
  func.func @transform_5(%arg0: i32) -> (i32, i32) {
    %c0_i32 = arith.constant 0 : i32
    %c0_i32_0 = arith.constant 0 : i32
    %c0_i32_1 = arith.constant 0 : i32
    return %c0_i32, %c0_i32_0 : i32, i32
  }
  func.func @transform_6(%arg0: i32) -> (i32, i32) {
    %c0_i32 = arith.constant 0 : i32
    %c0_i32_0 = arith.constant 0 : i32
    %c0_i32_1 = arith.constant 0 : i32
    return %c0_i32, %c0_i32_0 : i32, i32
  }
  func.func @transform_7(%arg0: i32) -> (i32, i32) {
    %c0_i32 = arith.constant 0 : i32
    %c0_i32_0 = arith.constant 0 : i32
    %c0_i32_1 = arith.constant 0 : i32
    return %c0_i32, %c0_i32_0 : i32, i32
  }
  func.func @transform_8(%arg0: i32) -> (i32, i32) {
    %c0_i32 = arith.constant 0 : i32
    %c0_i32_0 = arith.constant 0 : i32
    %c0_i32_1 = arith.constant 0 : i32
    return %c0_i32, %c0_i32_0 : i32, i32
  }
  func.func @transform_9(%arg0: i32) -> (i32, i32, i32) {
    %c0_i32 = arith.constant 0 : i32
    %c0_i32_0 = arith.constant 0 : i32
    %c0_i32_1 = arith.constant 0 : i32
    %c0_i32_2 = arith.constant 0 : i32
    return %c0_i32, %c0_i32_0, %c0_i32_1 : i32, i32, i32
  }
  func.func @transform_10(%arg0: i32) -> (i32, i32, i32) {
    %c0_i32 = arith.constant 0 : i32
    %c0_i32_0 = arith.constant 0 : i32
    %c0_i32_1 = arith.constant 0 : i32
    %c0_i32_2 = arith.constant 0 : i32
    return %c0_i32, %c0_i32_0, %c0_i32_1 : i32, i32, i32
  }
  func.func @transform_11(%arg0: i32) -> (i32, i32, i32) {
    %c0_i32 = arith.constant 0 : i32
    %c0_i32_0 = arith.constant 0 : i32
    %c0_i32_1 = arith.constant 0 : i32
    %c0_i32_2 = arith.constant 0 : i32
    return %c0_i32, %c0_i32_0, %c0_i32_1 : i32, i32, i32
  }
  func.func @transform_12(%arg0: i32) -> (i32, i32, i32) {
    %c0_i32 = arith.constant 0 : i32
    %c0_i32_0 = arith.constant 0 : i32
    %c0_i32_1 = arith.constant 0 : i32
    %c0_i32_2 = arith.constant 0 : i32
    return %c0_i32, %c0_i32_0, %c0_i32_1 : i32, i32, i32
  }
  func.func @transform_13(%arg0: i32) -> (i32, i32, i32) {
    %c0_i32 = arith.constant 0 : i32
    %c0_i32_0 = arith.constant 0 : i32
    %c0_i32_1 = arith.constant 0 : i32
    %c0_i32_2 = arith.constant 0 : i32
    return %c0_i32, %c0_i32_0, %c0_i32_1 : i32, i32, i32
  }
  func.func @transform_14(%arg0: i32) -> (i32, i32, i32) {
    %c0_i32 = arith.constant 0 : i32
    %c0_i32_0 = arith.constant 0 : i32
    %c0_i32_1 = arith.constant 0 : i32
    %c0_i32_2 = arith.constant 0 : i32
    return %c0_i32, %c0_i32_0, %c0_i32_1 : i32, i32, i32
  }
  func.func @transform_15(%arg0: i32) -> (i32, i32) {
    %c0_i32 = arith.constant 0 : i32
    %c0_i32_0 = arith.constant 0 : i32
    %c0_i32_1 = arith.constant 0 : i32
    return %c0_i32, %c0_i32_0 : i32, i32
  }
  func.func @transform_16(%arg0: i32) -> (i32, i32) {
    %c0_i32 = arith.constant 0 : i32
    %c0_i32_0 = arith.constant 0 : i32
    %c0_i32_1 = arith.constant 0 : i32
    return %c0_i32, %c0_i32_0 : i32, i32
  }
  func.func @transform_17(%arg0: i32) -> (i32, i32) {
    %c0_i32 = arith.constant 0 : i32
    %c0_i32_0 = arith.constant 0 : i32
    %c0_i32_1 = arith.constant 0 : i32
    return %c0_i32, %c0_i32_0 : i32, i32
  }
  func.func @transform_18(%arg0: i32) -> (i32, i32) {
    %c0_i32 = arith.constant 0 : i32
    %c0_i32_0 = arith.constant 0 : i32
    %c0_i32_1 = arith.constant 0 : i32
    return %c0_i32, %c0_i32_0 : i32, i32
  }
  func.func @transform_19(%arg0: i32) -> (i32, i32) {
    %c0_i32 = arith.constant 0 : i32
    %c0_i32_0 = arith.constant 0 : i32
    %c0_i32_1 = arith.constant 0 : i32
    return %c0_i32, %c0_i32_0 : i32, i32
  }
  func.func @transform_20(%arg0: i32) -> (i32, i32) {
    %c0_i32 = arith.constant 0 : i32
    %c0_i32_0 = arith.constant 0 : i32
    return %arg0, %c0_i32 : i32, i32
  }
}

module attributes {stable_mosaic.version = 11 : i64} {
  func.func @_fused_forward_kernel(%arg0: i32, %arg1: memref<16x16xbf16, #tpu.memory_space<vmem>>, %arg2: memref<16x16xbf16, #tpu.memory_space<vmem>>, %arg3: memref<1x16xf32, #tpu.memory_space<vmem>>, %arg4: memref<16x32xbf16, #tpu.memory_space<vmem>>, %arg5: memref<1x32xf32, #tpu.memory_space<vmem>>, %arg6: memref<32x32xbf16, #tpu.memory_space<vmem>>, %arg7: memref<1x32xf32, #tpu.memory_space<vmem>>, %arg8: memref<32x16xbf16, #tpu.memory_space<vmem>>, %arg9: memref<1x16xf32, #tpu.memory_space<vmem>>, %arg10: memref<2x16x32xbf16, #tpu.memory_space<vmem>>, %arg11: memref<2x16x32xbf16, #tpu.memory_space<vmem>>, %arg12: memref<2x1x32xf32, #tpu.memory_space<vmem>>, %arg13: memref<2x32x16xbf16, #tpu.memory_space<vmem>>, %arg14: memref<2x16x32xbf16, #tpu.memory_space<vmem>>, %arg15: memref<2x32x64xbf16, #tpu.memory_space<vmem>>, %arg16: memref<1x64xf32, #tpu.memory_space<vmem>>, %arg17: memref<64x32xbf16, #tpu.memory_space<vmem>>, %arg18: memref<1x32xf32, #tpu.memory_space<vmem>>, %arg19: memref<32x128xbf16, #tpu.memory_space<vmem>>, %arg20: memref<1x128xf32, #tpu.memory_space<vmem>>, %arg21: memref<16x128xf32, #tpu.memory_space<vmem>>) attributes {dimension_semantics = [#tpu.dimension_semantics<parallel>], iteration_bounds = array<i64: 2>, scalar_prefetch = 0 : i64, scratch_operands = 0 : i64, tpu.core_type = #tpu.core_type<tc>, window_params = [{transform_indices = @transform_0, window_bounds = array<i64: 16, 16>}, {transform_indices = @transform_1, window_bounds = array<i64: 16, 16>}, {pipeline_mode = #tpu.pipeline_mode<synchronous>, transform_indices = @transform_2, window_bounds = array<i64: 1, 16>}, {pipeline_mode = #tpu.pipeline_mode<synchronous>, transform_indices = @transform_3, window_bounds = array<i64: 16, 32>}, {pipeline_mode = #tpu.pipeline_mode<synchronous>, transform_indices = @transform_4, window_bounds = array<i64: 1, 32>}, {pipeline_mode = #tpu.pipeline_mode<synchronous>, transform_indices = @transform_5, window_bounds = array<i64: 32, 32>}, {pipeline_mode = #tpu.pipeline_mode<synchronous>, transform_indices = @transform_6, window_bounds = array<i64: 1, 32>}, {pipeline_mode = #tpu.pipeline_mode<synchronous>, transform_indices = @transform_7, window_bounds = array<i64: 32, 16>}, {pipeline_mode = #tpu.pipeline_mode<synchronous>, transform_indices = @transform_8, window_bounds = array<i64: 1, 16>}, {pipeline_mode = #tpu.pipeline_mode<synchronous>, transform_indices = @transform_9, window_bounds = array<i64: 2, 16, 32>}, {pipeline_mode = #tpu.pipeline_mode<synchronous>, transform_indices = @transform_10, window_bounds = array<i64: 2, 16, 32>}, {pipeline_mode = #tpu.pipeline_mode<synchronous>, transform_indices = @transform_11, window_bounds = array<i64: 2, 1, 32>}, {pipeline_mode = #tpu.pipeline_mode<synchronous>, transform_indices = @transform_12, window_bounds = array<i64: 2, 32, 16>}, {pipeline_mode = #tpu.pipeline_mode<synchronous>, transform_indices = @transform_13, window_bounds = array<i64: 2, 16, 32>}, {pipeline_mode = #tpu.pipeline_mode<synchronous>, transform_indices = @transform_14, window_bounds = array<i64: 2, 32, 64>}, {pipeline_mode = #tpu.pipeline_mode<synchronous>, transform_indices = @transform_15, window_bounds = array<i64: 1, 64>}, {pipeline_mode = #tpu.pipeline_mode<synchronous>, transform_indices = @transform_16, window_bounds = array<i64: 64, 32>}, {pipeline_mode = #tpu.pipeline_mode<synchronous>, transform_indices = @transform_17, window_bounds = array<i64: 1, 32>}, {pipeline_mode = #tpu.pipeline_mode<synchronous>, transform_indices = @transform_18, window_bounds = array<i64: 32, 128>}, {pipeline_mode = #tpu.pipeline_mode<synchronous>, transform_indices = @transform_19, window_bounds = array<i64: 1, 128>}, {transform_indices = @transform_20, window_bounds = array<i64: 16, 128>}]} {
    %c0 = arith.constant 0 : index
    %c0_0 = arith.constant 0 : index
    %0 = vector.load %arg1[%c0, %c0_0] : memref<16x16xbf16, #tpu.memory_space<vmem>>, vector<16x16xbf16>
    %c0_1 = arith.constant 0 : index
    %c0_2 = arith.constant 0 : index
    %1 = vector.load %arg2[%c0_1, %c0_2] : memref<16x16xbf16, #tpu.memory_space<vmem>>, vector<16x16xbf16>
    %c0_3 = arith.constant 0 : index
    %c0_4 = arith.constant 0 : index
    %2 = vector.load %arg4[%c0_3, %c0_4] : memref<16x32xbf16, #tpu.memory_space<vmem>>, vector<16x32xbf16>
    %cst = arith.constant dense<0.000000e+00> : vector<16x32xf32>
    %3 = tpu.matmul %0, %2, %cst {dimension_numbers = #tpu.dot_dimension_numbers<[1], [0], [0], [1], [0, 0, 1, 1], [], []>} : vector<16x16xbf16>, vector<16x32xbf16>, vector<16x32xf32> -> vector<16x32xf32>
    %c0_5 = arith.constant 0 : index
    %c0_6 = arith.constant 0 : index
    %4 = vector.load %arg5[%c0_5, %c0_6] : memref<1x32xf32, #tpu.memory_space<vmem>>, vector<1x32xf32>
    %5 = vector.broadcast %4 : vector<1x32xf32> to vector<16x32xf32>
    %6 = arith.addf %3, %5 : vector<16x32xf32>
    %cst_7 = arith.constant 0.000000e+00 : f32
    %7 = vector.broadcast %cst_7 : f32 to vector<16x32xf32>
    %8 = arith.maximumf %6, %7 : vector<16x32xf32>
    %9 = arith.truncf %8 : vector<16x32xf32> to vector<16x32xbf16>
    %c0_8 = arith.constant 0 : index
    %c0_9 = arith.constant 0 : index
    %10 = vector.load %arg6[%c0_8, %c0_9] : memref<32x32xbf16, #tpu.memory_space<vmem>>, vector<32x32xbf16>
    %cst_10 = arith.constant dense<0.000000e+00> : vector<16x32xf32>
    %11 = tpu.matmul %9, %10, %cst_10 {dimension_numbers = #tpu.dot_dimension_numbers<[1], [0], [0], [1], [0, 0, 1, 1], [], []>} : vector<16x32xbf16>, vector<32x32xbf16>, vector<16x32xf32> -> vector<16x32xf32>
    %c0_11 = arith.constant 0 : index
    %c0_12 = arith.constant 0 : index
    %12 = vector.load %arg7[%c0_11, %c0_12] : memref<1x32xf32, #tpu.memory_space<vmem>>, vector<1x32xf32>
    %13 = vector.broadcast %12 : vector<1x32xf32> to vector<16x32xf32>
    %14 = arith.addf %11, %13 : vector<16x32xf32>
    %15 = arith.truncf %14 : vector<16x32xf32> to vector<16x32xbf16>
    %c0_13 = arith.constant 0 : index
    %c0_14 = arith.constant 0 : index
    %16 = vector.load %arg8[%c0_13, %c0_14] : memref<32x16xbf16, #tpu.memory_space<vmem>>, vector<32x16xbf16>
    %cst_15 = arith.constant dense<0.000000e+00> : vector<16x16xf32>
    %17 = tpu.matmul %15, %16, %cst_15 {dimension_numbers = #tpu.dot_dimension_numbers<[1], [0], [0], [1], [0, 0, 1, 1], [], []>} : vector<16x32xbf16>, vector<32x16xbf16>, vector<16x16xf32> -> vector<16x16xf32>
    %c0_16 = arith.constant 0 : index
    %c0_17 = arith.constant 0 : index
    %18 = vector.load %arg9[%c0_16, %c0_17] : memref<1x16xf32, #tpu.memory_space<vmem>>, vector<1x16xf32>
    %19 = vector.broadcast %18 : vector<1x16xf32> to vector<16x16xf32>
    %20 = arith.addf %17, %19 : vector<16x16xf32>
    %21 = arith.truncf %20 : vector<16x16xf32> to vector<16x16xbf16>
    %c0_18 = arith.constant 0 : index
    %c0_19 = arith.constant 0 : index
    %22 = vector.load %arg3[%c0_18, %c0_19] : memref<1x16xf32, #tpu.memory_space<vmem>>, vector<1x16xf32>
    %cst_20 = arith.constant 0.000000e+00 : f32
    %23 = vector.broadcast %cst_20 : f32 to vector<16x64xf32>
    %c0_i32 = arith.constant 0 : i32
    %24 = arith.index_cast %c0_i32 : i32 to index
    %c0_21 = arith.constant 0 : index
    %c0_22 = arith.constant 0 : index
    %25 = vector.load %arg10[%24, %c0_21, %c0_22] : memref<2x16x32xbf16, #tpu.memory_space<vmem>>, vector<1x16x32xbf16>
    %26 = vector.shape_cast %25 : vector<1x16x32xbf16> to vector<16x32xbf16>
    %cst_23 = arith.constant dense<0.000000e+00> : vector<16x32xf32>
    %27 = tpu.matmul %21, %26, %cst_23 {dimension_numbers = #tpu.dot_dimension_numbers<[1], [0], [0], [1], [0, 0, 1, 1], [], []>} : vector<16x16xbf16>, vector<16x32xbf16>, vector<16x32xf32> -> vector<16x32xf32>
    %28 = arith.index_cast %c0_i32 : i32 to index
    %c0_24 = arith.constant 0 : index
    %c0_25 = arith.constant 0 : index
    %29 = vector.load %arg11[%28, %c0_24, %c0_25] : memref<2x16x32xbf16, #tpu.memory_space<vmem>>, vector<1x16x32xbf16>
    %30 = vector.shape_cast %29 : vector<1x16x32xbf16> to vector<16x32xbf16>
    %cst_26 = arith.constant dense<0.000000e+00> : vector<16x32xf32>
    %31 = tpu.matmul %1, %30, %cst_26 {dimension_numbers = #tpu.dot_dimension_numbers<[1], [0], [0], [1], [0, 0, 1, 1], [], []>} : vector<16x16xbf16>, vector<16x32xbf16>, vector<16x32xf32> -> vector<16x32xf32>
    %32 = arith.addf %27, %31 : vector<16x32xf32>
    %33 = arith.index_cast %c0_i32 : i32 to index
    %c0_27 = arith.constant 0 : index
    %c0_28 = arith.constant 0 : index
    %34 = vector.load %arg12[%33, %c0_27, %c0_28] : memref<2x1x32xf32, #tpu.memory_space<vmem>>, vector<1x1x32xf32>
    %35 = vector.shape_cast %34 : vector<1x1x32xf32> to vector<1x32xf32>
    %36 = vector.broadcast %35 : vector<1x32xf32> to vector<16x32xf32>
    %37 = arith.addf %32, %36 : vector<16x32xf32>
    %38 = arith.truncf %37 : vector<16x32xf32> to vector<16x32xbf16>
    %39 = arith.index_cast %c0_i32 : i32 to index
    %c0_29 = arith.constant 0 : index
    %c0_30 = arith.constant 0 : index
    %40 = vector.load %arg13[%39, %c0_29, %c0_30] : memref<2x32x16xbf16, #tpu.memory_space<vmem>>, vector<1x32x16xbf16>
    %41 = vector.shape_cast %40 : vector<1x32x16xbf16> to vector<32x16xbf16>
    %cst_31 = arith.constant dense<0.000000e+00> : vector<16x16xf32>
    %42 = tpu.matmul %38, %41, %cst_31 {dimension_numbers = #tpu.dot_dimension_numbers<[1], [0], [0], [1], [0, 0, 1, 1], [], []>} : vector<16x32xbf16>, vector<32x16xbf16>, vector<16x16xf32> -> vector<16x16xf32>
    %43 = vector.broadcast %22 : vector<1x16xf32> to vector<16x16xf32>
    %44 = arith.addf %42, %43 : vector<16x16xf32>
    %cst_32 = arith.constant dense<0xFF800000> : vector<16xf32>
    %45 = vector.multi_reduction <maximumf>, %44, %cst_32 [1] : vector<16x16xf32> to vector<16xf32>
    %46 = vector.shape_cast %45 : vector<16xf32> to vector<16x1xf32>
    %47 = vector.broadcast %46 : vector<16x1xf32> to vector<16x16xf32>
    %48 = arith.subf %44, %47 : vector<16x16xf32>
    %49 = math.exp %48 : vector<16x16xf32>
    %cst_33 = arith.constant dense<0.000000e+00> : vector<16xf32>
    %50 = vector.multi_reduction <add>, %49, %cst_33 [1] : vector<16x16xf32> to vector<16xf32>
    %51 = vector.shape_cast %50 : vector<16xf32> to vector<16x1xf32>
    %52 = arith.truncf %49 : vector<16x16xf32> to vector<16x16xbf16>
    %53 = arith.index_cast %c0_i32 : i32 to index
    %c0_34 = arith.constant 0 : index
    %c0_35 = arith.constant 0 : index
    %54 = vector.load %arg14[%53, %c0_34, %c0_35] : memref<2x16x32xbf16, #tpu.memory_space<vmem>>, vector<1x16x32xbf16>
    %55 = vector.shape_cast %54 : vector<1x16x32xbf16> to vector<16x32xbf16>
    %cst_36 = arith.constant dense<0.000000e+00> : vector<16x32xf32>
    %56 = tpu.matmul %52, %55, %cst_36 {dimension_numbers = #tpu.dot_dimension_numbers<[1], [0], [0], [1], [0, 0, 1, 1], [], []>} : vector<16x16xbf16>, vector<16x32xbf16>, vector<16x32xf32> -> vector<16x32xf32>
    %57 = tpu.reciprocal %51 {approx = true} : vector<16x1xf32> -> vector<16x1xf32>
    %58 = vector.broadcast %57 : vector<16x1xf32> to vector<16x32xf32>
    %59 = arith.mulf %56, %58 : vector<16x32xf32>
    %60 = arith.truncf %59 : vector<16x32xf32> to vector<16x32xbf16>
    %61 = arith.index_cast %c0_i32 : i32 to index
    %c0_37 = arith.constant 0 : index
    %c0_38 = arith.constant 0 : index
    %62 = vector.load %arg15[%61, %c0_37, %c0_38] : memref<2x32x64xbf16, #tpu.memory_space<vmem>>, vector<1x32x64xbf16>
    %63 = vector.shape_cast %62 : vector<1x32x64xbf16> to vector<32x64xbf16>
    %cst_39 = arith.constant dense<0.000000e+00> : vector<16x64xf32>
    %64 = tpu.matmul %60, %63, %cst_39 {dimension_numbers = #tpu.dot_dimension_numbers<[1], [0], [0], [1], [0, 0, 1, 1], [], []>} : vector<16x32xbf16>, vector<32x64xbf16>, vector<16x64xf32> -> vector<16x64xf32>
    %65 = arith.addf %23, %64 : vector<16x64xf32>
    %c1_i32 = arith.constant 1 : i32
    %66 = arith.index_cast %c1_i32 : i32 to index
    %c0_40 = arith.constant 0 : index
    %c0_41 = arith.constant 0 : index
    %67 = vector.load %arg10[%66, %c0_40, %c0_41] : memref<2x16x32xbf16, #tpu.memory_space<vmem>>, vector<1x16x32xbf16>
    %68 = vector.shape_cast %67 : vector<1x16x32xbf16> to vector<16x32xbf16>
    %cst_42 = arith.constant dense<0.000000e+00> : vector<16x32xf32>
    %69 = tpu.matmul %21, %68, %cst_42 {dimension_numbers = #tpu.dot_dimension_numbers<[1], [0], [0], [1], [0, 0, 1, 1], [], []>} : vector<16x16xbf16>, vector<16x32xbf16>, vector<16x32xf32> -> vector<16x32xf32>
    %70 = arith.index_cast %c1_i32 : i32 to index
    %c0_43 = arith.constant 0 : index
    %c0_44 = arith.constant 0 : index
    %71 = vector.load %arg11[%70, %c0_43, %c0_44] : memref<2x16x32xbf16, #tpu.memory_space<vmem>>, vector<1x16x32xbf16>
    %72 = vector.shape_cast %71 : vector<1x16x32xbf16> to vector<16x32xbf16>
    %cst_45 = arith.constant dense<0.000000e+00> : vector<16x32xf32>
    %73 = tpu.matmul %1, %72, %cst_45 {dimension_numbers = #tpu.dot_dimension_numbers<[1], [0], [0], [1], [0, 0, 1, 1], [], []>} : vector<16x16xbf16>, vector<16x32xbf16>, vector<16x32xf32> -> vector<16x32xf32>
    %74 = arith.addf %69, %73 : vector<16x32xf32>
    %75 = arith.index_cast %c1_i32 : i32 to index
    %c0_46 = arith.constant 0 : index
    %c0_47 = arith.constant 0 : index
    %76 = vector.load %arg12[%75, %c0_46, %c0_47] : memref<2x1x32xf32, #tpu.memory_space<vmem>>, vector<1x1x32xf32>
    %77 = vector.shape_cast %76 : vector<1x1x32xf32> to vector<1x32xf32>
    %78 = vector.broadcast %77 : vector<1x32xf32> to vector<16x32xf32>
    %79 = arith.addf %74, %78 : vector<16x32xf32>
    %80 = arith.truncf %79 : vector<16x32xf32> to vector<16x32xbf16>
    %81 = arith.index_cast %c1_i32 : i32 to index
    %c0_48 = arith.constant 0 : index
    %c0_49 = arith.constant 0 : index
    %82 = vector.load %arg13[%81, %c0_48, %c0_49] : memref<2x32x16xbf16, #tpu.memory_space<vmem>>, vector<1x32x16xbf16>
    %83 = vector.shape_cast %82 : vector<1x32x16xbf16> to vector<32x16xbf16>
    %cst_50 = arith.constant dense<0.000000e+00> : vector<16x16xf32>
    %84 = tpu.matmul %80, %83, %cst_50 {dimension_numbers = #tpu.dot_dimension_numbers<[1], [0], [0], [1], [0, 0, 1, 1], [], []>} : vector<16x32xbf16>, vector<32x16xbf16>, vector<16x16xf32> -> vector<16x16xf32>
    %85 = vector.broadcast %22 : vector<1x16xf32> to vector<16x16xf32>
    %86 = arith.addf %84, %85 : vector<16x16xf32>
    %cst_51 = arith.constant dense<0xFF800000> : vector<16xf32>
    %87 = vector.multi_reduction <maximumf>, %86, %cst_51 [1] : vector<16x16xf32> to vector<16xf32>
    %88 = vector.shape_cast %87 : vector<16xf32> to vector<16x1xf32>
    %89 = vector.broadcast %88 : vector<16x1xf32> to vector<16x16xf32>
    %90 = arith.subf %86, %89 : vector<16x16xf32>
    %91 = math.exp %90 : vector<16x16xf32>
    %cst_52 = arith.constant dense<0.000000e+00> : vector<16xf32>
    %92 = vector.multi_reduction <add>, %91, %cst_52 [1] : vector<16x16xf32> to vector<16xf32>
    %93 = vector.shape_cast %92 : vector<16xf32> to vector<16x1xf32>
    %94 = arith.truncf %91 : vector<16x16xf32> to vector<16x16xbf16>
    %95 = arith.index_cast %c1_i32 : i32 to index
    %c0_53 = arith.constant 0 : index
    %c0_54 = arith.constant 0 : index
    %96 = vector.load %arg14[%95, %c0_53, %c0_54] : memref<2x16x32xbf16, #tpu.memory_space<vmem>>, vector<1x16x32xbf16>
    %97 = vector.shape_cast %96 : vector<1x16x32xbf16> to vector<16x32xbf16>
    %cst_55 = arith.constant dense<0.000000e+00> : vector<16x32xf32>
    %98 = tpu.matmul %94, %97, %cst_55 {dimension_numbers = #tpu.dot_dimension_numbers<[1], [0], [0], [1], [0, 0, 1, 1], [], []>} : vector<16x16xbf16>, vector<16x32xbf16>, vector<16x32xf32> -> vector<16x32xf32>
    %99 = tpu.reciprocal %93 {approx = true} : vector<16x1xf32> -> vector<16x1xf32>
    %100 = vector.broadcast %99 : vector<16x1xf32> to vector<16x32xf32>
    %101 = arith.mulf %98, %100 : vector<16x32xf32>
    %102 = arith.truncf %101 : vector<16x32xf32> to vector<16x32xbf16>
    %103 = arith.index_cast %c1_i32 : i32 to index
    %c0_56 = arith.constant 0 : index
    %c0_57 = arith.constant 0 : index
    %104 = vector.load %arg15[%103, %c0_56, %c0_57] : memref<2x32x64xbf16, #tpu.memory_space<vmem>>, vector<1x32x64xbf16>
    %105 = vector.shape_cast %104 : vector<1x32x64xbf16> to vector<32x64xbf16>
    %cst_58 = arith.constant dense<0.000000e+00> : vector<16x64xf32>
    %106 = tpu.matmul %102, %105, %cst_58 {dimension_numbers = #tpu.dot_dimension_numbers<[1], [0], [0], [1], [0, 0, 1, 1], [], []>} : vector<16x32xbf16>, vector<32x64xbf16>, vector<16x64xf32> -> vector<16x64xf32>
    %107 = arith.addf %65, %106 : vector<16x64xf32>
    %c2_i32 = arith.constant 2 : i32
    %c0_59 = arith.constant 0 : index
    %c0_60 = arith.constant 0 : index
    %108 = vector.load %arg16[%c0_59, %c0_60] : memref<1x64xf32, #tpu.memory_space<vmem>>, vector<1x64xf32>
    %109 = vector.broadcast %108 : vector<1x64xf32> to vector<16x64xf32>
    %110 = arith.addf %107, %109 : vector<16x64xf32>
    %cst_61 = arith.constant 0.000000e+00 : f32
    %111 = vector.broadcast %cst_61 : f32 to vector<16x64xf32>
    %112 = arith.maximumf %110, %111 : vector<16x64xf32>
    %113 = arith.truncf %112 : vector<16x64xf32> to vector<16x64xbf16>
    %c0_62 = arith.constant 0 : index
    %c0_63 = arith.constant 0 : index
    %114 = vector.load %arg17[%c0_62, %c0_63] : memref<64x32xbf16, #tpu.memory_space<vmem>>, vector<64x32xbf16>
    %cst_64 = arith.constant dense<0.000000e+00> : vector<16x32xf32>
    %115 = tpu.matmul %113, %114, %cst_64 {dimension_numbers = #tpu.dot_dimension_numbers<[1], [0], [0], [1], [0, 0, 1, 1], [], []>} : vector<16x64xbf16>, vector<64x32xbf16>, vector<16x32xf32> -> vector<16x32xf32>
    %c0_65 = arith.constant 0 : index
    %c0_66 = arith.constant 0 : index
    %116 = vector.load %arg18[%c0_65, %c0_66] : memref<1x32xf32, #tpu.memory_space<vmem>>, vector<1x32xf32>
    %117 = vector.broadcast %116 : vector<1x32xf32> to vector<16x32xf32>
    %118 = arith.addf %115, %117 : vector<16x32xf32>
    %cst_67 = arith.constant 0.000000e+00 : f32
    %119 = vector.broadcast %cst_67 : f32 to vector<16x32xf32>
    %120 = arith.maximumf %118, %119 : vector<16x32xf32>
    %121 = arith.truncf %120 : vector<16x32xf32> to vector<16x32xbf16>
    %c0_68 = arith.constant 0 : index
    %c0_69 = arith.constant 0 : index
    %122 = vector.load %arg19[%c0_68, %c0_69] : memref<32x128xbf16, #tpu.memory_space<vmem>>, vector<32x128xbf16>
    %cst_70 = arith.constant dense<0.000000e+00> : vector<16x128xf32>
    %123 = tpu.matmul %121, %122, %cst_70 {dimension_numbers = #tpu.dot_dimension_numbers<[1], [0], [0], [1], [0, 0, 1, 1], [], []>} : vector<16x32xbf16>, vector<32x128xbf16>, vector<16x128xf32> -> vector<16x128xf32>
    %c0_71 = arith.constant 0 : index
    %c0_72 = arith.constant 0 : index
    %124 = vector.load %arg20[%c0_71, %c0_72] : memref<1x128xf32, #tpu.memory_space<vmem>>, vector<1x128xf32>
    %125 = vector.broadcast %124 : vector<1x128xf32> to vector<16x128xf32>
    %126 = arith.addf %123, %125 : vector<16x128xf32>
    %c0_73 = arith.constant 0 : index
    %c0_74 = arith.constant 0 : index
    %127 = vector.load %arg21[%c0_73, %c0_74] : memref<16x128xf32, #tpu.memory_space<vmem>>, vector<16x128xf32>
    tpu.vector_store %arg21[%c0_73, %c0_74], %126 {strides = array<i32>} : memref<16x128xf32, #tpu.memory_space<vmem>>, vector<16x128xf32>,
    return
  }
  func.func @transform_0(%arg0: i32) -> (i32, i32) {
    %c0_i32 = arith.constant 0 : i32
    %c0_i32_0 = arith.constant 0 : i32
    return %arg0, %c0_i32 : i32, i32
  }
  func.func @transform_1(%arg0: i32) -> (i32, i32) {
    %c0_i32 = arith.constant 0 : i32
    %c0_i32_0 = arith.constant 0 : i32
    return %arg0, %c0_i32 : i32, i32
  }
  func.func @transform_2(%arg0: i32) -> (i32, i32) {
    %c0_i32 = arith.constant 0 : i32
    %c0_i32_0 = arith.constant 0 : i32
    %c0_i32_1 = arith.constant 0 : i32
    return %c0_i32, %c0_i32_0 : i32, i32
  }
  func.func @transform_3(%arg0: i32) -> (i32, i32) {
    %c0_i32 = arith.constant 0 : i32
    %c0_i32_0 = arith.constant 0 : i32
    %c0_i32_1 = arith.constant 0 : i32
    return %c0_i32, %c0_i32_0 : i32, i32
  }
  func.func @transform_4(%arg0: i32) -> (i32, i32) {
    %c0_i32 = arith.constant 0 : i32
    %c0_i32_0 = arith.constant 0 : i32
    %c0_i32_1 = arith.constant 0 : i32
    return %c0_i32, %c0_i32_0 : i32, i32
  }
  func.func @transform_5(%arg0: i32) -> (i32, i32) {
    %c0_i32 = arith.constant 0 : i32
    %c0_i32_0 = arith.constant 0 : i32
    %c0_i32_1 = arith.constant 0 : i32
    return %c0_i32, %c0_i32_0 : i32, i32
  }
  func.func @transform_6(%arg0: i32) -> (i32, i32) {
    %c0_i32 = arith.constant 0 : i32
    %c0_i32_0 = arith.constant 0 : i32
    %c0_i32_1 = arith.constant 0 : i32
    return %c0_i32, %c0_i32_0 : i32, i32
  }
  func.func @transform_7(%arg0: i32) -> (i32, i32) {
    %c0_i32 = arith.constant 0 : i32
    %c0_i32_0 = arith.constant 0 : i32
    %c0_i32_1 = arith.constant 0 : i32
    return %c0_i32, %c0_i32_0 : i32, i32
  }
  func.func @transform_8(%arg0: i32) -> (i32, i32) {
    %c0_i32 = arith.constant 0 : i32
    %c0_i32_0 = arith.constant 0 : i32
    %c0_i32_1 = arith.constant 0 : i32
    return %c0_i32, %c0_i32_0 : i32, i32
  }
  func.func @transform_9(%arg0: i32) -> (i32, i32, i32) {
    %c0_i32 = arith.constant 0 : i32
    %c0_i32_0 = arith.constant 0 : i32
    %c0_i32_1 = arith.constant 0 : i32
    %c0_i32_2 = arith.constant 0 : i32
    return %c0_i32, %c0_i32_0, %c0_i32_1 : i32, i32, i32
  }
  func.func @transform_10(%arg0: i32) -> (i32, i32, i32) {
    %c0_i32 = arith.constant 0 : i32
    %c0_i32_0 = arith.constant 0 : i32
    %c0_i32_1 = arith.constant 0 : i32
    %c0_i32_2 = arith.constant 0 : i32
    return %c0_i32, %c0_i32_0, %c0_i32_1 : i32, i32, i32
  }
  func.func @transform_11(%arg0: i32) -> (i32, i32, i32) {
    %c0_i32 = arith.constant 0 : i32
    %c0_i32_0 = arith.constant 0 : i32
    %c0_i32_1 = arith.constant 0 : i32
    %c0_i32_2 = arith.constant 0 : i32
    return %c0_i32, %c0_i32_0, %c0_i32_1 : i32, i32, i32
  }
  func.func @transform_12(%arg0: i32) -> (i32, i32, i32) {
    %c0_i32 = arith.constant 0 : i32
    %c0_i32_0 = arith.constant 0 : i32
    %c0_i32_1 = arith.constant 0 : i32
    %c0_i32_2 = arith.constant 0 : i32
    return %c0_i32, %c0_i32_0, %c0_i32_1 : i32, i32, i32
  }
  func.func @transform_13(%arg0: i32) -> (i32, i32, i32) {
    %c0_i32 = arith.constant 0 : i32
    %c0_i32_0 = arith.constant 0 : i32
    %c0_i32_1 = arith.constant 0 : i32
    %c0_i32_2 = arith.constant 0 : i32
    return %c0_i32, %c0_i32_0, %c0_i32_1 : i32, i32, i32
  }
  func.func @transform_14(%arg0: i32) -> (i32, i32, i32) {
    %c0_i32 = arith.constant 0 : i32
    %c0_i32_0 = arith.constant 0 : i32
    %c0_i32_1 = arith.constant 0 : i32
    %c0_i32_2 = arith.constant 0 : i32
    return %c0_i32, %c0_i32_0, %c0_i32_1 : i32, i32, i32
  }
  func.func @transform_15(%arg0: i32) -> (i32, i32) {
    %c0_i32 = arith.constant 0 : i32
    %c0_i32_0 = arith.constant 0 : i32
    %c0_i32_1 = arith.constant 0 : i32
    return %c0_i32, %c0_i32_0 : i32, i32
  }
  func.func @transform_16(%arg0: i32) -> (i32, i32) {
    %c0_i32 = arith.constant 0 : i32
    %c0_i32_0 = arith.constant 0 : i32
    %c0_i32_1 = arith.constant 0 : i32
    return %c0_i32, %c0_i32_0 : i32, i32
  }
  func.func @transform_17(%arg0: i32) -> (i32, i32) {
    %c0_i32 = arith.constant 0 : i32
    %c0_i32_0 = arith.constant 0 : i32
    %c0_i32_1 = arith.constant 0 : i32
    return %c0_i32, %c0_i32_0 : i32, i32
  }
  func.func @transform_18(%arg0: i32) -> (i32, i32) {
    %c0_i32 = arith.constant 0 : i32
    %c0_i32_0 = arith.constant 0 : i32
    %c0_i32_1 = arith.constant 0 : i32
    return %c0_i32, %c0_i32_0 : i32, i32
  }
  func.func @transform_19(%arg0: i32) -> (i32, i32) {
    %c0_i32 = arith.constant 0 : i32
    %c0_i32_0 = arith.constant 0 : i32
    %c0_i32_1 = arith.constant 0 : i32
    return %c0_i32, %c0_i32_0 : i32, i32
  }
  func.func @transform_20(%arg0: i32) -> (i32, i32) {
    %c0_i32 = arith.constant 0 : i32
    %c0_i32_0 = arith.constant 0 : i32
    return %arg0, %c0_i32 : i32, i32
  }
}

</mosaic_0001>

<llo_original>
// kernel: tpu_custom_call.1
$region0: #{tpu_custom_call.1}
  #allocation0 [shape = 'u32[]', space=smem, size = 0x4, offset = 0x4, fixed_abs, tag = 'smem constant byte address 0x4 - core index']
  #allocation1 [shape = 'u32[144,128]{1,0:T(1,128)}', space=vmem, size = 0x12000, scoped, tag = 'internal scratch']
  %s0 = inlined_call_operand.vmem [shape: bf16[32,16], index: 0, kind: input, shape index: {}]
  %s1 = inlined_call_operand.vmem [shape: bf16[32,16], index: 1, kind: input, shape index: {}]
  %s2 = inlined_call_operand.vmem [shape: f32[1,16], index: 2, kind: input, shape index: {}]
  %s3 = inlined_call_operand.vmem [shape: bf16[16,32], index: 3, kind: input, shape index: {}]
  %s4 = inlined_call_operand.vmem [shape: f32[1,32], index: 4, kind: input, shape index: {}]
  %s5 = inlined_call_operand.vmem [shape: bf16[32,32], index: 5, kind: input, shape index: {}]
  %s6 = inlined_call_operand.vmem [shape: f32[1,32], index: 6, kind: input, shape index: {}]
  %s7 = inlined_call_operand.vmem [shape: bf16[32,16], index: 7, kind: input, shape index: {}]
  %s8 = inlined_call_operand.vmem [shape: f32[1,16], index: 8, kind: input, shape index: {}]
  %s9 = inlined_call_operand.vmem [shape: bf16[2,16,32], index: 9, kind: input, shape index: {}]
  %s10 = inlined_call_operand.vmem [shape: bf16[2,16,32], index: 10, kind: input, shape index: {}]
  %s11 = inlined_call_operand.vmem [shape: f32[2,1,32], index: 11, kind: input, shape index: {}]
  %s12 = inlined_call_operand.vmem [shape: bf16[2,32,16], index: 12, kind: input, shape index: {}]
  %s13 = inlined_call_operand.vmem [shape: bf16[2,16,32], index: 13, kind: input, shape index: {}]
  %s14 = inlined_call_operand.vmem [shape: bf16[2,32,64], index: 14, kind: input, shape index: {}]
  %s15 = inlined_call_operand.vmem [shape: f32[1,64], index: 15, kind: input, shape index: {}]
  %s16 = inlined_call_operand.vmem [shape: bf16[64,32], index: 16, kind: input, shape index: {}]
  %s17 = inlined_call_operand.vmem [shape: f32[1,32], index: 17, kind: input, shape index: {}]
  %s18 = inlined_call_operand.vmem [shape: bf16[32,128], index: 18, kind: input, shape index: {}]
  %s19 = inlined_call_operand.vmem [shape: f32[1,128], index: 19, kind: input, shape index: {}]
  %s20 = inlined_call_operand.hbm [shape: f32[32,128], index: 20, kind: output, shape index: {}]
  %s21 = sld [smem:[#allocation0]]
  $region113: #{tpu_custom_call.1} parent=0
    _
  %s23 = ssub.s32 1, %s21
  %s24 = scalar_select 0, %s23, %s21
  $region1: #{tpu_custom_call.1} parent=0
    #allocation2 [shape = 'u8[16384]{0}', space=vmem, size = 0x4000, scoped, tag = 'output window, operand 0']
    #allocation3 [shape = 's32[2]{0}', space=sflag, size = 0x8, scoped, tag = 'scoped memory for tpu_custom_call.1']
    %25 = vsyncpa [#allocation3], 0
    %s26 = scalar_lea.sflag [#allocation3], 1
    %27 = vsyncpa %s26, 0
    loop: start=0, step=1, limit=4
    $region2: #{tpu_custom_call.1} parent=1 // loop_pre_header
      _
    $region3: #{tpu_custom_call.1} parent=1 // loop_header
      %s29 = sphi 0, %s33
      %p30 = scmp.ge.s32.totalorder %s29, 4
      %s39 = sphi 0, %s41
      %s42 = sphi 0, %s39
      %s43 = sphi 0, %s42
      %s59 = sphi 0, %s43
      %s65 = sphi 0, %s67
      %s68 = sphi 0, %s65
      %s69 = sphi 0, %s68
      %s85 = sphi 0, %s69
      %s89 = sphi 0, %s89
      %s91 = sphi 0, %s89
      %s92 = sphi 0, %s91
      %s106 = sphi 0, %s92
      %s110 = sphi 0, %s110
      %s112 = sphi 0, %s110
      %s113 = sphi 0, %s112
      %s127 = sphi 0, %s113
      %s131 = sphi 0, %s131
      %s133 = sphi 0, %s131
      %s134 = sphi 0, %s133
      %s148 = sphi 0, %s134
      %s152 = sphi 0, %s152
      %s154 = sphi 0, %s152
      %s155 = sphi 0, %s154
      %s169 = sphi 0, %s155
      %s173 = sphi 0, %s173
      %s175 = sphi 0, %s173
      %s176 = sphi 0, %s175
      %s190 = sphi 0, %s176
      %s194 = sphi 0, %s194
      %s196 = sphi 0, %s194
      %s197 = sphi 0, %s196
      %s211 = sphi 0, %s197
      %s215 = sphi 0, %s215
      %s217 = sphi 0, %s215
      %s218 = sphi 0, %s217
      %s232 = sphi 0, %s218
      %s236 = sphi 0, %s236
      %s238 = sphi 0, %s236
      %s239 = sphi 0, %s238
      %s253 = sphi 0, %s239
      %s257 = sphi 0, %s257
      %s259 = sphi 0, %s257
      %s260 = sphi 0, %s259
      %s274 = sphi 0, %s260
      %s278 = sphi 0, %s278
      %s280 = sphi 0, %s278
      %s281 = sphi 0, %s280
      %s295 = sphi 0, %s281
      %s299 = sphi 0, %s299
      %s301 = sphi 0, %s299
      %s302 = sphi 0, %s301
      %s316 = sphi 0, %s302
      %s320 = sphi 0, %s320
      %s322 = sphi 0, %s320
      %s323 = sphi 0, %s322
      %s337 = sphi 0, %s323
      %s341 = sphi 0, %s341
      %s343 = sphi 0, %s341
      %s344 = sphi 0, %s343
      %s358 = sphi 0, %s344
      %s362 = sphi 0, %s362
      %s364 = sphi 0, %s362
      %s365 = sphi 0, %s364
      %s379 = sphi 0, %s365
      %s383 = sphi 0, %s383
      %s385 = sphi 0, %s383
      %s386 = sphi 0, %s385
      %s400 = sphi 0, %s386
      %s404 = sphi 0, %s404
      %s406 = sphi 0, %s404
      %s407 = sphi 0, %s406
      %s421 = sphi 0, %s407
      %s425 = sphi 0, %s425
      %s427 = sphi 0, %s425
      %s428 = sphi 0, %s427
      %s442 = sphi 0, %s428
      %s446 = sphi 0, %s446
      %s448 = sphi 0, %s446
      %s449 = sphi 0, %s448
      %s463 = sphi 0, %s449
      %s469 = sphi 0, %s471
      %s472 = sphi 0, %s469
      %s473 = sphi 0, %s472
      %s489 = sphi 0, %s473
    $region4: #{tpu_custom_call.1} parent=1 // loop_header_branch
      %32 = sbr.rel (%p30) target = $region8
    $region5: #{tpu_custom_call.1} parent=1 // loop_body
      %s34 = ssub.s32 %s29, 1
      %s35 = ssub.s32 %s29, 2
      %s36 = sadd.s32 %s29, 1
      %s37 = ssub.s32 %s29, %s36
      %p38 = scmp.eq.s32.totalorder %s37, 0
      %s40 = sadd.s32 %s39, 1
      %s41 = scalar_select %p38, %s39, %s40
      %p44 = pneg %p38
      %p45 = scmp.eq.s32.totalorder %s29, 1
      %p46 = por %p44, %p45
      %p47 = scmp.ne.s32.totalorder %s39, %s42
      %p48 = scmp.eq.s32.totalorder %s29, 0
      %p49 = por %p47, %p48
      %p50 = scmp.ne.s32.totalorder %s39, %s42
      %p51 = scmp.eq.s32.totalorder %s34, 1
      %p52 = por %p50, %p51
      %p53 = scmp.ne.s32.totalorder %s42, %s43
      %p54 = scmp.eq.s32.totalorder %s34, 0
      %p55 = por %p53, %p54
      %p56 = scmp.ne.s32.totalorder %s42, %s43
      %p57 = scmp.eq.s32.totalorder %s35, 1
      %p58 = por %p56, %p57
      %p60 = scmp.ne.s32.totalorder %s43, %s59
      %p61 = scmp.eq.s32.totalorder %s35, 0
      %p62 = por %p60, %p61
      %s63 = ssub.s32 %s29, %s36
      %p64 = scmp.eq.s32.totalorder %s63, 0
      %s66 = sadd.s32 %s65, 1
      %s67 = scalar_select %p64, %s65, %s66
      %p70 = pneg %p64
      %p71 = scmp.eq.s32.totalorder %s29, 1
      %p72 = por %p70, %p71
      %p73 = scmp.ne.s32.totalorder %s65, %s68
      %p74 = scmp.eq.s32.totalorder %s29, 0
      %p75 = por %p73, %p74
      %p76 = scmp.ne.s32.totalorder %s65, %s68
      %p77 = scmp.eq.s32.totalorder %s34, 1
      %p78 = por %p76, %p77
      %p79 = scmp.ne.s32.totalorder %s68, %s69
      %p80 = scmp.eq.s32.totalorder %s34, 0
      %p81 = por %p79, %p80
      %p82 = scmp.ne.s32.totalorder %s68, %s69
      %p83 = scmp.eq.s32.totalorder %s35, 1
      %p84 = por %p82, %p83
      %p86 = scmp.ne.s32.totalorder %s69, %s85
      %p87 = scmp.eq.s32.totalorder %s35, 0
      %p88 = por %p86, %p87
      %s90 = sadd.s32 %s89, 1
      %p93 = scmp.eq.s32.totalorder %s29, 1
      %p94 = scmp.ne.s32.totalorder %s89, %s91
      %p95 = scmp.eq.s32.totalorder %s29, 0
      %p96 = por %p94, %p95
      %p97 = scmp.ne.s32.totalorder %s89, %s91
      %p98 = scmp.eq.s32.totalorder %s34, 1
      %p99 = por %p97, %p98
      %p100 = scmp.ne.s32.totalorder %s91, %s92
      %p101 = scmp.eq.s32.totalorder %s34, 0
      %p102 = por %p100, %p101
      %p103 = scmp.ne.s32.totalorder %s91, %s92
      %p104 = scmp.eq.s32.totalorder %s35, 1
      %p105 = por %p103, %p104
      %p107 = scmp.ne.s32.totalorder %s92, %s106
      %p108 = scmp.eq.s32.totalorder %s35, 0
      %p109 = por %p107, %p108
      %s111 = sadd.s32 %s110, 1
      %p114 = scmp.eq.s32.totalorder %s29, 1
      %p115 = scmp.ne.s32.totalorder %s110, %s112
      %p116 = scmp.eq.s32.totalorder %s29, 0
      %p117 = por %p115, %p116
      %p118 = scmp.ne.s32.totalorder %s110, %s112
      %p119 = scmp.eq.s32.totalorder %s34, 1
      %p120 = por %p118, %p119
      %p121 = scmp.ne.s32.totalorder %s112, %s113
      %p122 = scmp.eq.s32.totalorder %s34, 0
      %p123 = por %p121, %p122
      %p124 = scmp.ne.s32.totalorder %s112, %s113
      %p125 = scmp.eq.s32.totalorder %s35, 1
      %p126 = por %p124, %p125
      %p128 = scmp.ne.s32.totalorder %s113, %s127
      %p129 = scmp.eq.s32.totalorder %s35, 0
      %p130 = por %p128, %p129
      %s132 = sadd.s32 %s131, 1
      %p135 = scmp.eq.s32.totalorder %s29, 1
      %p136 = scmp.ne.s32.totalorder %s131, %s133
      %p137 = scmp.eq.s32.totalorder %s29, 0
      %p138 = por %p136, %p137
      %p139 = scmp.ne.s32.totalorder %s131, %s133
      %p140 = scmp.eq.s32.totalorder %s34, 1
      %p141 = por %p139, %p140
      %p142 = scmp.ne.s32.totalorder %s133, %s134
      %p143 = scmp.eq.s32.totalorder %s34, 0
      %p144 = por %p142, %p143
      %p145 = scmp.ne.s32.totalorder %s133, %s134
      %p146 = scmp.eq.s32.totalorder %s35, 1
      %p147 = por %p145, %p146
      %p149 = scmp.ne.s32.totalorder %s134, %s148
      %p150 = scmp.eq.s32.totalorder %s35, 0
      %p151 = por %p149, %p150
      %s153 = sadd.s32 %s152, 1
      %p156 = scmp.eq.s32.totalorder %s29, 1
      %p157 = scmp.ne.s32.totalorder %s152, %s154
      %p158 = scmp.eq.s32.totalorder %s29, 0
      %p159 = por %p157, %p158
      %p160 = scmp.ne.s32.totalorder %s152, %s154
      %p161 = scmp.eq.s32.totalorder %s34, 1
      %p162 = por %p160, %p161
      %p163 = scmp.ne.s32.totalorder %s154, %s155
      %p164 = scmp.eq.s32.totalorder %s34, 0
      %p165 = por %p163, %p164
      %p166 = scmp.ne.s32.totalorder %s154, %s155
      %p167 = scmp.eq.s32.totalorder %s35, 1
      %p168 = por %p166, %p167
      %p170 = scmp.ne.s32.totalorder %s155, %s169
      %p171 = scmp.eq.s32.totalorder %s35, 0
      %p172 = por %p170, %p171
      %s174 = sadd.s32 %s173, 1
      %p177 = scmp.eq.s32.totalorder %s29, 1
      %p178 = scmp.ne.s32.totalorder %s173, %s175
      %p179 = scmp.eq.s32.totalorder %s29, 0
      %p180 = por %p178, %p179
      %p181 = scmp.ne.s32.totalorder %s173, %s175
      %p182 = scmp.eq.s32.totalorder %s34, 1
      %p183 = por %p181, %p182
      %p184 = scmp.ne.s32.totalorder %s175, %s176
      %p185 = scmp.eq.s32.totalorder %s34, 0
      %p186 = por %p184, %p185
      %p187 = scmp.ne.s32.totalorder %s175, %s176
      %p188 = scmp.eq.s32.totalorder %s35, 1
      %p189 = por %p187, %p188
      %p191 = scmp.ne.s32.totalorder %s176, %s190
      %p192 = scmp.eq.s32.totalorder %s35, 0
      %p193 = por %p191, %p192
      %s195 = sadd.s32 %s194, 1
      %p198 = scmp.eq.s32.totalorder %s29, 1
      %p199 = scmp.ne.s32.totalorder %s194, %s196
      %p200 = scmp.eq.s32.totalorder %s29, 0
      %p201 = por %p199, %p200
      %p202 = scmp.ne.s32.totalorder %s194, %s196
      %p203 = scmp.eq.s32.totalorder %s34, 1
      %p204 = por %p202, %p203
      %p205 = scmp.ne.s32.totalorder %s196, %s197
      %p206 = scmp.eq.s32.totalorder %s34, 0
      %p207 = por %p205, %p206
      %p208 = scmp.ne.s32.totalorder %s196, %s197
      %p209 = scmp.eq.s32.totalorder %s35, 1
      %p210 = por %p208, %p209
      %p212 = scmp.ne.s32.totalorder %s197, %s211
      %p213 = scmp.eq.s32.totalorder %s35, 0
      %p214 = por %p212, %p213
      %s216 = sadd.s32 %s215, 1
      %p219 = scmp.eq.s32.totalorder %s29, 1
      %p220 = scmp.ne.s32.totalorder %s215, %s217
      %p221 = scmp.eq.s32.totalorder %s29, 0
      %p222 = por %p220, %p221
      %p223 = scmp.ne.s32.totalorder %s215, %s217
      %p224 = scmp.eq.s32.totalorder %s34, 1
      %p225 = por %p223, %p224
      %p226 = scmp.ne.s32.totalorder %s217, %s218
      %p227 = scmp.eq.s32.totalorder %s34, 0
      %p228 = por %p226, %p227
      %p229 = scmp.ne.s32.totalorder %s217, %s218
      %p230 = scmp.eq.s32.totalorder %s35, 1
      %p231 = por %p229, %p230
      %p233 = scmp.ne.s32.totalorder %s218, %s232
      %p234 = scmp.eq.s32.totalorder %s35, 0
      %p235 = por %p233, %p234
      %s237 = sadd.s32 %s236, 1
      %p240 = scmp.eq.s32.totalorder %s29, 1
      %p241 = scmp.ne.s32.totalorder %s236, %s238
      %p242 = scmp.eq.s32.totalorder %s29, 0
      %p243 = por %p241, %p242
      %p244 = scmp.ne.s32.totalorder %s236, %s238
      %p245 = scmp.eq.s32.totalorder %s34, 1
      %p246 = por %p244, %p245
      %p247 = scmp.ne.s32.totalorder %s238, %s239
      %p248 = scmp.eq.s32.totalorder %s34, 0
      %p249 = por %p247, %p248
      %p250 = scmp.ne.s32.totalorder %s238, %s239
      %p251 = scmp.eq.s32.totalorder %s35, 1
      %p252 = por %p250, %p251
      %p254 = scmp.ne.s32.totalorder %s239, %s253
      %p255 = scmp.eq.s32.totalorder %s35, 0
      %p256 = por %p254, %p255
      %s258 = sadd.s32 %s257, 1
      %p261 = scmp.eq.s32.totalorder %s29, 1
      %p262 = scmp.ne.s32.totalorder %s257, %s259
      %p263 = scmp.eq.s32.totalorder %s29, 0
      %p264 = por %p262, %p263
      %p265 = scmp.ne.s32.totalorder %s257, %s259
      %p266 = scmp.eq.s32.totalorder %s34, 1
      %p267 = por %p265, %p266
      %p268 = scmp.ne.s32.totalorder %s259, %s260
      %p269 = scmp.eq.s32.totalorder %s34, 0
      %p270 = por %p268, %p269
      %p271 = scmp.ne.s32.totalorder %s259, %s260
      %p272 = scmp.eq.s32.totalorder %s35, 1
      %p273 = por %p271, %p272
      %p275 = scmp.ne.s32.totalorder %s260, %s274
      %p276 = scmp.eq.s32.totalorder %s35, 0
      %p277 = por %p275, %p276
      %s279 = sadd.s32 %s278, 1
      %p282 = scmp.eq.s32.totalorder %s29, 1
      %p283 = scmp.ne.s32.totalorder %s278, %s280
      %p284 = scmp.eq.s32.totalorder %s29, 0
      %p285 = por %p283, %p284
      %p286 = scmp.ne.s32.totalorder %s278, %s280
      %p287 = scmp.eq.s32.totalorder %s34, 1
      %p288 = por %p286, %p287
      %p289 = scmp.ne.s32.totalorder %s280, %s281
      %p290 = scmp.eq.s32.totalorder %s34, 0
      %p291 = por %p289, %p290
      %p292 = scmp.ne.s32.totalorder %s280, %s281
      %p293 = scmp.eq.s32.totalorder %s35, 1
      %p294 = por %p292, %p293
      %p296 = scmp.ne.s32.totalorder %s281, %s295
      %p297 = scmp.eq.s32.totalorder %s35, 0
      %p298 = por %p296, %p297
      %s300 = sadd.s32 %s299, 1
      %p303 = scmp.eq.s32.totalorder %s29, 1
      %p304 = scmp.ne.s32.totalorder %s299, %s301
      %p305 = scmp.eq.s32.totalorder %s29, 0
      %p306 = por %p304, %p305
      %p307 = scmp.ne.s32.totalorder %s299, %s301
      %p308 = scmp.eq.s32.totalorder %s34, 1
      %p309 = por %p307, %p308
      %p310 = scmp.ne.s32.totalorder %s301, %s302
      %p311 = scmp.eq.s32.totalorder %s34, 0
      %p312 = por %p310, %p311
      %p313 = scmp.ne.s32.totalorder %s301, %s302
      %p314 = scmp.eq.s32.totalorder %s35, 1
      %p315 = por %p313, %p314
      %p317 = scmp.ne.s32.totalorder %s302, %s316
      %p318 = scmp.eq.s32.totalorder %s35, 0
      %p319 = por %p317, %p318
      %s321 = sadd.s32 %s320, 1
      %p324 = scmp.eq.s32.totalorder %s29, 1
      %p325 = scmp.ne.s32.totalorder %s320, %s322
      %p326 = scmp.eq.s32.totalorder %s29, 0
      %p327 = por %p325, %p326
      %p328 = scmp.ne.s32.totalorder %s320, %s322
      %p329 = scmp.eq.s32.totalorder %s34, 1
      %p330 = por %p328, %p329
      %p331 = scmp.ne.s32.totalorder %s322, %s323
      %p332 = scmp.eq.s32.totalorder %s34, 0
      %p333 = por %p331, %p332
      %p334 = scmp.ne.s32.totalorder %s322, %s323
      %p335 = scmp.eq.s32.totalorder %s35, 1
      %p336 = por %p334, %p335
      %p338 = scmp.ne.s32.totalorder %s323, %s337
      %p339 = scmp.eq.s32.totalorder %s35, 0
      %p340 = por %p338, %p339
      %s342 = sadd.s32 %s341, 1
      %p345 = scmp.eq.s32.totalorder %s29, 1
      %p346 = scmp.ne.s32.totalorder %s341, %s343
      %p347 = scmp.eq.s32.totalorder %s29, 0
      %p348 = por %p346, %p347
      %p349 = scmp.ne.s32.totalorder %s341, %s343
      %p350 = scmp.eq.s32.totalorder %s34, 1
      %p351 = por %p349, %p350
      %p352 = scmp.ne.s32.totalorder %s343, %s344
      %p353 = scmp.eq.s32.totalorder %s34, 0
      %p354 = por %p352, %p353
      %p355 = scmp.ne.s32.totalorder %s343, %s344
      %p356 = scmp.eq.s32.totalorder %s35, 1
      %p357 = por %p355, %p356
      %p359 = scmp.ne.s32.totalorder %s344, %s358
      %p360 = scmp.eq.s32.totalorder %s35, 0
      %p361 = por %p359, %p360
      %s363 = sadd.s32 %s362, 1
      %p366 = scmp.eq.s32.totalorder %s29, 1
      %p367 = scmp.ne.s32.totalorder %s362, %s364
      %p368 = scmp.eq.s32.totalorder %s29, 0
      %p369 = por %p367, %p368
      %p370 = scmp.ne.s32.totalorder %s362, %s364
      %p371 = scmp.eq.s32.totalorder %s34, 1
      %p372 = por %p370, %p371
      %p373 = scmp.ne.s32.totalorder %s364, %s365
      %p374 = scmp.eq.s32.totalorder %s34, 0
      %p375 = por %p373, %p374
      %p376 = scmp.ne.s32.totalorder %s364, %s365
      %p377 = scmp.eq.s32.totalorder %s35, 1
      %p378 = por %p376, %p377
      %p380 = scmp.ne.s32.totalorder %s365, %s379
      %p381 = scmp.eq.s32.totalorder %s35, 0
      %p382 = por %p380, %p381
      %s384 = sadd.s32 %s383, 1
      %p387 = scmp.eq.s32.totalorder %s29, 1
      %p388 = scmp.ne.s32.totalorder %s383, %s385
      %p389 = scmp.eq.s32.totalorder %s29, 0
      %p390 = por %p388, %p389
      %p391 = scmp.ne.s32.totalorder %s383, %s385
      %p392 = scmp.eq.s32.totalorder %s34, 1
      %p393 = por %p391, %p392
      %p394 = scmp.ne.s32.totalorder %s385, %s386
      %p395 = scmp.eq.s32.totalorder %s34, 0
      %p396 = por %p394, %p395
      %p397 = scmp.ne.s32.totalorder %s385, %s386
      %p398 = scmp.eq.s32.totalorder %s35, 1
      %p399 = por %p397, %p398
      %p401 = scmp.ne.s32.totalorder %s386, %s400
      %p402 = scmp.eq.s32.totalorder %s35, 0
      %p403 = por %p401, %p402
      %s405 = sadd.s32 %s404, 1
      %p408 = scmp.eq.s32.totalorder %s29, 1
      %p409 = scmp.ne.s32.totalorder %s404, %s406
      %p410 = scmp.eq.s32.totalorder %s29, 0
      %p411 = por %p409, %p410
      %p412 = scmp.ne.s32.totalorder %s404, %s406
      %p413 = scmp.eq.s32.totalorder %s34, 1
      %p414 = por %p412, %p413
      %p415 = scmp.ne.s32.totalorder %s406, %s407
      %p416 = scmp.eq.s32.totalorder %s34, 0
      %p417 = por %p415, %p416
      %p418 = scmp.ne.s32.totalorder %s406, %s407
      %p419 = scmp.eq.s32.totalorder %s35, 1
      %p420 = por %p418, %p419
      %p422 = scmp.ne.s32.totalorder %s407, %s421
      %p423 = scmp.eq.s32.totalorder %s35, 0
      %p424 = por %p422, %p423
      %s426 = sadd.s32 %s425, 1
      %p429 = scmp.eq.s32.totalorder %s29, 1
      %p430 = scmp.ne.s32.totalorder %s425, %s427
      %p431 = scmp.eq.s32.totalorder %s29, 0
      %p432 = por %p430, %p431
      %p433 = scmp.ne.s32.totalorder %s425, %s427
      %p434 = scmp.eq.s32.totalorder %s34, 1
      %p435 = por %p433, %p434
      %p436 = scmp.ne.s32.totalorder %s427, %s428
      %p437 = scmp.eq.s32.totalorder %s34, 0
      %p438 = por %p436, %p437
      %p439 = scmp.ne.s32.totalorder %s427, %s428
      %p440 = scmp.eq.s32.totalorder %s35, 1
      %p441 = por %p439, %p440
      %p443 = scmp.ne.s32.totalorder %s428, %s442
      %p444 = scmp.eq.s32.totalorder %s35, 0
      %p445 = por %p443, %p444
      %s447 = sadd.s32 %s446, 1
      %p450 = scmp.eq.s32.totalorder %s29, 1
      %p451 = scmp.ne.s32.totalorder %s446, %s448
      %p452 = scmp.eq.s32.totalorder %s29, 0
      %p453 = por %p451, %p452
      %p454 = scmp.ne.s32.totalorder %s446, %s448
      %p455 = scmp.eq.s32.totalorder %s34, 1
      %p456 = por %p454, %p455
      %p457 = scmp.ne.s32.totalorder %s448, %s449
      %p458 = scmp.eq.s32.totalorder %s34, 0
      %p459 = por %p457, %p458
      %p460 = scmp.ne.s32.totalorder %s448, %s449
      %p461 = scmp.eq.s32.totalorder %s35, 1
      %p462 = por %p460, %p461
      %p464 = scmp.ne.s32.totalorder %s449, %s463
      %p465 = scmp.eq.s32.totalorder %s35, 0
      %p466 = por %p464, %p465
      %s467 = ssub.s32 %s29, %s36
      %p468 = scmp.eq.s32.totalorder %s467, 0
      %s470 = sadd.s32 %s469, 1
      %s471 = scalar_select %p468, %s469, %s470
      %p474 = pneg %p468
      %p475 = scmp.eq.s32.totalorder %s29, 1
      %p476 = por %p474, %p475
      %p477 = scmp.ne.s32.totalorder %s469, %s472
      %p478 = scmp.eq.s32.totalorder %s29, 0
      %p479 = por %p477, %p478
      %p480 = scmp.ne.s32.totalorder %s469, %s472
      %p481 = scmp.eq.s32.totalorder %s34, 1
      %p482 = por %p480, %p481
      %p483 = scmp.ne.s32.totalorder %s472, %s473
      %p484 = scmp.eq.s32.totalorder %s34, 0
      %p485 = por %p483, %p484
      %p486 = scmp.ne.s32.totalorder %s472, %s473
      %p487 = scmp.eq.s32.totalorder %s35, 1
      %p488 = por %p486, %p487
      %p490 = scmp.ne.s32.totalorder %s473, %s489
      %p491 = scmp.eq.s32.totalorder %s35, 0
      %p492 = por %p490, %p491
      %p493 = scmp.le.s32.totalorder 1, %s29
      %p494 = scmp.lt.s32.totalorder %s29, 3
      %p495 = pnand %p493, %p494
      %p496 = pneg %p495
      // Predicated region
      $region9: #{tpu_custom_call.1} parent=5 // pred_check
        _
      $region10: #{tpu_custom_call.1} parent=5 // pred_check_branch
        %498 = sbr.rel (%p495) target = $region12
      $region11: #{tpu_custom_call.1} parent=5 // pred_region
        %s499 = ssub.s32 %s29, 1
        // Predicated region
        $region13: #{tpu_custom_call.1} parent=11 // pred_check
          %p500 = pneg %p102
        $region14: #{tpu_custom_call.1} parent=11 // pred_check_branch
          %502 = sbr.rel (%p500) target = $region16
        $region15: #{tpu_custom_call.1} parent=11 // pred_region
          _
        $region16: #{tpu_custom_call.1} parent=11 // pred_fallthru
          _
        // Predicated region
        $region17: #{tpu_custom_call.1} parent=11 // pred_check
          %p503 = pneg %p123
        $region18: #{tpu_custom_call.1} parent=11 // pred_check_branch
          %505 = sbr.rel (%p503) target = $region20
        $region19: #{tpu_custom_call.1} parent=11 // pred_region
          _
        $region20: #{tpu_custom_call.1} parent=11 // pred_fallthru
          _
        // Predicated region
        $region21: #{tpu_custom_call.1} parent=11 // pred_check
          %p506 = pneg %p144
        $region22: #{tpu_custom_call.1} parent=11 // pred_check_branch
          %508 = sbr.rel (%p506) target = $region24
        $region23: #{tpu_custom_call.1} parent=11 // pred_region
          _
        $region24: #{tpu_custom_call.1} parent=11 // pred_fallthru
          _
        // Predicated region
        $region25: #{tpu_custom_call.1} parent=11 // pred_check
          %p509 = pneg %p165
        $region26: #{tpu_custom_call.1} parent=11 // pred_check_branch
          %511 = sbr.rel (%p509) target = $region28
        $region27: #{tpu_custom_call.1} parent=11 // pred_region
          _
        $region28: #{tpu_custom_call.1} parent=11 // pred_fallthru
          _
        // Predicated region
        $region29: #{tpu_custom_call.1} parent=11 // pred_check
          %p512 = pneg %p186
        $region30: #{tpu_custom_call.1} parent=11 // pred_check_branch
          %514 = sbr.rel (%p512) target = $region32
        $region31: #{tpu_custom_call.1} parent=11 // pred_region
          _
        $region32: #{tpu_custom_call.1} parent=11 // pred_fallthru
          _
        // Predicated region
        $region33: #{tpu_custom_call.1} parent=11 // pred_check
          %p515 = pneg %p207
        $region34: #{tpu_custom_call.1} parent=11 // pred_check_branch
          %517 = sbr.rel (%p515) target = $region36
        $region35: #{tpu_custom_call.1} parent=11 // pred_region
          _
        $region36: #{tpu_custom_call.1} parent=11 // pred_fallthru
          _
        // Predicated region
        $region37: #{tpu_custom_call.1} parent=11 // pred_check
          %p518 = pneg %p228
        $region38: #{tpu_custom_call.1} parent=11 // pred_check_branch
          %520 = sbr.rel (%p518) target = $region40
        $region39: #{tpu_custom_call.1} parent=11 // pred_region
          _
        $region40: #{tpu_custom_call.1} parent=11 // pred_fallthru
          _
        // Predicated region
        $region41: #{tpu_custom_call.1} parent=11 // pred_check
          %p521 = pneg %p249
        $region42: #{tpu_custom_call.1} parent=11 // pred_check_branch
          %523 = sbr.rel (%p521) target = $region44
        $region43: #{tpu_custom_call.1} parent=11 // pred_region
          _
        $region44: #{tpu_custom_call.1} parent=11 // pred_fallthru
          _
        // Predicated region
        $region45: #{tpu_custom_call.1} parent=11 // pred_check
          %p524 = pneg %p270
        $region46: #{tpu_custom_call.1} parent=11 // pred_check_branch
          %526 = sbr.rel (%p524) target = $region48
        $region47: #{tpu_custom_call.1} parent=11 // pred_region
          _
        $region48: #{tpu_custom_call.1} parent=11 // pred_fallthru
          _
        // Predicated region
        $region49: #{tpu_custom_call.1} parent=11 // pred_check
          %p527 = pneg %p291
        $region50: #{tpu_custom_call.1} parent=11 // pred_check_branch
          %529 = sbr.rel (%p527) target = $region52
        $region51: #{tpu_custom_call.1} parent=11 // pred_region
          _
        $region52: #{tpu_custom_call.1} parent=11 // pred_fallthru
          _
        // Predicated region
        $region53: #{tpu_custom_call.1} parent=11 // pred_check
          %p530 = pneg %p312
        $region54: #{tpu_custom_call.1} parent=11 // pred_check_branch
          %532 = sbr.rel (%p530) target = $region56
        $region55: #{tpu_custom_call.1} parent=11 // pred_region
          _
        $region56: #{tpu_custom_call.1} parent=11 // pred_fallthru
          _
        // Predicated region
        $region57: #{tpu_custom_call.1} parent=11 // pred_check
          %p533 = pneg %p333
        $region58: #{tpu_custom_call.1} parent=11 // pred_check_branch
          %535 = sbr.rel (%p533) target = $region60
        $region59: #{tpu_custom_call.1} parent=11 // pred_region
          _
        $region60: #{tpu_custom_call.1} parent=11 // pred_fallthru
          _
        // Predicated region
        $region61: #{tpu_custom_call.1} parent=11 // pred_check
          %p536 = pneg %p354
        $region62: #{tpu_custom_call.1} parent=11 // pred_check_branch
          %538 = sbr.rel (%p536) target = $region64
        $region63: #{tpu_custom_call.1} parent=11 // pred_region
          _
        $region64: #{tpu_custom_call.1} parent=11 // pred_fallthru
          _
        // Predicated region
        $region65: #{tpu_custom_call.1} parent=11 // pred_check
          %p539 = pneg %p375
        $region66: #{tpu_custom_call.1} parent=11 // pred_check_branch
          %541 = sbr.rel (%p539) target = $region68
        $region67: #{tpu_custom_call.1} parent=11 // pred_region
          _
        $region68: #{tpu_custom_call.1} parent=11 // pred_fallthru
          _
        // Predicated region
        $region69: #{tpu_custom_call.1} parent=11 // pred_check
          %p542 = pneg %p396
        $region70: #{tpu_custom_call.1} parent=11 // pred_check_branch
          %544 = sbr.rel (%p542) target = $region72
        $region71: #{tpu_custom_call.1} parent=11 // pred_region
          _
        $region72: #{tpu_custom_call.1} parent=11 // pred_fallthru
          _
        // Predicated region
        $region73: #{tpu_custom_call.1} parent=11 // pred_check
          %p545 = pneg %p417
        $region74: #{tpu_custom_call.1} parent=11 // pred_check_branch
          %547 = sbr.rel (%p545) target = $region76
        $region75: #{tpu_custom_call.1} parent=11 // pred_region
          _
        $region76: #{tpu_custom_call.1} parent=11 // pred_fallthru
          _
        // Predicated region
        $region77: #{tpu_custom_call.1} parent=11 // pred_check
          %p548 = pneg %p438
        $region78: #{tpu_custom_call.1} parent=11 // pred_check_branch
          %550 = sbr.rel (%p548) target = $region80
        $region79: #{tpu_custom_call.1} parent=11 // pred_region
          _
        $region80: #{tpu_custom_call.1} parent=11 // pred_fallthru
          _
        // Predicated region
        $region81: #{tpu_custom_call.1} parent=11 // pred_check
          %p551 = pneg %p459
        $region82: #{tpu_custom_call.1} parent=11 // pred_check_branch
          %553 = sbr.rel (%p551) target = $region84
        $region83: #{tpu_custom_call.1} parent=11 // pred_region
          _
        $region84: #{tpu_custom_call.1} parent=11 // pred_fallthru
          _
      $region12: #{tpu_custom_call.1} parent=5 // pred_fallthru
        _
      %p554 = scmp.lt.s32.totalorder %s29, 2
      // Predicated region
      $region85: #{tpu_custom_call.1} parent=5 // pred_check
        %p555 = pneg %p554
      $region86: #{tpu_custom_call.1} parent=5 // pred_check_branch
        %557 = sbr.rel (%p555) target = $region88
      $region87: #{tpu_custom_call.1} parent=5 // pred_region
        // Predicated region
        $region89: #{tpu_custom_call.1} parent=87 // pred_check
          %p558 = pneg %p49
        $region90: #{tpu_custom_call.1} parent=87 // pred_check_branch
          %560 = sbr.rel (%p558) target = $region92
        $region91: #{tpu_custom_call.1} parent=87 // pred_region
          %s561 = smul.u32 2, %s29
          %p562 = scmp.lt.s32.totalorder %s561, 3
          %s563 = scalar_select %p562, %s561, 3
          %s564 = smul.addr %s563, 4
          %s565 = scalar_lea.vmem %s0, %s564
          %s566 = smul.u32 2, %s29
        $region92: #{tpu_custom_call.1} parent=87 // pred_fallthru
          _
        // Predicated region
        $region93: #{tpu_custom_call.1} parent=87 // pred_check
          %p567 = pneg %p75
        $region94: #{tpu_custom_call.1} parent=87 // pred_check_branch
          %569 = sbr.rel (%p567) target = $region96
        $region95: #{tpu_custom_call.1} parent=87 // pred_region
          %s570 = smul.u32 2, %s29
          %p571 = scmp.lt.s32.totalorder %s570, 3
          %s572 = scalar_select %p571, %s570, 3
          %s573 = smul.addr %s572, 4
          %s574 = scalar_lea.vmem %s1, %s573
          %s575 = smul.u32 2, %s29
        $region96: #{tpu_custom_call.1} parent=87 // pred_fallthru
          _
      $region88: #{tpu_custom_call.1} parent=5 // pred_fallthru
        _
      %p576 = scmp.le.s32.totalorder 1, %s29
      %p577 = scmp.lt.s32.totalorder %s29, 3
      %p578 = pnand %p576, %p577
      %p579 = pneg %p578
      // Predicated region
      $region97: #{tpu_custom_call.1} parent=5 // pred_check
        _
      $region98: #{tpu_custom_call.1} parent=5 // pred_check_branch
        %581 = sbr.rel (%p578) target = $region100
      $region99: #{tpu_custom_call.1} parent=5 // pred_region
        %s582 = ssub.s32 %s29, 1
        %s583 = smul.u32 2, %s34
        %p584 = scmp.lt.s32.totalorder %s583, 3
        %s585 = scalar_select %p584, %s583, 3
        %s586 = smul.addr %s585, 4
        %s587 = scalar_lea.vmem %s0, %s586
        %p588 = pneg %p55
        %p589 = pneg %p52
        %s590 = smul.u32 2, %s34
        %p591 = scmp.lt.s32.totalorder %s590, 3
        %s592 = scalar_select %p591, %s590, 3
        %s593 = smul.addr %s592, 4
        %s594 = scalar_lea.vmem %s1, %s593
        %p595 = pneg %p81
        %p596 = pneg %p78
        %p597 = pneg %p102
        %p598 = pneg %p99
        %p599 = pneg %p123
        %p600 = pneg %p120
        %p601 = pneg %p144
        %p602 = pneg %p141
        %p603 = pneg %p165
        %p604 = pneg %p162
        %p605 = pneg %p186
        %p606 = pneg %p183
        %p607 = pneg %p207
        %p608 = pneg %p204
        %p609 = pneg %p228
        %p610 = pneg %p225
        %p611 = pneg %p249
        %p612 = pneg %p246
        %p613 = pneg %p270
        %p614 = pneg %p267
        %p615 = pneg %p291
        %p616 = pneg %p288
        %p617 = pneg %p312
        %p618 = pneg %p309
        %p619 = pneg %p333
        %p620 = pneg %p330
        %p621 = pneg %p354
        %p622 = pneg %p351
        %p623 = pneg %p375
        %p624 = pneg %p372
        %p625 = pneg %p396
        %p626 = pneg %p393
        %p627 = pneg %p417
        %p628 = pneg %p414
        %p629 = pneg %p438
        %p630 = pneg %p435
        %p631 = pneg %p459
        %p632 = pneg %p456
        %p633 = pneg %p485
        %p634 = pneg %p482
        %s635 = sand.u32 %s472, 1
        %s636 = scalar_lea.sflag [#allocation3], %s635
        %s637 = sand.u32 %s472, 1
        %s638 = smul.addr %s637, 16
        %s639 = scalar_lea.vmem [#allocation2], %s638
        %s640 = smul.u32 2, %s34
        %p641 = scmp.lt.s32.totalorder %s640, 3
        %s642 = scalar_select %p641, %s640, 3
        %s643 = smul.addr %s642, 4
        %s644 = scalar_lea.vmem %s0, %s643
        %s645 = smul.u32 2, %s34
        %s646 = smul.u32 2, %s34
        %p647 = scmp.lt.s32.totalorder %s646, 3
        %s648 = scalar_select %p647, %s646, 3
        %s649 = smul.addr %s648, 4
        %s650 = scalar_lea.vmem %s1, %s649
        %s651 = smul.u32 2, %s34
        %s652 = smul.u32 2, %s34
        %v654 = vld [vmem:[%s644] sm:$0xf]
        %v655 = vld [vmem:[%s644 + $0x4] sm:$0xf]
        %v656 = vld [vmem:[%s650] sm:$0xf]
        %v657 = vld [vmem:[%s650 + $0x4] sm:$0xf]
        %v658 = vld [vmem:[%s3] sm:$0xf]
        %v659 = vld [vmem:[%s3 + $0x4] sm:$0xf]
        %v660 = vld [vmem:[%s4] sm:$0x1]
        %v662 = vlaneseq
        %v663 = vshrl.u32 %v662, 7
        %v664 = vsub.s32 0, %v663
        %v665 = vrot.slane %v660, %v664
        %v669 = vunpack.c.l.b16 %v654
        %v670 = vunpack.c.l.b16 %v655
        %v671 = vpack.c.b16 %v670, %v669
        %v674 = vunpack.c.l.b16 %v658
        %v675 = vunpack.c.l.b16 %v659
        %v676 = vpack.c.b16 %v675, %v674
        %vm678 = vcmask 130048
        %v680 = vsel %vm678, %v671, 0
        %682 = vmatprep.subr.bf16.mxu0 0
        %683 = vmatpush1.bf16.msra.mxu0 %v676
        %684 = vmatprep.subr.bf16.mxu0 0
        %685 = vmatpush1.bf16.msra.mxu0 0
        %686 = vmatprep.subr.bf16.mxu0 0
        %687 = vmatpush1.bf16.msra.mxu0 0
        %688 = vmatprep.subr.bf16.mxu0 0
        %689 = vmatpush1.bf16.msra.mxu0 0
        %690 = vmatprep.subr.bf16.mxu0 0
        %691 = vmatpush1.bf16.msra.mxu0 0
        %692 = vmatprep.subr.bf16.mxu0 0
        %693 = vmatpush1.bf16.msra.mxu0 0
        %694 = vmatprep.subr.bf16.mxu0 0
        %695 = vmatpush1.bf16.msra.mxu0 0
        %696 = vmatprep.subr.bf16.mxu0 0
        %697 = vmatpush1.bf16.msra.mxu0 0
        %698 = vmatprep.subr.bf16.mxu0 0
        %699 = vmatpush1.bf16.msra.mxu0 0
        %700 = vmatprep.subr.bf16.mxu0 0
        %701 = vmatpush1.bf16.msra.mxu0 0
        %702 = vmatprep.subr.bf16.mxu0 0
        %703 = vmatpush1.bf16.msra.mxu0 0
        %704 = vmatprep.subr.bf16.mxu0 0
        %705 = vmatpush1.bf16.msra.mxu0 0
        %706 = vmatprep.subr.bf16.mxu0 0
        %707 = vmatpush1.bf16.msra.mxu0 0
        %708 = vmatprep.subr.bf16.mxu0 0
        %709 = vmatpush1.bf16.msra.mxu0 0
        %710 = vmatprep.subr.bf16.mxu0 0
        %711 = vmatpush1.bf16.msra.mxu0 0
        %712 = vmatprep.subr.bf16.mxu0 0
        %713 = vmatpush1.bf16.msra.mxu0 0
        %714 = vmatprep.mubr.bf16.mxu0 0
        %715 = vmatmul.mubr.bf16.gmra.mrb[0].mxu0 %v680
        %v716 = vpop.f32.mrb[0].mxu0
        %v717 = vadd.f32 %v665, %v716
        %v718 = vpop.f32.mrb[0].mxu0
        %v719 = vpop.f32.mrb[0].mxu0
        %v720 = vadd.f32 %v665, %v719
        %v721 = vpop.f32.mrb[0].mxu0
        %722 = vdwg.mxu0
        %v723 = vmax.f32 %v717, 0.0
        %v724 = vmax.f32 %v720, 0.0
        %v725 = vpack.c.bf16 %v724, %v723
        %v726 = vld [vmem:[%s5] sm:$0xf]
        %v727 = vld [vmem:[%s5 + $0x4] sm:$0xf]
        %v728 = vld [vmem:[%s5 + $0x8] sm:$0xf]
        %v729 = vld [vmem:[%s5 + $0xc] sm:$0xf]
        %v730 = vld [vmem:[%s6] sm:$0x1]
        %v732 = vlaneseq
        %v733 = vshrl.u32 %v732, 7
        %v734 = vsub.s32 0, %v733
        %v735 = vrot.slane %v730, %v734
        %v741 = vunpack.c.l.b16 %v726
        %v742 = vunpack.c.l.b16 %v727
        %v743 = vunpack.c.l.b16 %v728
        %v744 = vunpack.c.l.b16 %v729
        %v745 = vpack.c.b16 %v742, %v741
        %v746 = vpack.c.b16 %v744, %v743
        %vm749 = vcmask 261120
        %v751 = vsel %vm749, %v725, 0
        %753 = vmatprep.subr.bf16.mxu0 0
        %754 = vmatpush1.bf16.msra.mxu0 %v745
        %755 = vmatprep.subr.bf16.mxu0 0
        %756 = vmatpush1.bf16.msra.mxu0 %v746
        %757 = vmatprep.subr.bf16.mxu0 0
        %758 = vmatpush1.bf16.msra.mxu0 0
        %759 = vmatprep.subr.bf16.mxu0 0
        %760 = vmatpush1.bf16.msra.mxu0 0
        %761 = vmatprep.subr.bf16.mxu0 0
        %762 = vmatpush1.bf16.msra.mxu0 0
        %763 = vmatprep.subr.bf16.mxu0 0
        %764 = vmatpush1.bf16.msra.mxu0 0
        %765 = vmatprep.subr.bf16.mxu0 0
        %766 = vmatpush1.bf16.msra.mxu0 0
        %767 = vmatprep.subr.bf16.mxu0 0
        %768 = vmatpush1.bf16.msra.mxu0 0
        %769 = vmatprep.subr.bf16.mxu0 0
        %770 = vmatpush1.bf16.msra.mxu0 0
        %771 = vmatprep.subr.bf16.mxu0 0
        %772 = vmatpush1.bf16.msra.mxu0 0
        %773 = vmatprep.subr.bf16.mxu0 0
        %774 = vmatpush1.bf16.msra.mxu0 0
        %775 = vmatprep.subr.bf16.mxu0 0
        %776 = vmatpush1.bf16.msra.mxu0 0
        %777 = vmatprep.subr.bf16.mxu0 0
        %778 = vmatpush1.bf16.msra.mxu0 0
        %779 = vmatprep.subr.bf16.mxu0 0
        %780 = vmatpush1.bf16.msra.mxu0 0
        %781 = vmatprep.subr.bf16.mxu0 0
        %782 = vmatpush1.bf16.msra.mxu0 0
        %783 = vmatprep.subr.bf16.mxu0 0
        %784 = vmatpush1.bf16.msra.mxu0 0
        %785 = vmatprep.mubr.bf16.mxu0 0
        %786 = vmatmul.mubr.bf16.gmra.mrb[0].mxu0 %v751
        %v787 = vpop.f32.mrb[0].mxu0
        %v788 = vadd.f32 %v735, %v787
        %v789 = vpop.f32.mrb[0].mxu0
        %v790 = vpop.f32.mrb[0].mxu0
        %v791 = vadd.f32 %v735, %v790
        %v792 = vpop.f32.mrb[0].mxu0
        %793 = vdwg.mxu0
        %v794 = vpack.c.bf16 %v791, %v788
        %v795 = vld [vmem:[%s7] sm:$0xf]
        %v796 = vld [vmem:[%s7 + $0x4] sm:$0xf]
        %v797 = vld [vmem:[%s7 + $0x8] sm:$0xf]
        %v798 = vld [vmem:[%s7 + $0xc] sm:$0xf]
        %v799 = vld [vmem:[%s8] sm:$0x1]
        %v801 = vlaneseq
        %v802 = vshrl.u32 %v801, 7
        %v803 = vsub.s32 0, %v802
        %v804 = vrot.slane %v799, %v803
        %v810 = vunpack.c.l.b16 %v795
        %v811 = vunpack.c.l.b16 %v796
        %v812 = vunpack.c.l.b16 %v797
        %v813 = vunpack.c.l.b16 %v798
        %v814 = vpack.c.b16 %v811, %v810
        %v815 = vpack.c.b16 %v813, %v812
        %v819 = vsel %vm749, %v794, 0
        %821 = vmatprep.subr.bf16.mxu0 0
        %822 = vmatpush1.bf16.msra.mxu0 %v814
        %823 = vmatprep.subr.bf16.mxu0 0
        %824 = vmatpush1.bf16.msra.mxu0 %v815
        %825 = vmatprep.subr.bf16.mxu0 0
        %826 = vmatpush1.bf16.msra.mxu0 0
        %827 = vmatprep.subr.bf16.mxu0 0
        %828 = vmatpush1.bf16.msra.mxu0 0
        %829 = vmatprep.subr.bf16.mxu0 0
        %830 = vmatpush1.bf16.msra.mxu0 0
        %831 = vmatprep.subr.bf16.mxu0 0
        %832 = vmatpush1.bf16.msra.mxu0 0
        %833 = vmatprep.subr.bf16.mxu0 0
        %834 = vmatpush1.bf16.msra.mxu0 0
        %835 = vmatprep.subr.bf16.mxu0 0
        %836 = vmatpush1.bf16.msra.mxu0 0
        %837 = vmatprep.subr.bf16.mxu0 0
        %838 = vmatpush1.bf16.msra.mxu0 0
        %839 = vmatprep.subr.bf16.mxu0 0
        %840 = vmatpush1.bf16.msra.mxu0 0
        %841 = vmatprep.subr.bf16.mxu0 0
        %842 = vmatpush1.bf16.msra.mxu0 0
        %843 = vmatprep.subr.bf16.mxu0 0
        %844 = vmatpush1.bf16.msra.mxu0 0
        %845 = vmatprep.subr.bf16.mxu0 0
        %846 = vmatpush1.bf16.msra.mxu0 0
        %847 = vmatprep.subr.bf16.mxu0 0
        %848 = vmatpush1.bf16.msra.mxu0 0
        %849 = vmatprep.subr.bf16.mxu0 0
        %850 = vmatpush1.bf16.msra.mxu0 0
        %851 = vmatprep.subr.bf16.mxu0 0
        %852 = vmatpush1.bf16.msra.mxu0 0
        %853 = vmatprep.mubr.bf16.mxu0 0
        %854 = vmatmul.mubr.bf16.gmra.mrb[0].mxu0 %v819
        %v855 = vpop.f32.mrb[0].mxu0
        %v856 = vadd.f32 %v804, %v855
        %v857 = vpop.f32.mrb[0].mxu0
        %v858 = vpop.f32.mrb[0].mxu0
        %v859 = vadd.f32 %v804, %v858
        %v860 = vpop.f32.mrb[0].mxu0
        %861 = vdwg.mxu0
        %v862 = vpack.c.bf16 %v859, %v856
        %v863 = vld [vmem:[%s2] sm:$0x1]
        %v864 = vld [vmem:[%s9] sm:$0xf]
        %v865 = vld [vmem:[%s9 + $0x4] sm:$0xf]
        %v866 = vld [vmem:[%s10] sm:$0xf]
        %v867 = vld [vmem:[%s10 + $0x4] sm:$0xf]
        %v870 = vunpack.c.l.b16 %v656
        %v871 = vunpack.c.l.b16 %v657
        %v872 = vpack.c.b16 %v871, %v870
        %v875 = vunpack.c.l.b16 %v866
        %v876 = vunpack.c.l.b16 %v867
        %v877 = vpack.c.b16 %v876, %v875
        %v880 = vsel %vm678, %v872, 0
        %882 = vmatprep.subr.bf16.mxu0 0
        %883 = vmatpush1.bf16.msra.mxu0 %v877
        %884 = vmatprep.subr.bf16.mxu0 0
        %885 = vmatpush1.bf16.msra.mxu0 0
        %886 = vmatprep.subr.bf16.mxu0 0
        %887 = vmatpush1.bf16.msra.mxu0 0
        %888 = vmatprep.subr.bf16.mxu0 0
        %889 = vmatpush1.bf16.msra.mxu0 0
        %890 = vmatprep.subr.bf16.mxu0 0
        %891 = vmatpush1.bf16.msra.mxu0 0
        %892 = vmatprep.subr.bf16.mxu0 0
        %893 = vmatpush1.bf16.msra.mxu0 0
        %894 = vmatprep.subr.bf16.mxu0 0
        %895 = vmatpush1.bf16.msra.mxu0 0
        %896 = vmatprep.subr.bf16.mxu0 0
        %897 = vmatpush1.bf16.msra.mxu0 0
        %898 = vmatprep.subr.bf16.mxu0 0
        %899 = vmatpush1.bf16.msra.mxu0 0
        %900 = vmatprep.subr.bf16.mxu0 0
        %901 = vmatpush1.bf16.msra.mxu0 0
        %902 = vmatprep.subr.bf16.mxu0 0
        %903 = vmatpush1.bf16.msra.mxu0 0
        %904 = vmatprep.subr.bf16.mxu0 0
        %905 = vmatpush1.bf16.msra.mxu0 0
        %906 = vmatprep.subr.bf16.mxu0 0
        %907 = vmatpush1.bf16.msra.mxu0 0
        %908 = vmatprep.subr.bf16.mxu0 0
        %909 = vmatpush1.bf16.msra.mxu0 0
        %910 = vmatprep.subr.bf16.mxu0 0
        %911 = vmatpush1.bf16.msra.mxu0 0
        %912 = vmatprep.subr.bf16.mxu0 0
        %913 = vmatpush1.bf16.msra.mxu0 0
        %914 = vmatprep.mubr.bf16.mxu0 0
        %915 = vmatmul.mubr.bf16.gmra.mrb[0].mxu0 %v880
        %v916 = vpop.f32.mrb[0].mxu0
        %v917 = vadd.f32 0.0, %v916
        %v918 = vpop.f32.mrb[0].mxu0
        %v919 = vpop.f32.mrb[0].mxu0
        %v920 = vadd.f32 0.0, %v919
        %v921 = vpop.f32.mrb[0].mxu0
        %922 = vdwg.mxu0
        %v925 = vunpack.c.l.b16 %v864
        %v926 = vunpack.c.l.b16 %v865
        %v927 = vpack.c.b16 %v926, %v925
        %v930 = vsel %vm678, %v862, 0
        %932 = vmatprep.subr.bf16.mxu0 0
        %933 = vmatpush1.bf16.msra.mxu0 %v927
        %934 = vmatprep.subr.bf16.mxu0 0
        %935 = vmatpush1.bf16.msra.mxu0 0
        %936 = vmatprep.subr.bf16.mxu0 0
        %937 = vmatpush1.bf16.msra.mxu0 0
        %938 = vmatprep.subr.bf16.mxu0 0
        %939 = vmatpush1.bf16.msra.mxu0 0
        %940 = vmatprep.subr.bf16.mxu0 0
        %941 = vmatpush1.bf16.msra.mxu0 0
        %942 = vmatprep.subr.bf16.mxu0 0
        %943 = vmatpush1.bf16.msra.mxu0 0
        %944 = vmatprep.subr.bf16.mxu0 0
        %945 = vmatpush1.bf16.msra.mxu0 0
        %946 = vmatprep.subr.bf16.mxu0 0
        %947 = vmatpush1.bf16.msra.mxu0 0
        %948 = vmatprep.subr.bf16.mxu0 0
        %949 = vmatpush1.bf16.msra.mxu0 0
        %950 = vmatprep.subr.bf16.mxu0 0
        %951 = vmatpush1.bf16.msra.mxu0 0
        %952 = vmatprep.subr.bf16.mxu0 0
        %953 = vmatpush1.bf16.msra.mxu0 0
        %954 = vmatprep.subr.bf16.mxu0 0
        %955 = vmatpush1.bf16.msra.mxu0 0
        %956 = vmatprep.subr.bf16.mxu0 0
        %957 = vmatpush1.bf16.msra.mxu0 0
        %958 = vmatprep.subr.bf16.mxu0 0
        %959 = vmatpush1.bf16.msra.mxu0 0
        %960 = vmatprep.subr.bf16.mxu0 0
        %961 = vmatpush1.bf16.msra.mxu0 0
        %962 = vmatprep.subr.bf16.mxu0 0
        %963 = vmatpush1.bf16.msra.mxu0 0
        %964 = vmatprep.mubr.bf16.mxu0 0
        %965 = vmatmul.mubr.bf16.gmra.mrb[0].mxu0 %v930
        %v966 = vpop.f32.mrb[0].mxu0
        %v967 = vadd.f32 %v917, %v966
        %v968 = vpop.f32.mrb[0].mxu0
        %v969 = vpop.f32.mrb[0].mxu0
        %v970 = vadd.f32 %v920, %v969
        %v971 = vpop.f32.mrb[0].mxu0
        %972 = vdwg.mxu0
        %v973 = vld [vmem:[%s11] sm:$0x1]
        %v975 = vlaneseq
        %v976 = vshrl.u32 %v975, 7
        %v977 = vsub.s32 0, %v976
        %v978 = vrot.slane %v973, %v977
        %v980 = vadd.f32 %v967, %v978
        %v981 = vadd.f32 %v970, %v978
        %v982 = vpack.c.bf16 %v981, %v980
        %v983 = vld [vmem:[%s12] sm:$0xf]
        %v984 = vld [vmem:[%s12 + $0x4] sm:$0xf]
        %v985 = vld [vmem:[%s12 + $0x8] sm:$0xf]
        %v986 = vld [vmem:[%s12 + $0xc] sm:$0xf]
        %v988 = vlaneseq
        %v989 = vshrl.u32 %v988, 7
        %v990 = vsub.s32 0, %v989
        %v991 = vrot.slane %v863, %v990
        %v997 = vunpack.c.l.b16 %v983
        %v998 = vunpack.c.l.b16 %v984
        %v999 = vunpack.c.l.b16 %v985
        %v1000 = vunpack.c.l.b16 %v986
        %v1001 = vpack.c.b16 %v998, %v997
        %v1002 = vpack.c.b16 %v1000, %v999
        %v1006 = vsel %vm749, %v982, 0
        %1008 = vmatprep.subr.bf16.mxu0 0
        %1009 = vmatpush1.bf16.msra.mxu0 %v1001
        %1010 = vmatprep.subr.bf16.mxu0 0
        %1011 = vmatpush1.bf16.msra.mxu0 %v1002
        %1012 = vmatprep.subr.bf16.mxu0 0
        %1013 = vmatpush1.bf16.msra.mxu0 0
        %1014 = vmatprep.subr.bf16.mxu0 0
        %1015 = vmatpush1.bf16.msra.mxu0 0
        %1016 = vmatprep.subr.bf16.mxu0 0
        %1017 = vmatpush1.bf16.msra.mxu0 0
        %1018 = vmatprep.subr.bf16.mxu0 0
        %1019 = vmatpush1.bf16.msra.mxu0 0
        %1020 = vmatprep.subr.bf16.mxu0 0
        %1021 = vmatpush1.bf16.msra.mxu0 0
        %1022 = vmatprep.subr.bf16.mxu0 0
        %1023 = vmatpush1.bf16.msra.mxu0 0
        %1024 = vmatprep.subr.bf16.mxu0 0
        %1025 = vmatpush1.bf16.msra.mxu0 0
        %1026 = vmatprep.subr.bf16.mxu0 0
        %1027 = vmatpush1.bf16.msra.mxu0 0
        %1028 = vmatprep.subr.bf16.mxu0 0
        %1029 = vmatpush1.bf16.msra.mxu0 0
        %1030 = vmatprep.subr.bf16.mxu0 0
        %1031 = vmatpush1.bf16.msra.mxu0 0
        %1032 = vmatprep.subr.bf16.mxu0 0
        %1033 = vmatpush1.bf16.msra.mxu0 0
        %1034 = vmatprep.subr.bf16.mxu0 0
        %1035 = vmatpush1.bf16.msra.mxu0 0
        %1036 = vmatprep.subr.bf16.mxu0 0
        %1037 = vmatpush1.bf16.msra.mxu0 0
        %1038 = vmatprep.subr.bf16.mxu0 0
        %1039 = vmatpush1.bf16.msra.mxu0 0
        %1040 = vmatprep.mubr.bf16.mxu0 0
        %1041 = vmatmul.mubr.bf16.gmra.mrb[0].mxu0 %v1006
        %v1042 = vpop.f32.mrb[0].mxu0
        %v1043 = vadd.f32 %v991, %v1042
        %v1044 = vpop.f32.mrb[0].mxu0
        %v1045 = vpop.f32.mrb[0].mxu0
        %v1046 = vadd.f32 %v991, %v1045
        %v1047 = vpop.f32.mrb[0].mxu0
        %1048 = vdwg.mxu0
        %v1049 = vsel %vm678, %v1043, -inf
        %1050 = vmax.xlane.f32.xlu0 %v1049
        %v1051 = vpop.xlane.xlu0 %1050
        %v1052 = vsel %vm678, %v1046, -inf
        %1053 = vmax.xlane.f32.xlu0 %v1052
        %v1054 = vpop.xlane.xlu0 %1053
        %v1055 = vsub.f32 %v1043, %v1051
        %v1056 = vsub.f32 %v1046, %v1054
        %v1057 = vmul.f32 %v1055, 1.442695
        %v1058 = vpow.pop %v1057
        %v1059 = vmul.f32 %v1056, 1.442695
        %v1060 = vpow.pop %v1059
        %v1061 = vsel %vm678, %v1058, 0.0
        %1062 = vadd.xlane.f32.xlu0 %v1061
        %v1063 = vpop.xlane.xlu0 %1062
        %v1064 = vsel %vm678, %v1060, 0.0
        %1065 = vadd.xlane.f32.xlu0 %v1064
        %v1066 = vpop.xlane.xlu0 %1065
        %v1067 = vpack.c.bf16 %v1060, %v1058
        %v1068 = vld [vmem:[%s13] sm:$0xf]
        %v1069 = vld [vmem:[%s13 + $0x4] sm:$0xf]
        %v1072 = vunpack.c.l.b16 %v1068
        %v1073 = vunpack.c.l.b16 %v1069
        %v1074 = vpack.c.b16 %v1073, %v1072
        %v1077 = vsel %vm678, %v1067, 0
        %1079 = vmatprep.subr.bf16.mxu0 0
        %1080 = vmatpush1.bf16.msra.mxu0 %v1074
        %1081 = vmatprep.subr.bf16.mxu0 0
        %1082 = vmatpush1.bf16.msra.mxu0 0
        %1083 = vmatprep.subr.bf16.mxu0 0
        %1084 = vmatpush1.bf16.msra.mxu0 0
        %1085 = vmatprep.subr.bf16.mxu0 0
        %1086 = vmatpush1.bf16.msra.mxu0 0
        %1087 = vmatprep.subr.bf16.mxu0 0
        %1088 = vmatpush1.bf16.msra.mxu0 0
        %1089 = vmatprep.subr.bf16.mxu0 0
        %1090 = vmatpush1.bf16.msra.mxu0 0
        %1091 = vmatprep.subr.bf16.mxu0 0
        %1092 = vmatpush1.bf16.msra.mxu0 0
        %1093 = vmatprep.subr.bf16.mxu0 0
        %1094 = vmatpush1.bf16.msra.mxu0 0
        %1095 = vmatprep.subr.bf16.mxu0 0
        %1096 = vmatpush1.bf16.msra.mxu0 0
        %1097 = vmatprep.subr.bf16.mxu0 0
        %1098 = vmatpush1.bf16.msra.mxu0 0
        %1099 = vmatprep.subr.bf16.mxu0 0
        %1100 = vmatpush1.bf16.msra.mxu0 0
        %1101 = vmatprep.subr.bf16.mxu0 0
        %1102 = vmatpush1.bf16.msra.mxu0 0
        %1103 = vmatprep.subr.bf16.mxu0 0
        %1104 = vmatpush1.bf16.msra.mxu0 0
        %1105 = vmatprep.subr.bf16.mxu0 0
        %1106 = vmatpush1.bf16.msra.mxu0 0
        %1107 = vmatprep.subr.bf16.mxu0 0
        %1108 = vmatpush1.bf16.msra.mxu0 0
        %1109 = vmatprep.subr.bf16.mxu0 0
        %1110 = vmatpush1.bf16.msra.mxu0 0
        %1111 = vmatprep.mubr.bf16.mxu0 0
        %1112 = vmatmul.mubr.bf16.gmra.mrb[0].mxu0 %v1077
        %v1113 = vpop.f32.mrb[0].mxu0
        %v1114 = vadd.f32 0.0, %v1113
        %v1115 = vpop.f32.mrb[0].mxu0
        %v1116 = vpop.f32.mrb[0].mxu0
        %v1117 = vadd.f32 0.0, %v1116
        %v1118 = vpop.f32.mrb[0].mxu0
        %1119 = vdwg.mxu0
        %v1120 = vrcp.pop %v1063
        %v1121 = vrcp.pop %v1066
        %v1122 = vmul.f32 %v1114, %v1120
        %v1123 = vmul.f32 %v1117, %v1121
        %v1124 = vpack.c.bf16 %v1123, %v1122
        %v1125 = vld [vmem:[%s14] sm:$0xf]
        %v1126 = vld [vmem:[%s14 + $0x4] sm:$0xf]
        %v1127 = vld [vmem:[%s14 + $0x8] sm:$0xf]
        %v1128 = vld [vmem:[%s14 + $0xc] sm:$0xf]
        %s1129 = scalar_lea.vmem %s9, 8
        %v1130 = vld [vmem:[%s1129] sm:$0xf]
        %v1131 = vld [vmem:[%s1129 + $0x4] sm:$0xf]
        %s1132 = scalar_lea.vmem %s10, 8
        %v1133 = vld [vmem:[%s1132] sm:$0xf]
        %v1134 = vld [vmem:[%s1132 + $0x4] sm:$0xf]
        %v1137 = vunpack.c.l.b16 %v1133
        %v1138 = vunpack.c.l.b16 %v1134
        %v1139 = vpack.c.b16 %v1138, %v1137
        %1141 = vmatprep.subr.bf16.mxu0 0
        %1142 = vmatpush1.bf16.msra.mxu0 %v1139
        %1143 = vmatprep.subr.bf16.mxu0 0
        %1144 = vmatpush1.bf16.msra.mxu0 0
        %1145 = vmatprep.subr.bf16.mxu0 0
        %1146 = vmatpush1.bf16.msra.mxu0 0
        %1147 = vmatprep.subr.bf16.mxu0 0
        %1148 = vmatpush1.bf16.msra.mxu0 0
        %1149 = vmatprep.subr.bf16.mxu0 0
        %1150 = vmatpush1.bf16.msra.mxu0 0
        %1151 = vmatprep.subr.bf16.mxu0 0
        %1152 = vmatpush1.bf16.msra.mxu0 0
        %1153 = vmatprep.subr.bf16.mxu0 0
        %1154 = vmatpush1.bf16.msra.mxu0 0
        %1155 = vmatprep.subr.bf16.mxu0 0
        %1156 = vmatpush1.bf16.msra.mxu0 0
        %1157 = vmatprep.subr.bf16.mxu0 0
        %1158 = vmatpush1.bf16.msra.mxu0 0
        %1159 = vmatprep.subr.bf16.mxu0 0
        %1160 = vmatpush1.bf16.msra.mxu0 0
        %1161 = vmatprep.subr.bf16.mxu0 0
        %1162 = vmatpush1.bf16.msra.mxu0 0
        %1163 = vmatprep.subr.bf16.mxu0 0
        %1164 = vmatpush1.bf16.msra.mxu0 0
        %1165 = vmatprep.subr.bf16.mxu0 0
        %1166 = vmatpush1.bf16.msra.mxu0 0
        %1167 = vmatprep.subr.bf16.mxu0 0
        %1168 = vmatpush1.bf16.msra.mxu0 0
        %1169 = vmatprep.subr.bf16.mxu0 0
        %1170 = vmatpush1.bf16.msra.mxu0 0
        %1171 = vmatprep.subr.bf16.mxu0 0
        %1172 = vmatpush1.bf16.msra.mxu0 0
        %1173 = vmatprep.mubr.bf16.mxu0 0
        %1174 = vmatmul.mubr.bf16.gmra.mrb[0].mxu0 %v880
        %v1175 = vpop.f32.mrb[0].mxu0
        %v1176 = vadd.f32 0.0, %v1175
        %v1177 = vpop.f32.mrb[0].mxu0
        %v1178 = vpop.f32.mrb[0].mxu0
        %v1179 = vadd.f32 0.0, %v1178
        %v1180 = vpop.f32.mrb[0].mxu0
        %1181 = vdwg.mxu0
        %v1184 = vunpack.c.l.b16 %v1130
        %v1185 = vunpack.c.l.b16 %v1131
        %v1186 = vpack.c.b16 %v1185, %v1184
        %1188 = vmatprep.subr.bf16.mxu0 0
        %1189 = vmatpush1.bf16.msra.mxu0 %v1186
        %1190 = vmatprep.subr.bf16.mxu0 0
        %1191 = vmatpush1.bf16.msra.mxu0 0
        %1192 = vmatprep.subr.bf16.mxu0 0
        %1193 = vmatpush1.bf16.msra.mxu0 0
        %1194 = vmatprep.subr.bf16.mxu0 0
        %1195 = vmatpush1.bf16.msra.mxu0 0
        %1196 = vmatprep.subr.bf16.mxu0 0
        %1197 = vmatpush1.bf16.msra.mxu0 0
        %1198 = vmatprep.subr.bf16.mxu0 0
        %1199 = vmatpush1.bf16.msra.mxu0 0
        %1200 = vmatprep.subr.bf16.mxu0 0
        %1201 = vmatpush1.bf16.msra.mxu0 0
        %1202 = vmatprep.subr.bf16.mxu0 0
        %1203 = vmatpush1.bf16.msra.mxu0 0
        %1204 = vmatprep.subr.bf16.mxu0 0
        %1205 = vmatpush1.bf16.msra.mxu0 0
        %1206 = vmatprep.subr.bf16.mxu0 0
        %1207 = vmatpush1.bf16.msra.mxu0 0
        %1208 = vmatprep.subr.bf16.mxu0 0
        %1209 = vmatpush1.bf16.msra.mxu0 0
        %1210 = vmatprep.subr.bf16.mxu0 0
        %1211 = vmatpush1.bf16.msra.mxu0 0
        %1212 = vmatprep.subr.bf16.mxu0 0
        %1213 = vmatpush1.bf16.msra.mxu0 0
        %1214 = vmatprep.subr.bf16.mxu0 0
        %1215 = vmatpush1.bf16.msra.mxu0 0
        %1216 = vmatprep.subr.bf16.mxu0 0
        %1217 = vmatpush1.bf16.msra.mxu0 0
        %1218 = vmatprep.subr.bf16.mxu0 0
        %1219 = vmatpush1.bf16.msra.mxu0 0
        %1220 = vmatprep.mubr.bf16.mxu0 0
        %1221 = vmatmul.mubr.bf16.gmra.mrb[0].mxu0 %v930
        %v1222 = vpop.f32.mrb[0].mxu0
        %v1223 = vadd.f32 %v1176, %v1222
        %v1224 = vpop.f32.mrb[0].mxu0
        %v1225 = vpop.f32.mrb[0].mxu0
        %v1226 = vadd.f32 %v1179, %v1225
        %v1227 = vpop.f32.mrb[0].mxu0
        %1228 = vdwg.mxu0
        %s1229 = scalar_lea.vmem %s11, 1
        %v1230 = vld [vmem:[%s1229] sm:$0x1]
        %v1232 = vlaneseq
        %v1233 = vshrl.u32 %v1232, 7
        %v1234 = vsub.s32 0, %v1233
        %v1235 = vrot.slane %v1230, %v1234
        %v1237 = vadd.f32 %v1223, %v1235
        %v1238 = vadd.f32 %v1226, %v1235
        %v1239 = vpack.c.bf16 %v1238, %v1237
        %s1240 = scalar_lea.vmem %s12, 16
        %v1241 = vld [vmem:[%s1240] sm:$0xf]
        %v1242 = vld [vmem:[%s1240 + $0x4] sm:$0xf]
        %v1243 = vld [vmem:[%s1240 + $0x8] sm:$0xf]
        %v1244 = vld [vmem:[%s1240 + $0xc] sm:$0xf]
        %v1249 = vunpack.c.l.b16 %v1241
        %v1250 = vunpack.c.l.b16 %v1242
        %v1251 = vunpack.c.l.b16 %v1243
        %v1252 = vunpack.c.l.b16 %v1244
        %v1253 = vpack.c.b16 %v1250, %v1249
        %v1254 = vpack.c.b16 %v1252, %v1251
        %v1258 = vsel %vm749, %v1239, 0
        %1260 = vmatprep.subr.bf16.mxu0 0
        %1261 = vmatpush1.bf16.msra.mxu0 %v1253
        %1262 = vmatprep.subr.bf16.mxu0 0
        %1263 = vmatpush1.bf16.msra.mxu0 %v1254
        %1264 = vmatprep.subr.bf16.mxu0 0
        %1265 = vmatpush1.bf16.msra.mxu0 0
        %1266 = vmatprep.subr.bf16.mxu0 0
        %1267 = vmatpush1.bf16.msra.mxu0 0
        %1268 = vmatprep.subr.bf16.mxu0 0
        %1269 = vmatpush1.bf16.msra.mxu0 0
        %1270 = vmatprep.subr.bf16.mxu0 0
        %1271 = vmatpush1.bf16.msra.mxu0 0
        %1272 = vmatprep.subr.bf16.mxu0 0
        %1273 = vmatpush1.bf16.msra.mxu0 0
        %1274 = vmatprep.subr.bf16.mxu0 0
        %1275 = vmatpush1.bf16.msra.mxu0 0
        %1276 = vmatprep.subr.bf16.mxu0 0
        %1277 = vmatpush1.bf16.msra.mxu0 0
        %1278 = vmatprep.subr.bf16.mxu0 0
        %1279 = vmatpush1.bf16.msra.mxu0 0
        %1280 = vmatprep.subr.bf16.mxu0 0
        %1281 = vmatpush1.bf16.msra.mxu0 0
        %1282 = vmatprep.subr.bf16.mxu0 0
        %1283 = vmatpush1.bf16.msra.mxu0 0
        %1284 = vmatprep.subr.bf16.mxu0 0
        %1285 = vmatpush1.bf16.msra.mxu0 0
        %1286 = vmatprep.subr.bf16.mxu0 0
        %1287 = vmatpush1.bf16.msra.mxu0 0
        %1288 = vmatprep.subr.bf16.mxu0 0
        %1289 = vmatpush1.bf16.msra.mxu0 0
        %1290 = vmatprep.subr.bf16.mxu0 0
        %1291 = vmatpush1.bf16.msra.mxu0 0
        %1292 = vmatprep.mubr.bf16.mxu0 0
        %1293 = vmatmul.mubr.bf16.gmra.mrb[0].mxu0 %v1258
        %v1294 = vpop.f32.mrb[0].mxu0
        %v1295 = vadd.f32 %v991, %v1294
        %v1296 = vpop.f32.mrb[0].mxu0
        %v1297 = vpop.f32.mrb[0].mxu0
        %v1298 = vadd.f32 %v991, %v1297
        %v1299 = vpop.f32.mrb[0].mxu0
        %1300 = vdwg.mxu0
        %v1301 = vsel %vm678, %v1295, -inf
        %1302 = vmax.xlane.f32.xlu0 %v1301
        %v1303 = vpop.xlane.xlu0 %1302
        %v1304 = vsel %vm678, %v1298, -inf
        %1305 = vmax.xlane.f32.xlu0 %v1304
        %v1306 = vpop.xlane.xlu0 %1305
        %v1307 = vsub.f32 %v1295, %v1303
        %v1308 = vsub.f32 %v1298, %v1306
        %v1309 = vmul.f32 %v1307, 1.442695
        %v1310 = vpow.pop %v1309
        %v1311 = vmul.f32 %v1308, 1.442695
        %v1312 = vpow.pop %v1311
        %v1313 = vsel %vm678, %v1310, 0.0
        %1314 = vadd.xlane.f32.xlu0 %v1313
        %v1315 = vpop.xlane.xlu0 %1314
        %v1316 = vsel %vm678, %v1312, 0.0
        %1317 = vadd.xlane.f32.xlu0 %v1316
        %v1318 = vpop.xlane.xlu0 %1317
        %v1319 = vpack.c.bf16 %v1312, %v1310
        %s1320 = scalar_lea.vmem %s13, 8
        %v1321 = vld [vmem:[%s1320] sm:$0xf]
        %v1322 = vld [vmem:[%s1320 + $0x4] sm:$0xf]
        %v1325 = vunpack.c.l.b16 %v1321
        %v1326 = vunpack.c.l.b16 %v1322
        %v1327 = vpack.c.b16 %v1326, %v1325
        %v1330 = vsel %vm678, %v1319, 0
        %1332 = vmatprep.subr.bf16.mxu0 0
        %1333 = vmatpush1.bf16.msra.mxu0 %v1327
        %1334 = vmatprep.subr.bf16.mxu0 0
        %1335 = vmatpush1.bf16.msra.mxu0 0
        %1336 = vmatprep.subr.bf16.mxu0 0
        %1337 = vmatpush1.bf16.msra.mxu0 0
        %1338 = vmatprep.subr.bf16.mxu0 0
        %1339 = vmatpush1.bf16.msra.mxu0 0
        %1340 = vmatprep.subr.bf16.mxu0 0
        %1341 = vmatpush1.bf16.msra.mxu0 0
        %1342 = vmatprep.subr.bf16.mxu0 0
        %1343 = vmatpush1.bf16.msra.mxu0 0
        %1344 = vmatprep.subr.bf16.mxu0 0
        %1345 = vmatpush1.bf16.msra.mxu0 0
        %1346 = vmatprep.subr.bf16.mxu0 0
        %1347 = vmatpush1.bf16.msra.mxu0 0
        %1348 = vmatprep.subr.bf16.mxu0 0
        %1349 = vmatpush1.bf16.msra.mxu0 0
        %1350 = vmatprep.subr.bf16.mxu0 0
        %1351 = vmatpush1.bf16.msra.mxu0 0
        %1352 = vmatprep.subr.bf16.mxu0 0
        %1353 = vmatpush1.bf16.msra.mxu0 0
        %1354 = vmatprep.subr.bf16.mxu0 0
        %1355 = vmatpush1.bf16.msra.mxu0 0
        %1356 = vmatprep.subr.bf16.mxu0 0
        %1357 = vmatpush1.bf16.msra.mxu0 0
        %1358 = vmatprep.subr.bf16.mxu0 0
        %1359 = vmatpush1.bf16.msra.mxu0 0
        %1360 = vmatprep.subr.bf16.mxu0 0
        %1361 = vmatpush1.bf16.msra.mxu0 0
        %1362 = vmatprep.subr.bf16.mxu0 0
        %1363 = vmatpush1.bf16.msra.mxu0 0
        %1364 = vmatprep.mubr.bf16.mxu0 0
        %1365 = vmatmul.mubr.bf16.gmra.mrb[0].mxu0 %v1330
        %v1366 = vpop.f32.mrb[0].mxu0
        %v1367 = vadd.f32 0.0, %v1366
        %v1368 = vpop.f32.mrb[0].mxu0
        %v1369 = vpop.f32.mrb[0].mxu0
        %v1370 = vadd.f32 0.0, %v1369
        %v1371 = vpop.f32.mrb[0].mxu0
        %1372 = vdwg.mxu0
        %v1373 = vrcp.pop %v1315
        %v1374 = vrcp.pop %v1318
        %v1375 = vmul.f32 %v1367, %v1373
        %v1376 = vmul.f32 %v1370, %v1374
        %v1377 = vpack.c.bf16 %v1376, %v1375
        %s1378 = scalar_lea.vmem %s14, 16
        %v1379 = vld [vmem:[%s1378] sm:$0xf]
        %v1380 = vld [vmem:[%s1378 + $0x4] sm:$0xf]
        %v1381 = vld [vmem:[%s1378 + $0x8] sm:$0xf]
        %v1382 = vld [vmem:[%s1378 + $0xc] sm:$0xf]
        %v1387 = vunpack.c.l.b16 %v1379
        %v1388 = vunpack.c.l.b16 %v1380
        %v1389 = vunpack.c.l.b16 %v1381
        %v1390 = vunpack.c.l.b16 %v1382
        %v1391 = vpack.c.b16 %v1388, %v1387
        %v1392 = vpack.c.b16 %v1390, %v1389
        %v1396 = vsel %vm749, %v1377, 0
        %1398 = vmatprep.subr.bf16.mxu0 0
        %1399 = vmatpush1.bf16.msra.mxu0 %v1391
        %1400 = vmatprep.subr.bf16.mxu0 0
        %1401 = vmatpush1.bf16.msra.mxu0 %v1392
        %1402 = vmatprep.subr.bf16.mxu0 0
        %1403 = vmatpush1.bf16.msra.mxu0 0
        %1404 = vmatprep.subr.bf16.mxu0 0
        %1405 = vmatpush1.bf16.msra.mxu0 0
        %1406 = vmatprep.subr.bf16.mxu0 0
        %1407 = vmatpush1.bf16.msra.mxu0 0
        %1408 = vmatprep.subr.bf16.mxu0 0
        %1409 = vmatpush1.bf16.msra.mxu0 0
        %1410 = vmatprep.subr.bf16.mxu0 0
        %1411 = vmatpush1.bf16.msra.mxu0 0
        %1412 = vmatprep.subr.bf16.mxu0 0
        %1413 = vmatpush1.bf16.msra.mxu0 0
        %1414 = vmatprep.subr.bf16.mxu0 0
        %1415 = vmatpush1.bf16.msra.mxu0 0
        %1416 = vmatprep.subr.bf16.mxu0 0
        %1417 = vmatpush1.bf16.msra.mxu0 0
        %1418 = vmatprep.subr.bf16.mxu0 0
        %1419 = vmatpush1.bf16.msra.mxu0 0
        %1420 = vmatprep.subr.bf16.mxu0 0
        %1421 = vmatpush1.bf16.msra.mxu0 0
        %1422 = vmatprep.subr.bf16.mxu0 0
        %1423 = vmatpush1.bf16.msra.mxu0 0
        %1424 = vmatprep.subr.bf16.mxu0 0
        %1425 = vmatpush1.bf16.msra.mxu0 0
        %1426 = vmatprep.subr.bf16.mxu0 0
        %1427 = vmatpush1.bf16.msra.mxu0 0
        %1428 = vmatprep.subr.bf16.mxu0 0
        %1429 = vmatpush1.bf16.msra.mxu0 0
        %1430 = vmatprep.mubr.bf16.mxu0 0
        %1431 = vmatmul.mubr.bf16.gmra.mrb[0].mxu0 %v1396
        %v1432 = vpop.f32.mrb[0].mxu0
        %v1433 = vadd.f32 0.0, %v1432
        %v1434 = vpop.f32.mrb[0].mxu0
        %v1435 = vpop.f32.mrb[0].mxu0
        %v1436 = vadd.f32 0.0, %v1435
        %v1437 = vpop.f32.mrb[0].mxu0
        %1438 = vdwg.mxu0
        %v1443 = vunpack.c.l.b16 %v1125
        %v1444 = vunpack.c.l.b16 %v1126
        %v1445 = vunpack.c.l.b16 %v1127
        %v1446 = vunpack.c.l.b16 %v1128
        %v1447 = vpack.c.b16 %v1444, %v1443
        %v1448 = vpack.c.b16 %v1446, %v1445
        %v1452 = vsel %vm749, %v1124, 0
        %1454 = vmatprep.subr.bf16.mxu0 0
        %1455 = vmatpush1.bf16.msra.mxu0 %v1447
        %1456 = vmatprep.subr.bf16.mxu0 0
        %1457 = vmatpush1.bf16.msra.mxu0 %v1448
        %1458 = vmatprep.subr.bf16.mxu0 0
        %1459 = vmatpush1.bf16.msra.mxu0 0
        %1460 = vmatprep.subr.bf16.mxu0 0
        %1461 = vmatpush1.bf16.msra.mxu0 0
        %1462 = vmatprep.subr.bf16.mxu0 0
        %1463 = vmatpush1.bf16.msra.mxu0 0
        %1464 = vmatprep.subr.bf16.mxu0 0
        %1465 = vmatpush1.bf16.msra.mxu0 0
        %1466 = vmatprep.subr.bf16.mxu0 0
        %1467 = vmatpush1.bf16.msra.mxu0 0
        %1468 = vmatprep.subr.bf16.mxu0 0
        %1469 = vmatpush1.bf16.msra.mxu0 0
        %1470 = vmatprep.subr.bf16.mxu0 0
        %1471 = vmatpush1.bf16.msra.mxu0 0
        %1472 = vmatprep.subr.bf16.mxu0 0
        %1473 = vmatpush1.bf16.msra.mxu0 0
        %1474 = vmatprep.subr.bf16.mxu0 0
        %1475 = vmatpush1.bf16.msra.mxu0 0
        %1476 = vmatprep.subr.bf16.mxu0 0
        %1477 = vmatpush1.bf16.msra.mxu0 0
        %1478 = vmatprep.subr.bf16.mxu0 0
        %1479 = vmatpush1.bf16.msra.mxu0 0
        %1480 = vmatprep.subr.bf16.mxu0 0
        %1481 = vmatpush1.bf16.msra.mxu0 0
        %1482 = vmatprep.subr.bf16.mxu0 0
        %1483 = vmatpush1.bf16.msra.mxu0 0
        %1484 = vmatprep.subr.bf16.mxu0 0
        %1485 = vmatpush1.bf16.msra.mxu0 0
        %1486 = vmatprep.mubr.bf16.mxu0 0
        %1487 = vmatmul.mubr.bf16.gmra.mrb[0].mxu0 %v1452
        %v1488 = vpop.f32.mrb[0].mxu0
        %v1489 = vadd.f32 %v1433, %v1488
        %v1490 = vpop.f32.mrb[0].mxu0
        %v1491 = vpop.f32.mrb[0].mxu0
        %v1492 = vadd.f32 %v1436, %v1491
        %v1493 = vpop.f32.mrb[0].mxu0
        %1494 = vdwg.mxu0
        %v1495 = vld [vmem:[%s15] sm:$0x1]
        %v1497 = vlaneseq
        %v1498 = vshrl.u32 %v1497, 7
        %v1499 = vsub.s32 0, %v1498
        %v1500 = vrot.slane %v1495, %v1499
        %v1502 = vadd.f32 %v1489, %v1500
        %v1503 = vadd.f32 %v1492, %v1500
        %v1504 = vmax.f32 %v1502, 0.0
        %v1505 = vmax.f32 %v1503, 0.0
        %v1506 = vpack.c.bf16 %v1505, %v1504
        %v1507 = vld [vmem:[%s16] sm:$0xf]
        %v1508 = vld [vmem:[%s16 + $0x4] sm:$0xf]
        %v1509 = vld [vmem:[%s16 + $0x8] sm:$0xf]
        %v1510 = vld [vmem:[%s16 + $0xc] sm:$0xf]
        %v1511 = vld [vmem:[%s16 + $0x10] sm:$0xf]
        %v1512 = vld [vmem:[%s16 + $0x14] sm:$0xf]
        %v1513 = vld [vmem:[%s16 + $0x18] sm:$0xf]
        %v1514 = vld [vmem:[%s16 + $0x1c] sm:$0xf]
        %v1515 = vld [vmem:[%s17] sm:$0x1]
        %v1517 = vlaneseq
        %v1518 = vshrl.u32 %v1517, 7
        %v1519 = vsub.s32 0, %v1518
        %v1520 = vrot.slane %v1515, %v1519
        %v1530 = vunpack.c.l.b16 %v1507
        %v1531 = vunpack.c.l.b16 %v1508
        %v1532 = vunpack.c.l.b16 %v1509
        %v1533 = vunpack.c.l.b16 %v1510
        %v1534 = vunpack.c.l.b16 %v1511
        %v1535 = vunpack.c.l.b16 %v1512
        %v1536 = vunpack.c.l.b16 %v1513
        %v1537 = vunpack.c.l.b16 %v1514
        %v1538 = vpack.c.b16 %v1531, %v1530
        %v1539 = vpack.c.b16 %v1533, %v1532
        %v1540 = vpack.c.b16 %v1535, %v1534
        %v1541 = vpack.c.b16 %v1537, %v1536
        %vm1546 = vcmask 523264
        %v1548 = vsel %vm1546, %v1506, 0
        %1550 = vmatprep.subr.bf16.mxu0 0
        %1551 = vmatpush1.bf16.msra.mxu0 %v1538
        %1552 = vmatprep.subr.bf16.mxu0 0
        %1553 = vmatpush1.bf16.msra.mxu0 %v1539
        %1554 = vmatprep.subr.bf16.mxu0 0
        %1555 = vmatpush1.bf16.msra.mxu0 %v1540
        %1556 = vmatprep.subr.bf16.mxu0 0
        %1557 = vmatpush1.bf16.msra.mxu0 %v1541
        %1558 = vmatprep.subr.bf16.mxu0 0
        %1559 = vmatpush1.bf16.msra.mxu0 0
        %1560 = vmatprep.subr.bf16.mxu0 0
        %1561 = vmatpush1.bf16.msra.mxu0 0
        %1562 = vmatprep.subr.bf16.mxu0 0
        %1563 = vmatpush1.bf16.msra.mxu0 0
        %1564 = vmatprep.subr.bf16.mxu0 0
        %1565 = vmatpush1.bf16.msra.mxu0 0
        %1566 = vmatprep.subr.bf16.mxu0 0
        %1567 = vmatpush1.bf16.msra.mxu0 0
        %1568 = vmatprep.subr.bf16.mxu0 0
        %1569 = vmatpush1.bf16.msra.mxu0 0
        %1570 = vmatprep.subr.bf16.mxu0 0
        %1571 = vmatpush1.bf16.msra.mxu0 0
        %1572 = vmatprep.subr.bf16.mxu0 0
        %1573 = vmatpush1.bf16.msra.mxu0 0
        %1574 = vmatprep.subr.bf16.mxu0 0
        %1575 = vmatpush1.bf16.msra.mxu0 0
        %1576 = vmatprep.subr.bf16.mxu0 0
        %1577 = vmatpush1.bf16.msra.mxu0 0
        %1578 = vmatprep.subr.bf16.mxu0 0
        %1579 = vmatpush1.bf16.msra.mxu0 0
        %1580 = vmatprep.subr.bf16.mxu0 0
        %1581 = vmatpush1.bf16.msra.mxu0 0
        %1582 = vmatprep.mubr.bf16.mxu0 0
        %1583 = vmatmul.mubr.bf16.gmra.mrb[0].mxu0 %v1548
        %v1584 = vpop.f32.mrb[0].mxu0
        %v1585 = vadd.f32 %v1520, %v1584
        %v1586 = vpop.f32.mrb[0].mxu0
        %v1587 = vpop.f32.mrb[0].mxu0
        %v1588 = vadd.f32 %v1520, %v1587
        %v1589 = vpop.f32.mrb[0].mxu0
        %1590 = vdwg.mxu0
        %v1591 = vmax.f32 %v1585, 0.0
        %v1592 = vmax.f32 %v1588, 0.0
        %v1593 = vpack.c.bf16 %v1592, %v1591
        %v1594 = vld [vmem:[%s18] sm:$0xf]
        %v1595 = vld [vmem:[%s18 + $0x4] sm:$0xf]
        %v1596 = vld [vmem:[%s18 + $0x8] sm:$0xf]
        %v1597 = vld [vmem:[%s18 + $0xc] sm:$0xf]
        %v1598 = vld [vmem:[%s19] sm:$0x1]
        %v1600 = vlaneseq
        %v1601 = vshrl.u32 %v1600, 7
        %v1602 = vsub.s32 0, %v1601
        %v1603 = vrot.slane %v1598, %v1602
        %v1609 = vunpack.c.l.b16 %v1594
        %v1610 = vunpack.c.l.b16 %v1595
        %v1611 = vunpack.c.l.b16 %v1596
        %v1612 = vunpack.c.l.b16 %v1597
        %v1613 = vpack.c.b16 %v1610, %v1609
        %v1614 = vpack.c.b16 %v1612, %v1611
        %v1618 = vsel %vm749, %v1593, 0
        %1620 = vmatprep.subr.bf16.mxu0 0
        %1621 = vmatpush1.bf16.msra.mxu0 %v1613
        %1622 = vmatprep.subr.bf16.mxu0 0
        %1623 = vmatpush1.bf16.msra.mxu0 %v1614
        %1624 = vmatprep.subr.bf16.mxu0 0
        %1625 = vmatpush1.bf16.msra.mxu0 0
        %1626 = vmatprep.subr.bf16.mxu0 0
        %1627 = vmatpush1.bf16.msra.mxu0 0
        %1628 = vmatprep.subr.bf16.mxu0 0
        %1629 = vmatpush1.bf16.msra.mxu0 0
        %1630 = vmatprep.subr.bf16.mxu0 0
        %1631 = vmatpush1.bf16.msra.mxu0 0
        %1632 = vmatprep.subr.bf16.mxu0 0
        %1633 = vmatpush1.bf16.msra.mxu0 0
        %1634 = vmatprep.subr.bf16.mxu0 0
        %1635 = vmatpush1.bf16.msra.mxu0 0
        %1636 = vmatprep.subr.bf16.mxu0 0
        %1637 = vmatpush1.bf16.msra.mxu0 0
        %1638 = vmatprep.subr.bf16.mxu0 0
        %1639 = vmatpush1.bf16.msra.mxu0 0
        %1640 = vmatprep.subr.bf16.mxu0 0
        %1641 = vmatpush1.bf16.msra.mxu0 0
        %1642 = vmatprep.subr.bf16.mxu0 0
        %1643 = vmatpush1.bf16.msra.mxu0 0
        %1644 = vmatprep.subr.bf16.mxu0 0
        %1645 = vmatpush1.bf16.msra.mxu0 0
        %1646 = vmatprep.subr.bf16.mxu0 0
        %1647 = vmatpush1.bf16.msra.mxu0 0
        %1648 = vmatprep.subr.bf16.mxu0 0
        %1649 = vmatpush1.bf16.msra.mxu0 0
        %1650 = vmatprep.subr.bf16.mxu0 0
        %1651 = vmatpush1.bf16.msra.mxu0 0
        %1652 = vmatprep.mubr.bf16.mxu0 0
        %1653 = vmatmul.mubr.bf16.gmra.mrb[0].mxu0 %v1618
        %v1654 = vpop.f32.mrb[0].mxu0
        %v1655 = vadd.f32 %v1603, %v1654
        %v1656 = vpop.f32.mrb[0].mxu0
        %v1657 = vpop.f32.mrb[0].mxu0
        %v1658 = vadd.f32 %v1603, %v1657
        %v1659 = vpop.f32.mrb[0].mxu0
        %1660 = vdwg.mxu0
        %1661 = vst [vmem:[%s639] sm:$0xff] %v1655
        %1662 = vst [vmem:[%s639 + $0x8] sm:$0xff] %v1658
        %s1663 = sand.u32 %s472, 1
        %s1664 = scalar_lea.sflag [#allocation3], %s1663
        %s1665 = sand.u32 %s472, 1
        %s1666 = smul.addr %s1665, 16
        %s1667 = scalar_lea.vmem [#allocation2], %s1666
        // Predicated region
        $region101: #{tpu_custom_call.1} parent=99 // pred_check
          %p1668 = pneg %p482
        $region102: #{tpu_custom_call.1} parent=99 // pred_check_branch
          %1670 = sbr.rel (%p1668) target = $region104
        $region103: #{tpu_custom_call.1} parent=99 // pred_region
          %s1671 = smul.u32 2, %s34
          %s1673 = ssub.s32 256, 256
          %1674 = vsyncadd %s1664, %s1673
          %s1675 = smul.addr %s1671, 128
          %s1676 = scalar_lea.hbm %s20, %s1675
          %s1677 = sshll.u32 %s1667, 4
          %s1678 = int_to_ptr.vmem [resolvable:$true] %s1677
          %1683 = dma.vmem_to_hbm [thread:$0]  %s1678, 256, %s1676, %s1664, 128, 128, 8
        $region104: #{tpu_custom_call.1} parent=99 // pred_fallthru
          _
      $region100: #{tpu_custom_call.1} parent=5 // pred_fallthru
        _
      %p1684 = scmp.le.s32.totalorder 2, %s29
      // Predicated region
      $region105: #{tpu_custom_call.1} parent=5 // pred_check
        %p1685 = pneg %p1684
      $region106: #{tpu_custom_call.1} parent=5 // pred_check_branch
        %1687 = sbr.rel (%p1685) target = $region108
      $region107: #{tpu_custom_call.1} parent=5 // pred_region
        %s1688 = ssub.s32 %s29, 2
        // Predicated region
        $region109: #{tpu_custom_call.1} parent=107 // pred_check
          %p1689 = pneg %p488
        $region110: #{tpu_custom_call.1} parent=107 // pred_check_branch
          %1691 = sbr.rel (%p1689) target = $region112
        $region111: #{tpu_custom_call.1} parent=107 // pred_region
          %s1692 = sand.u32 %s473, 1
          %s1693 = scalar_lea.sflag [#allocation3], %s1692
          %s1694 = sand.u32 %s473, 1
          %s1695 = smul.addr %s1694, 16
          %s1696 = scalar_lea.vmem [#allocation2], %s1695
          %1697 = dma.done %s1693, 256
        $region112: #{tpu_custom_call.1} parent=107 // pred_fallthru
          _
      $region108: #{tpu_custom_call.1} parent=5 // pred_fallthru
        _
    $region6: #{tpu_custom_call.1} parent=1 // loop_footer
      %s33 = sadd.s32 1, %s29
    $region7: #{tpu_custom_call.1} parent=1 // loop_footer_branch
      %28 = sbr.rel target = $region3
    $region8: #{tpu_custom_call.1} parent=1 // loop_exit
      _
    %1698 = vsyncpa [#allocation3], 1
    %s1699 = scalar_lea.sflag [#allocation3], 1
    %1700 = vsyncpa %s1699, 1

// kernel: tpu_custom_call.1
$region0: #{tpu_custom_call.1}
  #allocation0 [shape = 'u32[]', space=smem, size = 0x4, offset = 0x4, fixed_abs, tag = 'smem constant byte address 0x4 - core index']
  #allocation1 [shape = 'u32[144,128]{1,0:T(1,128)}', space=vmem, size = 0x12000, scoped, tag = 'internal scratch']
  %s0 = inlined_call_operand.vmem [shape: bf16[32,16], index: 0, kind: input, shape index: {}]
  %s1 = inlined_call_operand.vmem [shape: bf16[32,16], index: 1, kind: input, shape index: {}]
  %s2 = inlined_call_operand.vmem [shape: f32[1,16], index: 2, kind: input, shape index: {}]
  %s3 = inlined_call_operand.vmem [shape: bf16[16,32], index: 3, kind: input, shape index: {}]
  %s4 = inlined_call_operand.vmem [shape: f32[1,32], index: 4, kind: input, shape index: {}]
  %s5 = inlined_call_operand.vmem [shape: bf16[32,32], index: 5, kind: input, shape index: {}]
  %s6 = inlined_call_operand.vmem [shape: f32[1,32], index: 6, kind: input, shape index: {}]
  %s7 = inlined_call_operand.vmem [shape: bf16[32,16], index: 7, kind: input, shape index: {}]
  %s8 = inlined_call_operand.vmem [shape: f32[1,16], index: 8, kind: input, shape index: {}]
  %s9 = inlined_call_operand.vmem [shape: bf16[2,16,32], index: 9, kind: input, shape index: {}]
  %s10 = inlined_call_operand.vmem [shape: bf16[2,16,32], index: 10, kind: input, shape index: {}]
  %s11 = inlined_call_operand.vmem [shape: f32[2,1,32], index: 11, kind: input, shape index: {}]
  %s12 = inlined_call_operand.vmem [shape: bf16[2,32,16], index: 12, kind: input, shape index: {}]
  %s13 = inlined_call_operand.vmem [shape: bf16[2,16,32], index: 13, kind: input, shape index: {}]
  %s14 = inlined_call_operand.vmem [shape: bf16[2,32,64], index: 14, kind: input, shape index: {}]
  %s15 = inlined_call_operand.vmem [shape: f32[1,64], index: 15, kind: input, shape index: {}]
  %s16 = inlined_call_operand.vmem [shape: bf16[64,32], index: 16, kind: input, shape index: {}]
  %s17 = inlined_call_operand.vmem [shape: f32[1,32], index: 17, kind: input, shape index: {}]
  %s18 = inlined_call_operand.vmem [shape: bf16[32,128], index: 18, kind: input, shape index: {}]
  %s19 = inlined_call_operand.vmem [shape: f32[1,128], index: 19, kind: input, shape index: {}]
  %s20 = inlined_call_operand.hbm [shape: f32[32,128], index: 20, kind: output, shape index: {}]
  %s21 = sld [smem:[#allocation0]]
  $region113: #{tpu_custom_call.1} parent=0
    _
  %s23 = ssub.s32 1, %s21
  %s24 = scalar_select 0, %s23, %s21
  $region1: #{tpu_custom_call.1} parent=0
    #allocation2 [shape = 'u8[16384]{0}', space=vmem, size = 0x4000, scoped, tag = 'output window, operand 0']
    #allocation3 [shape = 's32[2]{0}', space=sflag, size = 0x8, scoped, tag = 'scoped memory for tpu_custom_call.1']
    %25 = vsyncpa [#allocation3], 0
    %s26 = scalar_lea.sflag [#allocation3], 1
    %27 = vsyncpa %s26, 0
    loop: start=0, step=1, limit=4
    $region2: #{tpu_custom_call.1} parent=1 // loop_pre_header
      _
    $region3: #{tpu_custom_call.1} parent=1 // loop_header
      %s29 = sphi 0, %s33
      %p30 = scmp.ge.s32.totalorder %s29, 4
      %s39 = sphi 0, %s41
      %s42 = sphi 0, %s39
      %s43 = sphi 0, %s42
      %s59 = sphi 0, %s43
      %s65 = sphi 0, %s67
      %s68 = sphi 0, %s65
      %s69 = sphi 0, %s68
      %s85 = sphi 0, %s69
      %s89 = sphi 0, %s89
      %s91 = sphi 0, %s89
      %s92 = sphi 0, %s91
      %s106 = sphi 0, %s92
      %s110 = sphi 0, %s110
      %s112 = sphi 0, %s110
      %s113 = sphi 0, %s112
      %s127 = sphi 0, %s113
      %s131 = sphi 0, %s131
      %s133 = sphi 0, %s131
      %s134 = sphi 0, %s133
      %s148 = sphi 0, %s134
      %s152 = sphi 0, %s152
      %s154 = sphi 0, %s152
      %s155 = sphi 0, %s154
      %s169 = sphi 0, %s155
      %s173 = sphi 0, %s173
      %s175 = sphi 0, %s173
      %s176 = sphi 0, %s175
      %s190 = sphi 0, %s176
      %s194 = sphi 0, %s194
      %s196 = sphi 0, %s194
      %s197 = sphi 0, %s196
      %s211 = sphi 0, %s197
      %s215 = sphi 0, %s215
      %s217 = sphi 0, %s215
      %s218 = sphi 0, %s217
      %s232 = sphi 0, %s218
      %s236 = sphi 0, %s236
      %s238 = sphi 0, %s236
      %s239 = sphi 0, %s238
      %s253 = sphi 0, %s239
      %s257 = sphi 0, %s257
      %s259 = sphi 0, %s257
      %s260 = sphi 0, %s259
      %s274 = sphi 0, %s260
      %s278 = sphi 0, %s278
      %s280 = sphi 0, %s278
      %s281 = sphi 0, %s280
      %s295 = sphi 0, %s281
      %s299 = sphi 0, %s299
      %s301 = sphi 0, %s299
      %s302 = sphi 0, %s301
      %s316 = sphi 0, %s302
      %s320 = sphi 0, %s320
      %s322 = sphi 0, %s320
      %s323 = sphi 0, %s322
      %s337 = sphi 0, %s323
      %s341 = sphi 0, %s341
      %s343 = sphi 0, %s341
      %s344 = sphi 0, %s343
      %s358 = sphi 0, %s344
      %s362 = sphi 0, %s362
      %s364 = sphi 0, %s362
      %s365 = sphi 0, %s364
      %s379 = sphi 0, %s365
      %s383 = sphi 0, %s383
      %s385 = sphi 0, %s383
      %s386 = sphi 0, %s385
      %s400 = sphi 0, %s386
      %s404 = sphi 0, %s404
      %s406 = sphi 0, %s404
      %s407 = sphi 0, %s406
      %s421 = sphi 0, %s407
      %s425 = sphi 0, %s425
      %s427 = sphi 0, %s425
      %s428 = sphi 0, %s427
      %s442 = sphi 0, %s428
      %s446 = sphi 0, %s446
      %s448 = sphi 0, %s446
      %s449 = sphi 0, %s448
      %s463 = sphi 0, %s449
      %s469 = sphi 0, %s471
      %s472 = sphi 0, %s469
      %s473 = sphi 0, %s472
      %s489 = sphi 0, %s473
    $region4: #{tpu_custom_call.1} parent=1 // loop_header_branch
      %32 = sbr.rel (%p30) target = $region8
    $region5: #{tpu_custom_call.1} parent=1 // loop_body
      %s34 = ssub.s32 %s29, 1
      %s35 = ssub.s32 %s29, 2
      %s36 = sadd.s32 %s29, 1
      %s37 = ssub.s32 %s29, %s36
      %p38 = scmp.eq.s32.totalorder %s37, 0
      %s40 = sadd.s32 %s39, 1
      %s41 = scalar_select %p38, %s39, %s40
      %p44 = pneg %p38
      %p45 = scmp.eq.s32.totalorder %s29, 1
      %p46 = por %p44, %p45
      %p47 = scmp.ne.s32.totalorder %s39, %s42
      %p48 = scmp.eq.s32.totalorder %s29, 0
      %p49 = por %p47, %p48
      %p50 = scmp.ne.s32.totalorder %s39, %s42
      %p51 = scmp.eq.s32.totalorder %s34, 1
      %p52 = por %p50, %p51
      %p53 = scmp.ne.s32.totalorder %s42, %s43
      %p54 = scmp.eq.s32.totalorder %s34, 0
      %p55 = por %p53, %p54
      %p56 = scmp.ne.s32.totalorder %s42, %s43
      %p57 = scmp.eq.s32.totalorder %s35, 1
      %p58 = por %p56, %p57
      %p60 = scmp.ne.s32.totalorder %s43, %s59
      %p61 = scmp.eq.s32.totalorder %s35, 0
      %p62 = por %p60, %p61
      %s63 = ssub.s32 %s29, %s36
      %p64 = scmp.eq.s32.totalorder %s63, 0
      %s66 = sadd.s32 %s65, 1
      %s67 = scalar_select %p64, %s65, %s66
      %p70 = pneg %p64
      %p71 = scmp.eq.s32.totalorder %s29, 1
      %p72 = por %p70, %p71
      %p73 = scmp.ne.s32.totalorder %s65, %s68
      %p74 = scmp.eq.s32.totalorder %s29, 0
      %p75 = por %p73, %p74
      %p76 = scmp.ne.s32.totalorder %s65, %s68
      %p77 = scmp.eq.s32.totalorder %s34, 1
      %p78 = por %p76, %p77
      %p79 = scmp.ne.s32.totalorder %s68, %s69
      %p80 = scmp.eq.s32.totalorder %s34, 0
      %p81 = por %p79, %p80
      %p82 = scmp.ne.s32.totalorder %s68, %s69
      %p83 = scmp.eq.s32.totalorder %s35, 1
      %p84 = por %p82, %p83
      %p86 = scmp.ne.s32.totalorder %s69, %s85
      %p87 = scmp.eq.s32.totalorder %s35, 0
      %p88 = por %p86, %p87
      %s90 = sadd.s32 %s89, 1
      %p93 = scmp.eq.s32.totalorder %s29, 1
      %p94 = scmp.ne.s32.totalorder %s89, %s91
      %p95 = scmp.eq.s32.totalorder %s29, 0
      %p96 = por %p94, %p95
      %p97 = scmp.ne.s32.totalorder %s89, %s91
      %p98 = scmp.eq.s32.totalorder %s34, 1
      %p99 = por %p97, %p98
      %p100 = scmp.ne.s32.totalorder %s91, %s92
      %p101 = scmp.eq.s32.totalorder %s34, 0
      %p102 = por %p100, %p101
      %p103 = scmp.ne.s32.totalorder %s91, %s92
      %p104 = scmp.eq.s32.totalorder %s35, 1
      %p105 = por %p103, %p104
      %p107 = scmp.ne.s32.totalorder %s92, %s106
      %p108 = scmp.eq.s32.totalorder %s35, 0
      %p109 = por %p107, %p108
      %s111 = sadd.s32 %s110, 1
      %p114 = scmp.eq.s32.totalorder %s29, 1
      %p115 = scmp.ne.s32.totalorder %s110, %s112
      %p116 = scmp.eq.s32.totalorder %s29, 0
      %p117 = por %p115, %p116
      %p118 = scmp.ne.s32.totalorder %s110, %s112
      %p119 = scmp.eq.s32.totalorder %s34, 1
      %p120 = por %p118, %p119
      %p121 = scmp.ne.s32.totalorder %s112, %s113
      %p122 = scmp.eq.s32.totalorder %s34, 0
      %p123 = por %p121, %p122
      %p124 = scmp.ne.s32.totalorder %s112, %s113
      %p125 = scmp.eq.s32.totalorder %s35, 1
      %p126 = por %p124, %p125
      %p128 = scmp.ne.s32.totalorder %s113, %s127
      %p129 = scmp.eq.s32.totalorder %s35, 0
      %p130 = por %p128, %p129
      %s132 = sadd.s32 %s131, 1
      %p135 = scmp.eq.s32.totalorder %s29, 1
      %p136 = scmp.ne.s32.totalorder %s131, %s133
      %p137 = scmp.eq.s32.totalorder %s29, 0
      %p138 = por %p136, %p137
      %p139 = scmp.ne.s32.totalorder %s131, %s133
      %p140 = scmp.eq.s32.totalorder %s34, 1
      %p141 = por %p139, %p140
      %p142 = scmp.ne.s32.totalorder %s133, %s134
      %p143 = scmp.eq.s32.totalorder %s34, 0
      %p144 = por %p142, %p143
      %p145 = scmp.ne.s32.totalorder %s133, %s134
      %p146 = scmp.eq.s32.totalorder %s35, 1
      %p147 = por %p145, %p146
      %p149 = scmp.ne.s32.totalorder %s134, %s148
      %p150 = scmp.eq.s32.totalorder %s35, 0
      %p151 = por %p149, %p150
      %s153 = sadd.s32 %s152, 1
      %p156 = scmp.eq.s32.totalorder %s29, 1
      %p157 = scmp.ne.s32.totalorder %s152, %s154
      %p158 = scmp.eq.s32.totalorder %s29, 0
      %p159 = por %p157, %p158
      %p160 = scmp.ne.s32.totalorder %s152, %s154
      %p161 = scmp.eq.s32.totalorder %s34, 1
      %p162 = por %p160, %p161
      %p163 = scmp.ne.s32.totalorder %s154, %s155
      %p164 = scmp.eq.s32.totalorder %s34, 0
      %p165 = por %p163, %p164
      %p166 = scmp.ne.s32.totalorder %s154, %s155
      %p167 = scmp.eq.s32.totalorder %s35, 1
      %p168 = por %p166, %p167
      %p170 = scmp.ne.s32.totalorder %s155, %s169
      %p171 = scmp.eq.s32.totalorder %s35, 0
      %p172 = por %p170, %p171
      %s174 = sadd.s32 %s173, 1
      %p177 = scmp.eq.s32.totalorder %s29, 1
      %p178 = scmp.ne.s32.totalorder %s173, %s175
      %p179 = scmp.eq.s32.totalorder %s29, 0
      %p180 = por %p178, %p179
      %p181 = scmp.ne.s32.totalorder %s173, %s175
      %p182 = scmp.eq.s32.totalorder %s34, 1
      %p183 = por %p181, %p182
      %p184 = scmp.ne.s32.totalorder %s175, %s176
      %p185 = scmp.eq.s32.totalorder %s34, 0
      %p186 = por %p184, %p185
      %p187 = scmp.ne.s32.totalorder %s175, %s176
      %p188 = scmp.eq.s32.totalorder %s35, 1
      %p189 = por %p187, %p188
      %p191 = scmp.ne.s32.totalorder %s176, %s190
      %p192 = scmp.eq.s32.totalorder %s35, 0
      %p193 = por %p191, %p192
      %s195 = sadd.s32 %s194, 1
      %p198 = scmp.eq.s32.totalorder %s29, 1
      %p199 = scmp.ne.s32.totalorder %s194, %s196
      %p200 = scmp.eq.s32.totalorder %s29, 0
      %p201 = por %p199, %p200
      %p202 = scmp.ne.s32.totalorder %s194, %s196
      %p203 = scmp.eq.s32.totalorder %s34, 1
      %p204 = por %p202, %p203
      %p205 = scmp.ne.s32.totalorder %s196, %s197
      %p206 = scmp.eq.s32.totalorder %s34, 0
      %p207 = por %p205, %p206
      %p208 = scmp.ne.s32.totalorder %s196, %s197
      %p209 = scmp.eq.s32.totalorder %s35, 1
      %p210 = por %p208, %p209
      %p212 = scmp.ne.s32.totalorder %s197, %s211
      %p213 = scmp.eq.s32.totalorder %s35, 0
      %p214 = por %p212, %p213
      %s216 = sadd.s32 %s215, 1
      %p219 = scmp.eq.s32.totalorder %s29, 1
      %p220 = scmp.ne.s32.totalorder %s215, %s217
      %p221 = scmp.eq.s32.totalorder %s29, 0
      %p222 = por %p220, %p221
      %p223 = scmp.ne.s32.totalorder %s215, %s217
      %p224 = scmp.eq.s32.totalorder %s34, 1
      %p225 = por %p223, %p224
      %p226 = scmp.ne.s32.totalorder %s217, %s218
      %p227 = scmp.eq.s32.totalorder %s34, 0
      %p228 = por %p226, %p227
      %p229 = scmp.ne.s32.totalorder %s217, %s218
      %p230 = scmp.eq.s32.totalorder %s35, 1
      %p231 = por %p229, %p230
      %p233 = scmp.ne.s32.totalorder %s218, %s232
      %p234 = scmp.eq.s32.totalorder %s35, 0
      %p235 = por %p233, %p234
      %s237 = sadd.s32 %s236, 1
      %p240 = scmp.eq.s32.totalorder %s29, 1
      %p241 = scmp.ne.s32.totalorder %s236, %s238
      %p242 = scmp.eq.s32.totalorder %s29, 0
      %p243 = por %p241, %p242
      %p244 = scmp.ne.s32.totalorder %s236, %s238
      %p245 = scmp.eq.s32.totalorder %s34, 1
      %p246 = por %p244, %p245
      %p247 = scmp.ne.s32.totalorder %s238, %s239
      %p248 = scmp.eq.s32.totalorder %s34, 0
      %p249 = por %p247, %p248
      %p250 = scmp.ne.s32.totalorder %s238, %s239
      %p251 = scmp.eq.s32.totalorder %s35, 1
      %p252 = por %p250, %p251
      %p254 = scmp.ne.s32.totalorder %s239, %s253
      %p255 = scmp.eq.s32.totalorder %s35, 0
      %p256 = por %p254, %p255
      %s258 = sadd.s32 %s257, 1
      %p261 = scmp.eq.s32.totalorder %s29, 1
      %p262 = scmp.ne.s32.totalorder %s257, %s259
      %p263 = scmp.eq.s32.totalorder %s29, 0
      %p264 = por %p262, %p263
      %p265 = scmp.ne.s32.totalorder %s257, %s259
      %p266 = scmp.eq.s32.totalorder %s34, 1
      %p267 = por %p265, %p266
      %p268 = scmp.ne.s32.totalorder %s259, %s260
      %p269 = scmp.eq.s32.totalorder %s34, 0
      %p270 = por %p268, %p269
      %p271 = scmp.ne.s32.totalorder %s259, %s260
      %p272 = scmp.eq.s32.totalorder %s35, 1
      %p273 = por %p271, %p272
      %p275 = scmp.ne.s32.totalorder %s260, %s274
      %p276 = scmp.eq.s32.totalorder %s35, 0
      %p277 = por %p275, %p276
      %s279 = sadd.s32 %s278, 1
      %p282 = scmp.eq.s32.totalorder %s29, 1
      %p283 = scmp.ne.s32.totalorder %s278, %s280
      %p284 = scmp.eq.s32.totalorder %s29, 0
      %p285 = por %p283, %p284
      %p286 = scmp.ne.s32.totalorder %s278, %s280
      %p287 = scmp.eq.s32.totalorder %s34, 1
      %p288 = por %p286, %p287
      %p289 = scmp.ne.s32.totalorder %s280, %s281
      %p290 = scmp.eq.s32.totalorder %s34, 0
      %p291 = por %p289, %p290
      %p292 = scmp.ne.s32.totalorder %s280, %s281
      %p293 = scmp.eq.s32.totalorder %s35, 1
      %p294 = por %p292, %p293
      %p296 = scmp.ne.s32.totalorder %s281, %s295
      %p297 = scmp.eq.s32.totalorder %s35, 0
      %p298 = por %p296, %p297
      %s300 = sadd.s32 %s299, 1
      %p303 = scmp.eq.s32.totalorder %s29, 1
      %p304 = scmp.ne.s32.totalorder %s299, %s301
      %p305 = scmp.eq.s32.totalorder %s29, 0
      %p306 = por %p304, %p305
      %p307 = scmp.ne.s32.totalorder %s299, %s301
      %p308 = scmp.eq.s32.totalorder %s34, 1
      %p309 = por %p307, %p308
      %p310 = scmp.ne.s32.totalorder %s301, %s302
      %p311 = scmp.eq.s32.totalorder %s34, 0
      %p312 = por %p310, %p311
      %p313 = scmp.ne.s32.totalorder %s301, %s302
      %p314 = scmp.eq.s32.totalorder %s35, 1
      %p315 = por %p313, %p314
      %p317 = scmp.ne.s32.totalorder %s302, %s316
      %p318 = scmp.eq.s32.totalorder %s35, 0
      %p319 = por %p317, %p318
      %s321 = sadd.s32 %s320, 1
      %p324 = scmp.eq.s32.totalorder %s29, 1
      %p325 = scmp.ne.s32.totalorder %s320, %s322
      %p326 = scmp.eq.s32.totalorder %s29, 0
      %p327 = por %p325, %p326
      %p328 = scmp.ne.s32.totalorder %s320, %s322
      %p329 = scmp.eq.s32.totalorder %s34, 1
      %p330 = por %p328, %p329
      %p331 = scmp.ne.s32.totalorder %s322, %s323
      %p332 = scmp.eq.s32.totalorder %s34, 0
      %p333 = por %p331, %p332
      %p334 = scmp.ne.s32.totalorder %s322, %s323
      %p335 = scmp.eq.s32.totalorder %s35, 1
      %p336 = por %p334, %p335
      %p338 = scmp.ne.s32.totalorder %s323, %s337
      %p339 = scmp.eq.s32.totalorder %s35, 0
      %p340 = por %p338, %p339
      %s342 = sadd.s32 %s341, 1
      %p345 = scmp.eq.s32.totalorder %s29, 1
      %p346 = scmp.ne.s32.totalorder %s341, %s343
      %p347 = scmp.eq.s32.totalorder %s29, 0
      %p348 = por %p346, %p347
      %p349 = scmp.ne.s32.totalorder %s341, %s343
      %p350 = scmp.eq.s32.totalorder %s34, 1
      %p351 = por %p349, %p350
      %p352 = scmp.ne.s32.totalorder %s343, %s344
      %p353 = scmp.eq.s32.totalorder %s34, 0
      %p354 = por %p352, %p353
      %p355 = scmp.ne.s32.totalorder %s343, %s344
      %p356 = scmp.eq.s32.totalorder %s35, 1
      %p357 = por %p355, %p356
      %p359 = scmp.ne.s32.totalorder %s344, %s358
      %p360 = scmp.eq.s32.totalorder %s35, 0
      %p361 = por %p359, %p360
      %s363 = sadd.s32 %s362, 1
      %p366 = scmp.eq.s32.totalorder %s29, 1
      %p367 = scmp.ne.s32.totalorder %s362, %s364
      %p368 = scmp.eq.s32.totalorder %s29, 0
      %p369 = por %p367, %p368
      %p370 = scmp.ne.s32.totalorder %s362, %s364
      %p371 = scmp.eq.s32.totalorder %s34, 1
      %p372 = por %p370, %p371
      %p373 = scmp.ne.s32.totalorder %s364, %s365
      %p374 = scmp.eq.s32.totalorder %s34, 0
      %p375 = por %p373, %p374
      %p376 = scmp.ne.s32.totalorder %s364, %s365
      %p377 = scmp.eq.s32.totalorder %s35, 1
      %p378 = por %p376, %p377
      %p380 = scmp.ne.s32.totalorder %s365, %s379
      %p381 = scmp.eq.s32.totalorder %s35, 0
      %p382 = por %p380, %p381
      %s384 = sadd.s32 %s383, 1
      %p387 = scmp.eq.s32.totalorder %s29, 1
      %p388 = scmp.ne.s32.totalorder %s383, %s385
      %p389 = scmp.eq.s32.totalorder %s29, 0
      %p390 = por %p388, %p389
      %p391 = scmp.ne.s32.totalorder %s383, %s385
      %p392 = scmp.eq.s32.totalorder %s34, 1
      %p393 = por %p391, %p392
      %p394 = scmp.ne.s32.totalorder %s385, %s386
      %p395 = scmp.eq.s32.totalorder %s34, 0
      %p396 = por %p394, %p395
      %p397 = scmp.ne.s32.totalorder %s385, %s386
      %p398 = scmp.eq.s32.totalorder %s35, 1
      %p399 = por %p397, %p398
      %p401 = scmp.ne.s32.totalorder %s386, %s400
      %p402 = scmp.eq.s32.totalorder %s35, 0
      %p403 = por %p401, %p402
      %s405 = sadd.s32 %s404, 1
      %p408 = scmp.eq.s32.totalorder %s29, 1
      %p409 = scmp.ne.s32.totalorder %s404, %s406
      %p410 = scmp.eq.s32.totalorder %s29, 0
      %p411 = por %p409, %p410
      %p412 = scmp.ne.s32.totalorder %s404, %s406
      %p413 = scmp.eq.s32.totalorder %s34, 1
      %p414 = por %p412, %p413
      %p415 = scmp.ne.s32.totalorder %s406, %s407
      %p416 = scmp.eq.s32.totalorder %s34, 0
      %p417 = por %p415, %p416
      %p418 = scmp.ne.s32.totalorder %s406, %s407
      %p419 = scmp.eq.s32.totalorder %s35, 1
      %p420 = por %p418, %p419
      %p422 = scmp.ne.s32.totalorder %s407, %s421
      %p423 = scmp.eq.s32.totalorder %s35, 0
      %p424 = por %p422, %p423
      %s426 = sadd.s32 %s425, 1
      %p429 = scmp.eq.s32.totalorder %s29, 1
      %p430 = scmp.ne.s32.totalorder %s425, %s427
      %p431 = scmp.eq.s32.totalorder %s29, 0
      %p432 = por %p430, %p431
      %p433 = scmp.ne.s32.totalorder %s425, %s427
      %p434 = scmp.eq.s32.totalorder %s34, 1
      %p435 = por %p433, %p434
      %p436 = scmp.ne.s32.totalorder %s427, %s428
      %p437 = scmp.eq.s32.totalorder %s34, 0
      %p438 = por %p436, %p437
      %p439 = scmp.ne.s32.totalorder %s427, %s428
      %p440 = scmp.eq.s32.totalorder %s35, 1
      %p441 = por %p439, %p440
      %p443 = scmp.ne.s32.totalorder %s428, %s442
      %p444 = scmp.eq.s32.totalorder %s35, 0
      %p445 = por %p443, %p444
      %s447 = sadd.s32 %s446, 1
      %p450 = scmp.eq.s32.totalorder %s29, 1
      %p451 = scmp.ne.s32.totalorder %s446, %s448
      %p452 = scmp.eq.s32.totalorder %s29, 0
      %p453 = por %p451, %p452
      %p454 = scmp.ne.s32.totalorder %s446, %s448
      %p455 = scmp.eq.s32.totalorder %s34, 1
      %p456 = por %p454, %p455
      %p457 = scmp.ne.s32.totalorder %s448, %s449
      %p458 = scmp.eq.s32.totalorder %s34, 0
      %p459 = por %p457, %p458
      %p460 = scmp.ne.s32.totalorder %s448, %s449
      %p461 = scmp.eq.s32.totalorder %s35, 1
      %p462 = por %p460, %p461
      %p464 = scmp.ne.s32.totalorder %s449, %s463
      %p465 = scmp.eq.s32.totalorder %s35, 0
      %p466 = por %p464, %p465
      %s467 = ssub.s32 %s29, %s36
      %p468 = scmp.eq.s32.totalorder %s467, 0
      %s470 = sadd.s32 %s469, 1
      %s471 = scalar_select %p468, %s469, %s470
      %p474 = pneg %p468
      %p475 = scmp.eq.s32.totalorder %s29, 1
      %p476 = por %p474, %p475
      %p477 = scmp.ne.s32.totalorder %s469, %s472
      %p478 = scmp.eq.s32.totalorder %s29, 0
      %p479 = por %p477, %p478
      %p480 = scmp.ne.s32.totalorder %s469, %s472
      %p481 = scmp.eq.s32.totalorder %s34, 1
      %p482 = por %p480, %p481
      %p483 = scmp.ne.s32.totalorder %s472, %s473
      %p484 = scmp.eq.s32.totalorder %s34, 0
      %p485 = por %p483, %p484
      %p486 = scmp.ne.s32.totalorder %s472, %s473
      %p487 = scmp.eq.s32.totalorder %s35, 1
      %p488 = por %p486, %p487
      %p490 = scmp.ne.s32.totalorder %s473, %s489
      %p491 = scmp.eq.s32.totalorder %s35, 0
      %p492 = por %p490, %p491
      %p493 = scmp.le.s32.totalorder 1, %s29
      %p494 = scmp.lt.s32.totalorder %s29, 3
      %p495 = pnand %p493, %p494
      %p496 = pneg %p495
      // Predicated region
      $region9: #{tpu_custom_call.1} parent=5 // pred_check
        _
      $region10: #{tpu_custom_call.1} parent=5 // pred_check_branch
        %498 = sbr.rel (%p495) target = $region12
      $region11: #{tpu_custom_call.1} parent=5 // pred_region
        %s499 = ssub.s32 %s29, 1
        // Predicated region
        $region13: #{tpu_custom_call.1} parent=11 // pred_check
          %p500 = pneg %p102
        $region14: #{tpu_custom_call.1} parent=11 // pred_check_branch
          %502 = sbr.rel (%p500) target = $region16
        $region15: #{tpu_custom_call.1} parent=11 // pred_region
          _
        $region16: #{tpu_custom_call.1} parent=11 // pred_fallthru
          _
        // Predicated region
        $region17: #{tpu_custom_call.1} parent=11 // pred_check
          %p503 = pneg %p123
        $region18: #{tpu_custom_call.1} parent=11 // pred_check_branch
          %505 = sbr.rel (%p503) target = $region20
        $region19: #{tpu_custom_call.1} parent=11 // pred_region
          _
        $region20: #{tpu_custom_call.1} parent=11 // pred_fallthru
          _
        // Predicated region
        $region21: #{tpu_custom_call.1} parent=11 // pred_check
          %p506 = pneg %p144
        $region22: #{tpu_custom_call.1} parent=11 // pred_check_branch
          %508 = sbr.rel (%p506) target = $region24
        $region23: #{tpu_custom_call.1} parent=11 // pred_region
          _
        $region24: #{tpu_custom_call.1} parent=11 // pred_fallthru
          _
        // Predicated region
        $region25: #{tpu_custom_call.1} parent=11 // pred_check
          %p509 = pneg %p165
        $region26: #{tpu_custom_call.1} parent=11 // pred_check_branch
          %511 = sbr.rel (%p509) target = $region28
        $region27: #{tpu_custom_call.1} parent=11 // pred_region
          _
        $region28: #{tpu_custom_call.1} parent=11 // pred_fallthru
          _
        // Predicated region
        $region29: #{tpu_custom_call.1} parent=11 // pred_check
          %p512 = pneg %p186
        $region30: #{tpu_custom_call.1} parent=11 // pred_check_branch
          %514 = sbr.rel (%p512) target = $region32
        $region31: #{tpu_custom_call.1} parent=11 // pred_region
          _
        $region32: #{tpu_custom_call.1} parent=11 // pred_fallthru
          _
        // Predicated region
        $region33: #{tpu_custom_call.1} parent=11 // pred_check
          %p515 = pneg %p207
        $region34: #{tpu_custom_call.1} parent=11 // pred_check_branch
          %517 = sbr.rel (%p515) target = $region36
        $region35: #{tpu_custom_call.1} parent=11 // pred_region
          _
        $region36: #{tpu_custom_call.1} parent=11 // pred_fallthru
          _
        // Predicated region
        $region37: #{tpu_custom_call.1} parent=11 // pred_check
          %p518 = pneg %p228
        $region38: #{tpu_custom_call.1} parent=11 // pred_check_branch
          %520 = sbr.rel (%p518) target = $region40
        $region39: #{tpu_custom_call.1} parent=11 // pred_region
          _
        $region40: #{tpu_custom_call.1} parent=11 // pred_fallthru
          _
        // Predicated region
        $region41: #{tpu_custom_call.1} parent=11 // pred_check
          %p521 = pneg %p249
        $region42: #{tpu_custom_call.1} parent=11 // pred_check_branch
          %523 = sbr.rel (%p521) target = $region44
        $region43: #{tpu_custom_call.1} parent=11 // pred_region
          _
        $region44: #{tpu_custom_call.1} parent=11 // pred_fallthru
          _
        // Predicated region
        $region45: #{tpu_custom_call.1} parent=11 // pred_check
          %p524 = pneg %p270
        $region46: #{tpu_custom_call.1} parent=11 // pred_check_branch
          %526 = sbr.rel (%p524) target = $region48
        $region47: #{tpu_custom_call.1} parent=11 // pred_region
          _
        $region48: #{tpu_custom_call.1} parent=11 // pred_fallthru
          _
        // Predicated region
        $region49: #{tpu_custom_call.1} parent=11 // pred_check
          %p527 = pneg %p291
        $region50: #{tpu_custom_call.1} parent=11 // pred_check_branch
          %529 = sbr.rel (%p527) target = $region52
        $region51: #{tpu_custom_call.1} parent=11 // pred_region
          _
        $region52: #{tpu_custom_call.1} parent=11 // pred_fallthru
          _
        // Predicated region
        $region53: #{tpu_custom_call.1} parent=11 // pred_check
          %p530 = pneg %p312
        $region54: #{tpu_custom_call.1} parent=11 // pred_check_branch
          %532 = sbr.rel (%p530) target = $region56
        $region55: #{tpu_custom_call.1} parent=11 // pred_region
          _
        $region56: #{tpu_custom_call.1} parent=11 // pred_fallthru
          _
        // Predicated region
        $region57: #{tpu_custom_call.1} parent=11 // pred_check
          %p533 = pneg %p333
        $region58: #{tpu_custom_call.1} parent=11 // pred_check_branch
          %535 = sbr.rel (%p533) target = $region60
        $region59: #{tpu_custom_call.1} parent=11 // pred_region
          _
        $region60: #{tpu_custom_call.1} parent=11 // pred_fallthru
          _
        // Predicated region
        $region61: #{tpu_custom_call.1} parent=11 // pred_check
          %p536 = pneg %p354
        $region62: #{tpu_custom_call.1} parent=11 // pred_check_branch
          %538 = sbr.rel (%p536) target = $region64
        $region63: #{tpu_custom_call.1} parent=11 // pred_region
          _
        $region64: #{tpu_custom_call.1} parent=11 // pred_fallthru
          _
        // Predicated region
        $region65: #{tpu_custom_call.1} parent=11 // pred_check
          %p539 = pneg %p375
        $region66: #{tpu_custom_call.1} parent=11 // pred_check_branch
          %541 = sbr.rel (%p539) target = $region68
        $region67: #{tpu_custom_call.1} parent=11 // pred_region
          _
        $region68: #{tpu_custom_call.1} parent=11 // pred_fallthru
          _
        // Predicated region
        $region69: #{tpu_custom_call.1} parent=11 // pred_check
          %p542 = pneg %p396
        $region70: #{tpu_custom_call.1} parent=11 // pred_check_branch
          %544 = sbr.rel (%p542) target = $region72
        $region71: #{tpu_custom_call.1} parent=11 // pred_region
          _
        $region72: #{tpu_custom_call.1} parent=11 // pred_fallthru
          _
        // Predicated region
        $region73: #{tpu_custom_call.1} parent=11 // pred_check
          %p545 = pneg %p417
        $region74: #{tpu_custom_call.1} parent=11 // pred_check_branch
          %547 = sbr.rel (%p545) target = $region76
        $region75: #{tpu_custom_call.1} parent=11 // pred_region
          _
        $region76: #{tpu_custom_call.1} parent=11 // pred_fallthru
          _
        // Predicated region
        $region77: #{tpu_custom_call.1} parent=11 // pred_check
          %p548 = pneg %p438
        $region78: #{tpu_custom_call.1} parent=11 // pred_check_branch
          %550 = sbr.rel (%p548) target = $region80
        $region79: #{tpu_custom_call.1} parent=11 // pred_region
          _
        $region80: #{tpu_custom_call.1} parent=11 // pred_fallthru
          _
        // Predicated region
        $region81: #{tpu_custom_call.1} parent=11 // pred_check
          %p551 = pneg %p459
        $region82: #{tpu_custom_call.1} parent=11 // pred_check_branch
          %553 = sbr.rel (%p551) target = $region84
        $region83: #{tpu_custom_call.1} parent=11 // pred_region
          _
        $region84: #{tpu_custom_call.1} parent=11 // pred_fallthru
          _
      $region12: #{tpu_custom_call.1} parent=5 // pred_fallthru
        _
      %p554 = scmp.lt.s32.totalorder %s29, 2
      // Predicated region
      $region85: #{tpu_custom_call.1} parent=5 // pred_check
        %p555 = pneg %p554
      $region86: #{tpu_custom_call.1} parent=5 // pred_check_branch
        %557 = sbr.rel (%p555) target = $region88
      $region87: #{tpu_custom_call.1} parent=5 // pred_region
        // Predicated region
        $region89: #{tpu_custom_call.1} parent=87 // pred_check
          %p558 = pneg %p49
        $region90: #{tpu_custom_call.1} parent=87 // pred_check_branch
          %560 = sbr.rel (%p558) target = $region92
        $region91: #{tpu_custom_call.1} parent=87 // pred_region
          %s561 = smul.u32 2, %s29
          %p562 = scmp.lt.s32.totalorder %s561, 3
          %s563 = scalar_select %p562, %s561, 3
          %s564 = smul.addr %s563, 4
          %s565 = scalar_lea.vmem %s0, %s564
          %s566 = smul.u32 2, %s29
        $region92: #{tpu_custom_call.1} parent=87 // pred_fallthru
          _
        // Predicated region
        $region93: #{tpu_custom_call.1} parent=87 // pred_check
          %p567 = pneg %p75
        $region94: #{tpu_custom_call.1} parent=87 // pred_check_branch
          %569 = sbr.rel (%p567) target = $region96
        $region95: #{tpu_custom_call.1} parent=87 // pred_region
          %s570 = smul.u32 2, %s29
          %p571 = scmp.lt.s32.totalorder %s570, 3
          %s572 = scalar_select %p571, %s570, 3
          %s573 = smul.addr %s572, 4
          %s574 = scalar_lea.vmem %s1, %s573
          %s575 = smul.u32 2, %s29
        $region96: #{tpu_custom_call.1} parent=87 // pred_fallthru
          _
      $region88: #{tpu_custom_call.1} parent=5 // pred_fallthru
        _
      %p576 = scmp.le.s32.totalorder 1, %s29
      %p577 = scmp.lt.s32.totalorder %s29, 3
      %p578 = pnand %p576, %p577
      %p579 = pneg %p578
      // Predicated region
      $region97: #{tpu_custom_call.1} parent=5 // pred_check
        _
      $region98: #{tpu_custom_call.1} parent=5 // pred_check_branch
        %581 = sbr.rel (%p578) target = $region100
      $region99: #{tpu_custom_call.1} parent=5 // pred_region
        %s582 = ssub.s32 %s29, 1
        %s583 = smul.u32 2, %s34
        %p584 = scmp.lt.s32.totalorder %s583, 3
        %s585 = scalar_select %p584, %s583, 3
        %s586 = smul.addr %s585, 4
        %s587 = scalar_lea.vmem %s0, %s586
        %p588 = pneg %p55
        %p589 = pneg %p52
        %s590 = smul.u32 2, %s34
        %p591 = scmp.lt.s32.totalorder %s590, 3
        %s592 = scalar_select %p591, %s590, 3
        %s593 = smul.addr %s592, 4
        %s594 = scalar_lea.vmem %s1, %s593
        %p595 = pneg %p81
        %p596 = pneg %p78
        %p597 = pneg %p102
        %p598 = pneg %p99
        %p599 = pneg %p123
        %p600 = pneg %p120
        %p601 = pneg %p144
        %p602 = pneg %p141
        %p603 = pneg %p165
        %p604 = pneg %p162
        %p605 = pneg %p186
        %p606 = pneg %p183
        %p607 = pneg %p207
        %p608 = pneg %p204
        %p609 = pneg %p228
        %p610 = pneg %p225
        %p611 = pneg %p249
        %p612 = pneg %p246
        %p613 = pneg %p270
        %p614 = pneg %p267
        %p615 = pneg %p291
        %p616 = pneg %p288
        %p617 = pneg %p312
        %p618 = pneg %p309
        %p619 = pneg %p333
        %p620 = pneg %p330
        %p621 = pneg %p354
        %p622 = pneg %p351
        %p623 = pneg %p375
        %p624 = pneg %p372
        %p625 = pneg %p396
        %p626 = pneg %p393
        %p627 = pneg %p417
        %p628 = pneg %p414
        %p629 = pneg %p438
        %p630 = pneg %p435
        %p631 = pneg %p459
        %p632 = pneg %p456
        %p633 = pneg %p485
        %p634 = pneg %p482
        %s635 = sand.u32 %s472, 1
        %s636 = scalar_lea.sflag [#allocation3], %s635
        %s637 = sand.u32 %s472, 1
        %s638 = smul.addr %s637, 16
        %s639 = scalar_lea.vmem [#allocation2], %s638
        %s640 = smul.u32 2, %s34
        %p641 = scmp.lt.s32.totalorder %s640, 3
        %s642 = scalar_select %p641, %s640, 3
        %s643 = smul.addr %s642, 4
        %s644 = scalar_lea.vmem %s0, %s643
        %s645 = smul.u32 2, %s34
        %s646 = smul.u32 2, %s34
        %p647 = scmp.lt.s32.totalorder %s646, 3
        %s648 = scalar_select %p647, %s646, 3
        %s649 = smul.addr %s648, 4
        %s650 = scalar_lea.vmem %s1, %s649
        %s651 = smul.u32 2, %s34
        %s652 = smul.u32 2, %s34
        %v654 = vld [vmem:[%s644] sm:$0xf]
        %v655 = vld [vmem:[%s644 + $0x4] sm:$0xf]
        %v656 = vld [vmem:[%s650] sm:$0xf]
        %v657 = vld [vmem:[%s650 + $0x4] sm:$0xf]
        %v658 = vld [vmem:[%s3] sm:$0xf]
        %v659 = vld [vmem:[%s3 + $0x4] sm:$0xf]
        %v660 = vld [vmem:[%s4] sm:$0x1]
        %v662 = vlaneseq
        %v663 = vshrl.u32 %v662, 7
        %v664 = vsub.s32 0, %v663
        %v665 = vrot.slane %v660, %v664
        %v669 = vunpack.c.l.b16 %v654
        %v670 = vunpack.c.l.b16 %v655
        %v671 = vpack.c.b16 %v670, %v669
        %v674 = vunpack.c.l.b16 %v658
        %v675 = vunpack.c.l.b16 %v659
        %v676 = vpack.c.b16 %v675, %v674
        %vm678 = vcmask 130048
        %v680 = vsel %vm678, %v671, 0
        %682 = vmatprep.subr.bf16.mxu0 0
        %683 = vmatpush1.bf16.msra.mxu0 %v676
        %684 = vmatprep.subr.bf16.mxu0 0
        %685 = vmatpush1.bf16.msra.mxu0 0
        %686 = vmatprep.subr.bf16.mxu0 0
        %687 = vmatpush1.bf16.msra.mxu0 0
        %688 = vmatprep.subr.bf16.mxu0 0
        %689 = vmatpush1.bf16.msra.mxu0 0
        %690 = vmatprep.subr.bf16.mxu0 0
        %691 = vmatpush1.bf16.msra.mxu0 0
        %692 = vmatprep.subr.bf16.mxu0 0
        %693 = vmatpush1.bf16.msra.mxu0 0
        %694 = vmatprep.subr.bf16.mxu0 0
        %695 = vmatpush1.bf16.msra.mxu0 0
        %696 = vmatprep.subr.bf16.mxu0 0
        %697 = vmatpush1.bf16.msra.mxu0 0
        %698 = vmatprep.subr.bf16.mxu0 0
        %699 = vmatpush1.bf16.msra.mxu0 0
        %700 = vmatprep.subr.bf16.mxu0 0
        %701 = vmatpush1.bf16.msra.mxu0 0
        %702 = vmatprep.subr.bf16.mxu0 0
        %703 = vmatpush1.bf16.msra.mxu0 0
        %704 = vmatprep.subr.bf16.mxu0 0
        %705 = vmatpush1.bf16.msra.mxu0 0
        %706 = vmatprep.subr.bf16.mxu0 0
        %707 = vmatpush1.bf16.msra.mxu0 0
        %708 = vmatprep.subr.bf16.mxu0 0
        %709 = vmatpush1.bf16.msra.mxu0 0
        %710 = vmatprep.subr.bf16.mxu0 0
        %711 = vmatpush1.bf16.msra.mxu0 0
        %712 = vmatprep.subr.bf16.mxu0 0
        %713 = vmatpush1.bf16.msra.mxu0 0
        %714 = vmatprep.mubr.bf16.mxu0 0
        %715 = vmatmul.mubr.bf16.gmra.mrb[0].mxu0 %v680
        %v716 = vpop.f32.mrb[0].mxu0
        %v717 = vadd.f32 %v665, %v716
        %v718 = vpop.f32.mrb[0].mxu0
        %v719 = vpop.f32.mrb[0].mxu0
        %v720 = vadd.f32 %v665, %v719
        %v721 = vpop.f32.mrb[0].mxu0
        %722 = vdwg.mxu0
        %v723 = vmax.f32 %v717, 0.0
        %v724 = vmax.f32 %v720, 0.0
        %v725 = vpack.c.bf16 %v724, %v723
        %v726 = vld [vmem:[%s5] sm:$0xf]
        %v727 = vld [vmem:[%s5 + $0x4] sm:$0xf]
        %v728 = vld [vmem:[%s5 + $0x8] sm:$0xf]
        %v729 = vld [vmem:[%s5 + $0xc] sm:$0xf]
        %v730 = vld [vmem:[%s6] sm:$0x1]
        %v732 = vlaneseq
        %v733 = vshrl.u32 %v732, 7
        %v734 = vsub.s32 0, %v733
        %v735 = vrot.slane %v730, %v734
        %v741 = vunpack.c.l.b16 %v726
        %v742 = vunpack.c.l.b16 %v727
        %v743 = vunpack.c.l.b16 %v728
        %v744 = vunpack.c.l.b16 %v729
        %v745 = vpack.c.b16 %v742, %v741
        %v746 = vpack.c.b16 %v744, %v743
        %vm749 = vcmask 261120
        %v751 = vsel %vm749, %v725, 0
        %753 = vmatprep.subr.bf16.mxu0 0
        %754 = vmatpush1.bf16.msra.mxu0 %v745
        %755 = vmatprep.subr.bf16.mxu0 0
        %756 = vmatpush1.bf16.msra.mxu0 %v746
        %757 = vmatprep.subr.bf16.mxu0 0
        %758 = vmatpush1.bf16.msra.mxu0 0
        %759 = vmatprep.subr.bf16.mxu0 0
        %760 = vmatpush1.bf16.msra.mxu0 0
        %761 = vmatprep.subr.bf16.mxu0 0
        %762 = vmatpush1.bf16.msra.mxu0 0
        %763 = vmatprep.subr.bf16.mxu0 0
        %764 = vmatpush1.bf16.msra.mxu0 0
        %765 = vmatprep.subr.bf16.mxu0 0
        %766 = vmatpush1.bf16.msra.mxu0 0
        %767 = vmatprep.subr.bf16.mxu0 0
        %768 = vmatpush1.bf16.msra.mxu0 0
        %769 = vmatprep.subr.bf16.mxu0 0
        %770 = vmatpush1.bf16.msra.mxu0 0
        %771 = vmatprep.subr.bf16.mxu0 0
        %772 = vmatpush1.bf16.msra.mxu0 0
        %773 = vmatprep.subr.bf16.mxu0 0
        %774 = vmatpush1.bf16.msra.mxu0 0
        %775 = vmatprep.subr.bf16.mxu0 0
        %776 = vmatpush1.bf16.msra.mxu0 0
        %777 = vmatprep.subr.bf16.mxu0 0
        %778 = vmatpush1.bf16.msra.mxu0 0
        %779 = vmatprep.subr.bf16.mxu0 0
        %780 = vmatpush1.bf16.msra.mxu0 0
        %781 = vmatprep.subr.bf16.mxu0 0
        %782 = vmatpush1.bf16.msra.mxu0 0
        %783 = vmatprep.subr.bf16.mxu0 0
        %784 = vmatpush1.bf16.msra.mxu0 0
        %785 = vmatprep.mubr.bf16.mxu0 0
        %786 = vmatmul.mubr.bf16.gmra.mrb[0].mxu0 %v751
        %v787 = vpop.f32.mrb[0].mxu0
        %v788 = vadd.f32 %v735, %v787
        %v789 = vpop.f32.mrb[0].mxu0
        %v790 = vpop.f32.mrb[0].mxu0
        %v791 = vadd.f32 %v735, %v790
        %v792 = vpop.f32.mrb[0].mxu0
        %793 = vdwg.mxu0
        %v794 = vpack.c.bf16 %v791, %v788
        %v795 = vld [vmem:[%s7] sm:$0xf]
        %v796 = vld [vmem:[%s7 + $0x4] sm:$0xf]
        %v797 = vld [vmem:[%s7 + $0x8] sm:$0xf]
        %v798 = vld [vmem:[%s7 + $0xc] sm:$0xf]
        %v799 = vld [vmem:[%s8] sm:$0x1]
        %v801 = vlaneseq
        %v802 = vshrl.u32 %v801, 7
        %v803 = vsub.s32 0, %v802
        %v804 = vrot.slane %v799, %v803
        %v810 = vunpack.c.l.b16 %v795
        %v811 = vunpack.c.l.b16 %v796
        %v812 = vunpack.c.l.b16 %v797
        %v813 = vunpack.c.l.b16 %v798
        %v814 = vpack.c.b16 %v811, %v810
        %v815 = vpack.c.b16 %v813, %v812
        %v819 = vsel %vm749, %v794, 0
        %821 = vmatprep.subr.bf16.mxu0 0
        %822 = vmatpush1.bf16.msra.mxu0 %v814
        %823 = vmatprep.subr.bf16.mxu0 0
        %824 = vmatpush1.bf16.msra.mxu0 %v815
        %825 = vmatprep.subr.bf16.mxu0 0
        %826 = vmatpush1.bf16.msra.mxu0 0
        %827 = vmatprep.subr.bf16.mxu0 0
        %828 = vmatpush1.bf16.msra.mxu0 0
        %829 = vmatprep.subr.bf16.mxu0 0
        %830 = vmatpush1.bf16.msra.mxu0 0
        %831 = vmatprep.subr.bf16.mxu0 0
        %832 = vmatpush1.bf16.msra.mxu0 0
        %833 = vmatprep.subr.bf16.mxu0 0
        %834 = vmatpush1.bf16.msra.mxu0 0
        %835 = vmatprep.subr.bf16.mxu0 0
        %836 = vmatpush1.bf16.msra.mxu0 0
        %837 = vmatprep.subr.bf16.mxu0 0
        %838 = vmatpush1.bf16.msra.mxu0 0
        %839 = vmatprep.subr.bf16.mxu0 0
        %840 = vmatpush1.bf16.msra.mxu0 0
        %841 = vmatprep.subr.bf16.mxu0 0
        %842 = vmatpush1.bf16.msra.mxu0 0
        %843 = vmatprep.subr.bf16.mxu0 0
        %844 = vmatpush1.bf16.msra.mxu0 0
        %845 = vmatprep.subr.bf16.mxu0 0
        %846 = vmatpush1.bf16.msra.mxu0 0
        %847 = vmatprep.subr.bf16.mxu0 0
        %848 = vmatpush1.bf16.msra.mxu0 0
        %849 = vmatprep.subr.bf16.mxu0 0
        %850 = vmatpush1.bf16.msra.mxu0 0
        %851 = vmatprep.subr.bf16.mxu0 0
        %852 = vmatpush1.bf16.msra.mxu0 0
        %853 = vmatprep.mubr.bf16.mxu0 0
        %854 = vmatmul.mubr.bf16.gmra.mrb[0].mxu0 %v819
        %v855 = vpop.f32.mrb[0].mxu0
        %v856 = vadd.f32 %v804, %v855
        %v857 = vpop.f32.mrb[0].mxu0
        %v858 = vpop.f32.mrb[0].mxu0
        %v859 = vadd.f32 %v804, %v858
        %v860 = vpop.f32.mrb[0].mxu0
        %861 = vdwg.mxu0
        %v862 = vpack.c.bf16 %v859, %v856
        %v863 = vld [vmem:[%s2] sm:$0x1]
        %v864 = vld [vmem:[%s9] sm:$0xf]
        %v865 = vld [vmem:[%s9 + $0x4] sm:$0xf]
        %v866 = vld [vmem:[%s10] sm:$0xf]
        %v867 = vld [vmem:[%s10 + $0x4] sm:$0xf]
        %v870 = vunpack.c.l.b16 %v656
        %v871 = vunpack.c.l.b16 %v657
        %v872 = vpack.c.b16 %v871, %v870
        %v875 = vunpack.c.l.b16 %v866
        %v876 = vunpack.c.l.b16 %v867
        %v877 = vpack.c.b16 %v876, %v875
        %v880 = vsel %vm678, %v872, 0
        %882 = vmatprep.subr.bf16.mxu0 0
        %883 = vmatpush1.bf16.msra.mxu0 %v877
        %884 = vmatprep.subr.bf16.mxu0 0
        %885 = vmatpush1.bf16.msra.mxu0 0
        %886 = vmatprep.subr.bf16.mxu0 0
        %887 = vmatpush1.bf16.msra.mxu0 0
        %888 = vmatprep.subr.bf16.mxu0 0
        %889 = vmatpush1.bf16.msra.mxu0 0
        %890 = vmatprep.subr.bf16.mxu0 0
        %891 = vmatpush1.bf16.msra.mxu0 0
        %892 = vmatprep.subr.bf16.mxu0 0
        %893 = vmatpush1.bf16.msra.mxu0 0
        %894 = vmatprep.subr.bf16.mxu0 0
        %895 = vmatpush1.bf16.msra.mxu0 0
        %896 = vmatprep.subr.bf16.mxu0 0
        %897 = vmatpush1.bf16.msra.mxu0 0
        %898 = vmatprep.subr.bf16.mxu0 0
        %899 = vmatpush1.bf16.msra.mxu0 0
        %900 = vmatprep.subr.bf16.mxu0 0
        %901 = vmatpush1.bf16.msra.mxu0 0
        %902 = vmatprep.subr.bf16.mxu0 0
        %903 = vmatpush1.bf16.msra.mxu0 0
        %904 = vmatprep.subr.bf16.mxu0 0
        %905 = vmatpush1.bf16.msra.mxu0 0
        %906 = vmatprep.subr.bf16.mxu0 0
        %907 = vmatpush1.bf16.msra.mxu0 0
        %908 = vmatprep.subr.bf16.mxu0 0
        %909 = vmatpush1.bf16.msra.mxu0 0
        %910 = vmatprep.subr.bf16.mxu0 0
        %911 = vmatpush1.bf16.msra.mxu0 0
        %912 = vmatprep.subr.bf16.mxu0 0
        %913 = vmatpush1.bf16.msra.mxu0 0
        %914 = vmatprep.mubr.bf16.mxu0 0
        %915 = vmatmul.mubr.bf16.gmra.mrb[0].mxu0 %v880
        %v916 = vpop.f32.mrb[0].mxu0
        %v917 = vadd.f32 0.0, %v916
        %v918 = vpop.f32.mrb[0].mxu0
        %v919 = vpop.f32.mrb[0].mxu0
        %v920 = vadd.f32 0.0, %v919
        %v921 = vpop.f32.mrb[0].mxu0
        %922 = vdwg.mxu0
        %v925 = vunpack.c.l.b16 %v864
        %v926 = vunpack.c.l.b16 %v865
        %v927 = vpack.c.b16 %v926, %v925
        %v930 = vsel %vm678, %v862, 0
        %932 = vmatprep.subr.bf16.mxu0 0
        %933 = vmatpush1.bf16.msra.mxu0 %v927
        %934 = vmatprep.subr.bf16.mxu0 0
        %935 = vmatpush1.bf16.msra.mxu0 0
        %936 = vmatprep.subr.bf16.mxu0 0
        %937 = vmatpush1.bf16.msra.mxu0 0
        %938 = vmatprep.subr.bf16.mxu0 0
        %939 = vmatpush1.bf16.msra.mxu0 0
        %940 = vmatprep.subr.bf16.mxu0 0
        %941 = vmatpush1.bf16.msra.mxu0 0
        %942 = vmatprep.subr.bf16.mxu0 0
        %943 = vmatpush1.bf16.msra.mxu0 0
        %944 = vmatprep.subr.bf16.mxu0 0
        %945 = vmatpush1.bf16.msra.mxu0 0
        %946 = vmatprep.subr.bf16.mxu0 0
        %947 = vmatpush1.bf16.msra.mxu0 0
        %948 = vmatprep.subr.bf16.mxu0 0
        %949 = vmatpush1.bf16.msra.mxu0 0
        %950 = vmatprep.subr.bf16.mxu0 0
        %951 = vmatpush1.bf16.msra.mxu0 0
        %952 = vmatprep.subr.bf16.mxu0 0
        %953 = vmatpush1.bf16.msra.mxu0 0
        %954 = vmatprep.subr.bf16.mxu0 0
        %955 = vmatpush1.bf16.msra.mxu0 0
        %956 = vmatprep.subr.bf16.mxu0 0
        %957 = vmatpush1.bf16.msra.mxu0 0
        %958 = vmatprep.subr.bf16.mxu0 0
        %959 = vmatpush1.bf16.msra.mxu0 0
        %960 = vmatprep.subr.bf16.mxu0 0
        %961 = vmatpush1.bf16.msra.mxu0 0
        %962 = vmatprep.subr.bf16.mxu0 0
        %963 = vmatpush1.bf16.msra.mxu0 0
        %964 = vmatprep.mubr.bf16.mxu0 0
        %965 = vmatmul.mubr.bf16.gmra.mrb[0].mxu0 %v930
        %v966 = vpop.f32.mrb[0].mxu0
        %v967 = vadd.f32 %v917, %v966
        %v968 = vpop.f32.mrb[0].mxu0
        %v969 = vpop.f32.mrb[0].mxu0
        %v970 = vadd.f32 %v920, %v969
        %v971 = vpop.f32.mrb[0].mxu0
        %972 = vdwg.mxu0
        %v973 = vld [vmem:[%s11] sm:$0x1]
        %v975 = vlaneseq
        %v976 = vshrl.u32 %v975, 7
        %v977 = vsub.s32 0, %v976
        %v978 = vrot.slane %v973, %v977
        %v980 = vadd.f32 %v967, %v978
        %v981 = vadd.f32 %v970, %v978
        %v982 = vpack.c.bf16 %v981, %v980
        %v983 = vld [vmem:[%s12] sm:$0xf]
        %v984 = vld [vmem:[%s12 + $0x4] sm:$0xf]
        %v985 = vld [vmem:[%s12 + $0x8] sm:$0xf]
        %v986 = vld [vmem:[%s12 + $0xc] sm:$0xf]
        %v988 = vlaneseq
        %v989 = vshrl.u32 %v988, 7
        %v990 = vsub.s32 0, %v989
        %v991 = vrot.slane %v863, %v990
        %v997 = vunpack.c.l.b16 %v983
        %v998 = vunpack.c.l.b16 %v984
        %v999 = vunpack.c.l.b16 %v985
        %v1000 = vunpack.c.l.b16 %v986
        %v1001 = vpack.c.b16 %v998, %v997
        %v1002 = vpack.c.b16 %v1000, %v999
        %v1006 = vsel %vm749, %v982, 0
        %1008 = vmatprep.subr.bf16.mxu0 0
        %1009 = vmatpush1.bf16.msra.mxu0 %v1001
        %1010 = vmatprep.subr.bf16.mxu0 0
        %1011 = vmatpush1.bf16.msra.mxu0 %v1002
        %1012 = vmatprep.subr.bf16.mxu0 0
        %1013 = vmatpush1.bf16.msra.mxu0 0
        %1014 = vmatprep.subr.bf16.mxu0 0
        %1015 = vmatpush1.bf16.msra.mxu0 0
        %1016 = vmatprep.subr.bf16.mxu0 0
        %1017 = vmatpush1.bf16.msra.mxu0 0
        %1018 = vmatprep.subr.bf16.mxu0 0
        %1019 = vmatpush1.bf16.msra.mxu0 0
        %1020 = vmatprep.subr.bf16.mxu0 0
        %1021 = vmatpush1.bf16.msra.mxu0 0
        %1022 = vmatprep.subr.bf16.mxu0 0
        %1023 = vmatpush1.bf16.msra.mxu0 0
        %1024 = vmatprep.subr.bf16.mxu0 0
        %1025 = vmatpush1.bf16.msra.mxu0 0
        %1026 = vmatprep.subr.bf16.mxu0 0
        %1027 = vmatpush1.bf16.msra.mxu0 0
        %1028 = vmatprep.subr.bf16.mxu0 0
        %1029 = vmatpush1.bf16.msra.mxu0 0
        %1030 = vmatprep.subr.bf16.mxu0 0
        %1031 = vmatpush1.bf16.msra.mxu0 0
        %1032 = vmatprep.subr.bf16.mxu0 0
        %1033 = vmatpush1.bf16.msra.mxu0 0
        %1034 = vmatprep.subr.bf16.mxu0 0
        %1035 = vmatpush1.bf16.msra.mxu0 0
        %1036 = vmatprep.subr.bf16.mxu0 0
        %1037 = vmatpush1.bf16.msra.mxu0 0
        %1038 = vmatprep.subr.bf16.mxu0 0
        %1039 = vmatpush1.bf16.msra.mxu0 0
        %1040 = vmatprep.mubr.bf16.mxu0 0
        %1041 = vmatmul.mubr.bf16.gmra.mrb[0].mxu0 %v1006
        %v1042 = vpop.f32.mrb[0].mxu0
        %v1043 = vadd.f32 %v991, %v1042
        %v1044 = vpop.f32.mrb[0].mxu0
        %v1045 = vpop.f32.mrb[0].mxu0
        %v1046 = vadd.f32 %v991, %v1045
        %v1047 = vpop.f32.mrb[0].mxu0
        %1048 = vdwg.mxu0
        %v1049 = vsel %vm678, %v1043, -inf
        %1050 = vmax.xlane.f32.xlu0 %v1049
        %v1051 = vpop.xlane.xlu0 %1050
        %v1052 = vsel %vm678, %v1046, -inf
        %1053 = vmax.xlane.f32.xlu0 %v1052
        %v1054 = vpop.xlane.xlu0 %1053
        %v1055 = vsub.f32 %v1043, %v1051
        %v1056 = vsub.f32 %v1046, %v1054
        %v1057 = vmul.f32 %v1055, 1.442695
        %v1058 = vpow.pop %v1057
        %v1059 = vmul.f32 %v1056, 1.442695
        %v1060 = vpow.pop %v1059
        %v1061 = vsel %vm678, %v1058, 0.0
        %1062 = vadd.xlane.f32.xlu0 %v1061
        %v1063 = vpop.xlane.xlu0 %1062
        %v1064 = vsel %vm678, %v1060, 0.0
        %1065 = vadd.xlane.f32.xlu0 %v1064
        %v1066 = vpop.xlane.xlu0 %1065
        %v1067 = vpack.c.bf16 %v1060, %v1058
        %v1068 = vld [vmem:[%s13] sm:$0xf]
        %v1069 = vld [vmem:[%s13 + $0x4] sm:$0xf]
        %v1072 = vunpack.c.l.b16 %v1068
        %v1073 = vunpack.c.l.b16 %v1069
        %v1074 = vpack.c.b16 %v1073, %v1072
        %v1077 = vsel %vm678, %v1067, 0
        %1079 = vmatprep.subr.bf16.mxu0 0
        %1080 = vmatpush1.bf16.msra.mxu0 %v1074
        %1081 = vmatprep.subr.bf16.mxu0 0
        %1082 = vmatpush1.bf16.msra.mxu0 0
        %1083 = vmatprep.subr.bf16.mxu0 0
        %1084 = vmatpush1.bf16.msra.mxu0 0
        %1085 = vmatprep.subr.bf16.mxu0 0
        %1086 = vmatpush1.bf16.msra.mxu0 0
        %1087 = vmatprep.subr.bf16.mxu0 0
        %1088 = vmatpush1.bf16.msra.mxu0 0
        %1089 = vmatprep.subr.bf16.mxu0 0
        %1090 = vmatpush1.bf16.msra.mxu0 0
        %1091 = vmatprep.subr.bf16.mxu0 0
        %1092 = vmatpush1.bf16.msra.mxu0 0
        %1093 = vmatprep.subr.bf16.mxu0 0
        %1094 = vmatpush1.bf16.msra.mxu0 0
        %1095 = vmatprep.subr.bf16.mxu0 0
        %1096 = vmatpush1.bf16.msra.mxu0 0
        %1097 = vmatprep.subr.bf16.mxu0 0
        %1098 = vmatpush1.bf16.msra.mxu0 0
        %1099 = vmatprep.subr.bf16.mxu0 0
        %1100 = vmatpush1.bf16.msra.mxu0 0
        %1101 = vmatprep.subr.bf16.mxu0 0
        %1102 = vmatpush1.bf16.msra.mxu0 0
        %1103 = vmatprep.subr.bf16.mxu0 0
        %1104 = vmatpush1.bf16.msra.mxu0 0
        %1105 = vmatprep.subr.bf16.mxu0 0
        %1106 = vmatpush1.bf16.msra.mxu0 0
        %1107 = vmatprep.subr.bf16.mxu0 0
        %1108 = vmatpush1.bf16.msra.mxu0 0
        %1109 = vmatprep.subr.bf16.mxu0 0
        %1110 = vmatpush1.bf16.msra.mxu0 0
        %1111 = vmatprep.mubr.bf16.mxu0 0
        %1112 = vmatmul.mubr.bf16.gmra.mrb[0].mxu0 %v1077
        %v1113 = vpop.f32.mrb[0].mxu0
        %v1114 = vadd.f32 0.0, %v1113
        %v1115 = vpop.f32.mrb[0].mxu0
        %v1116 = vpop.f32.mrb[0].mxu0
        %v1117 = vadd.f32 0.0, %v1116
        %v1118 = vpop.f32.mrb[0].mxu0
        %1119 = vdwg.mxu0
        %v1120 = vrcp.pop %v1063
        %v1121 = vrcp.pop %v1066
        %v1122 = vmul.f32 %v1114, %v1120
        %v1123 = vmul.f32 %v1117, %v1121
        %v1124 = vpack.c.bf16 %v1123, %v1122
        %v1125 = vld [vmem:[%s14] sm:$0xf]
        %v1126 = vld [vmem:[%s14 + $0x4] sm:$0xf]
        %v1127 = vld [vmem:[%s14 + $0x8] sm:$0xf]
        %v1128 = vld [vmem:[%s14 + $0xc] sm:$0xf]
        %s1129 = scalar_lea.vmem %s9, 8
        %v1130 = vld [vmem:[%s1129] sm:$0xf]
        %v1131 = vld [vmem:[%s1129 + $0x4] sm:$0xf]
        %s1132 = scalar_lea.vmem %s10, 8
        %v1133 = vld [vmem:[%s1132] sm:$0xf]
        %v1134 = vld [vmem:[%s1132 + $0x4] sm:$0xf]
        %v1137 = vunpack.c.l.b16 %v1133
        %v1138 = vunpack.c.l.b16 %v1134
        %v1139 = vpack.c.b16 %v1138, %v1137
        %1141 = vmatprep.subr.bf16.mxu0 0
        %1142 = vmatpush1.bf16.msra.mxu0 %v1139
        %1143 = vmatprep.subr.bf16.mxu0 0
        %1144 = vmatpush1.bf16.msra.mxu0 0
        %1145 = vmatprep.subr.bf16.mxu0 0
        %1146 = vmatpush1.bf16.msra.mxu0 0
        %1147 = vmatprep.subr.bf16.mxu0 0
        %1148 = vmatpush1.bf16.msra.mxu0 0
        %1149 = vmatprep.subr.bf16.mxu0 0
        %1150 = vmatpush1.bf16.msra.mxu0 0
        %1151 = vmatprep.subr.bf16.mxu0 0
        %1152 = vmatpush1.bf16.msra.mxu0 0
        %1153 = vmatprep.subr.bf16.mxu0 0
        %1154 = vmatpush1.bf16.msra.mxu0 0
        %1155 = vmatprep.subr.bf16.mxu0 0
        %1156 = vmatpush1.bf16.msra.mxu0 0
        %1157 = vmatprep.subr.bf16.mxu0 0
        %1158 = vmatpush1.bf16.msra.mxu0 0
        %1159 = vmatprep.subr.bf16.mxu0 0
        %1160 = vmatpush1.bf16.msra.mxu0 0
        %1161 = vmatprep.subr.bf16.mxu0 0
        %1162 = vmatpush1.bf16.msra.mxu0 0
        %1163 = vmatprep.subr.bf16.mxu0 0
        %1164 = vmatpush1.bf16.msra.mxu0 0
        %1165 = vmatprep.subr.bf16.mxu0 0
        %1166 = vmatpush1.bf16.msra.mxu0 0
        %1167 = vmatprep.subr.bf16.mxu0 0
        %1168 = vmatpush1.bf16.msra.mxu0 0
        %1169 = vmatprep.subr.bf16.mxu0 0
        %1170 = vmatpush1.bf16.msra.mxu0 0
        %1171 = vmatprep.subr.bf16.mxu0 0
        %1172 = vmatpush1.bf16.msra.mxu0 0
        %1173 = vmatprep.mubr.bf16.mxu0 0
        %1174 = vmatmul.mubr.bf16.gmra.mrb[0].mxu0 %v880
        %v1175 = vpop.f32.mrb[0].mxu0
        %v1176 = vadd.f32 0.0, %v1175
        %v1177 = vpop.f32.mrb[0].mxu0
        %v1178 = vpop.f32.mrb[0].mxu0
        %v1179 = vadd.f32 0.0, %v1178
        %v1180 = vpop.f32.mrb[0].mxu0
        %1181 = vdwg.mxu0
        %v1184 = vunpack.c.l.b16 %v1130
        %v1185 = vunpack.c.l.b16 %v1131
        %v1186 = vpack.c.b16 %v1185, %v1184
        %1188 = vmatprep.subr.bf16.mxu0 0
        %1189 = vmatpush1.bf16.msra.mxu0 %v1186
        %1190 = vmatprep.subr.bf16.mxu0 0
        %1191 = vmatpush1.bf16.msra.mxu0 0
        %1192 = vmatprep.subr.bf16.mxu0 0
        %1193 = vmatpush1.bf16.msra.mxu0 0
        %1194 = vmatprep.subr.bf16.mxu0 0
        %1195 = vmatpush1.bf16.msra.mxu0 0
        %1196 = vmatprep.subr.bf16.mxu0 0
        %1197 = vmatpush1.bf16.msra.mxu0 0
        %1198 = vmatprep.subr.bf16.mxu0 0
        %1199 = vmatpush1.bf16.msra.mxu0 0
        %1200 = vmatprep.subr.bf16.mxu0 0
        %1201 = vmatpush1.bf16.msra.mxu0 0
        %1202 = vmatprep.subr.bf16.mxu0 0
        %1203 = vmatpush1.bf16.msra.mxu0 0
        %1204 = vmatprep.subr.bf16.mxu0 0
        %1205 = vmatpush1.bf16.msra.mxu0 0
        %1206 = vmatprep.subr.bf16.mxu0 0
        %1207 = vmatpush1.bf16.msra.mxu0 0
        %1208 = vmatprep.subr.bf16.mxu0 0
        %1209 = vmatpush1.bf16.msra.mxu0 0
        %1210 = vmatprep.subr.bf16.mxu0 0
        %1211 = vmatpush1.bf16.msra.mxu0 0
        %1212 = vmatprep.subr.bf16.mxu0 0
        %1213 = vmatpush1.bf16.msra.mxu0 0
        %1214 = vmatprep.subr.bf16.mxu0 0
        %1215 = vmatpush1.bf16.msra.mxu0 0
        %1216 = vmatprep.subr.bf16.mxu0 0
        %1217 = vmatpush1.bf16.msra.mxu0 0
        %1218 = vmatprep.subr.bf16.mxu0 0
        %1219 = vmatpush1.bf16.msra.mxu0 0
        %1220 = vmatprep.mubr.bf16.mxu0 0
        %1221 = vmatmul.mubr.bf16.gmra.mrb[0].mxu0 %v930
        %v1222 = vpop.f32.mrb[0].mxu0
        %v1223 = vadd.f32 %v1176, %v1222
        %v1224 = vpop.f32.mrb[0].mxu0
        %v1225 = vpop.f32.mrb[0].mxu0
        %v1226 = vadd.f32 %v1179, %v1225
        %v1227 = vpop.f32.mrb[0].mxu0
        %1228 = vdwg.mxu0
        %s1229 = scalar_lea.vmem %s11, 1
        %v1230 = vld [vmem:[%s1229] sm:$0x1]
        %v1232 = vlaneseq
        %v1233 = vshrl.u32 %v1232, 7
        %v1234 = vsub.s32 0, %v1233
        %v1235 = vrot.slane %v1230, %v1234
        %v1237 = vadd.f32 %v1223, %v1235
        %v1238 = vadd.f32 %v1226, %v1235
        %v1239 = vpack.c.bf16 %v1238, %v1237
        %s1240 = scalar_lea.vmem %s12, 16
        %v1241 = vld [vmem:[%s1240] sm:$0xf]
        %v1242 = vld [vmem:[%s1240 + $0x4] sm:$0xf]
        %v1243 = vld [vmem:[%s1240 + $0x8] sm:$0xf]
        %v1244 = vld [vmem:[%s1240 + $0xc] sm:$0xf]
        %v1249 = vunpack.c.l.b16 %v1241
        %v1250 = vunpack.c.l.b16 %v1242
        %v1251 = vunpack.c.l.b16 %v1243
        %v1252 = vunpack.c.l.b16 %v1244
        %v1253 = vpack.c.b16 %v1250, %v1249
        %v1254 = vpack.c.b16 %v1252, %v1251
        %v1258 = vsel %vm749, %v1239, 0
        %1260 = vmatprep.subr.bf16.mxu0 0
        %1261 = vmatpush1.bf16.msra.mxu0 %v1253
        %1262 = vmatprep.subr.bf16.mxu0 0
        %1263 = vmatpush1.bf16.msra.mxu0 %v1254
        %1264 = vmatprep.subr.bf16.mxu0 0
        %1265 = vmatpush1.bf16.msra.mxu0 0
        %1266 = vmatprep.subr.bf16.mxu0 0
        %1267 = vmatpush1.bf16.msra.mxu0 0
        %1268 = vmatprep.subr.bf16.mxu0 0
        %1269 = vmatpush1.bf16.msra.mxu0 0
        %1270 = vmatprep.subr.bf16.mxu0 0
        %1271 = vmatpush1.bf16.msra.mxu0 0
        %1272 = vmatprep.subr.bf16.mxu0 0
        %1273 = vmatpush1.bf16.msra.mxu0 0
        %1274 = vmatprep.subr.bf16.mxu0 0
        %1275 = vmatpush1.bf16.msra.mxu0 0
        %1276 = vmatprep.subr.bf16.mxu0 0
        %1277 = vmatpush1.bf16.msra.mxu0 0
        %1278 = vmatprep.subr.bf16.mxu0 0
        %1279 = vmatpush1.bf16.msra.mxu0 0
        %1280 = vmatprep.subr.bf16.mxu0 0
        %1281 = vmatpush1.bf16.msra.mxu0 0
        %1282 = vmatprep.subr.bf16.mxu0 0
        %1283 = vmatpush1.bf16.msra.mxu0 0
        %1284 = vmatprep.subr.bf16.mxu0 0
        %1285 = vmatpush1.bf16.msra.mxu0 0
        %1286 = vmatprep.subr.bf16.mxu0 0
        %1287 = vmatpush1.bf16.msra.mxu0 0
        %1288 = vmatprep.subr.bf16.mxu0 0
        %1289 = vmatpush1.bf16.msra.mxu0 0
        %1290 = vmatprep.subr.bf16.mxu0 0
        %1291 = vmatpush1.bf16.msra.mxu0 0
        %1292 = vmatprep.mubr.bf16.mxu0 0
        %1293 = vmatmul.mubr.bf16.gmra.mrb[0].mxu0 %v1258
        %v1294 = vpop.f32.mrb[0].mxu0
        %v1295 = vadd.f32 %v991, %v1294
        %v1296 = vpop.f32.mrb[0].mxu0
        %v1297 = vpop.f32.mrb[0].mxu0
        %v1298 = vadd.f32 %v991, %v1297
        %v1299 = vpop.f32.mrb[0].mxu0
        %1300 = vdwg.mxu0
        %v1301 = vsel %vm678, %v1295, -inf
        %1302 = vmax.xlane.f32.xlu0 %v1301
        %v1303 = vpop.xlane.xlu0 %1302
        %v1304 = vsel %vm678, %v1298, -inf
        %1305 = vmax.xlane.f32.xlu0 %v1304
        %v1306 = vpop.xlane.xlu0 %1305
        %v1307 = vsub.f32 %v1295, %v1303
        %v1308 = vsub.f32 %v1298, %v1306
        %v1309 = vmul.f32 %v1307, 1.442695
        %v1310 = vpow.pop %v1309
        %v1311 = vmul.f32 %v1308, 1.442695
        %v1312 = vpow.pop %v1311
        %v1313 = vsel %vm678, %v1310, 0.0
        %1314 = vadd.xlane.f32.xlu0 %v1313
        %v1315 = vpop.xlane.xlu0 %1314
        %v1316 = vsel %vm678, %v1312, 0.0
        %1317 = vadd.xlane.f32.xlu0 %v1316
        %v1318 = vpop.xlane.xlu0 %1317
        %v1319 = vpack.c.bf16 %v1312, %v1310
        %s1320 = scalar_lea.vmem %s13, 8
        %v1321 = vld [vmem:[%s1320] sm:$0xf]
        %v1322 = vld [vmem:[%s1320 + $0x4] sm:$0xf]
        %v1325 = vunpack.c.l.b16 %v1321
        %v1326 = vunpack.c.l.b16 %v1322
        %v1327 = vpack.c.b16 %v1326, %v1325
        %v1330 = vsel %vm678, %v1319, 0
        %1332 = vmatprep.subr.bf16.mxu0 0
        %1333 = vmatpush1.bf16.msra.mxu0 %v1327
        %1334 = vmatprep.subr.bf16.mxu0 0
        %1335 = vmatpush1.bf16.msra.mxu0 0
        %1336 = vmatprep.subr.bf16.mxu0 0
        %1337 = vmatpush1.bf16.msra.mxu0 0
        %1338 = vmatprep.subr.bf16.mxu0 0
        %1339 = vmatpush1.bf16.msra.mxu0 0
        %1340 = vmatprep.subr.bf16.mxu0 0
        %1341 = vmatpush1.bf16.msra.mxu0 0
        %1342 = vmatprep.subr.bf16.mxu0 0
        %1343 = vmatpush1.bf16.msra.mxu0 0
        %1344 = vmatprep.subr.bf16.mxu0 0
        %1345 = vmatpush1.bf16.msra.mxu0 0
        %1346 = vmatprep.subr.bf16.mxu0 0
        %1347 = vmatpush1.bf16.msra.mxu0 0
        %1348 = vmatprep.subr.bf16.mxu0 0
        %1349 = vmatpush1.bf16.msra.mxu0 0
        %1350 = vmatprep.subr.bf16.mxu0 0
        %1351 = vmatpush1.bf16.msra.mxu0 0
        %1352 = vmatprep.subr.bf16.mxu0 0
        %1353 = vmatpush1.bf16.msra.mxu0 0
        %1354 = vmatprep.subr.bf16.mxu0 0
        %1355 = vmatpush1.bf16.msra.mxu0 0
        %1356 = vmatprep.subr.bf16.mxu0 0
        %1357 = vmatpush1.bf16.msra.mxu0 0
        %1358 = vmatprep.subr.bf16.mxu0 0
        %1359 = vmatpush1.bf16.msra.mxu0 0
        %1360 = vmatprep.subr.bf16.mxu0 0
        %1361 = vmatpush1.bf16.msra.mxu0 0
        %1362 = vmatprep.subr.bf16.mxu0 0
        %1363 = vmatpush1.bf16.msra.mxu0 0
        %1364 = vmatprep.mubr.bf16.mxu0 0
        %1365 = vmatmul.mubr.bf16.gmra.mrb[0].mxu0 %v1330
        %v1366 = vpop.f32.mrb[0].mxu0
        %v1367 = vadd.f32 0.0, %v1366
        %v1368 = vpop.f32.mrb[0].mxu0
        %v1369 = vpop.f32.mrb[0].mxu0
        %v1370 = vadd.f32 0.0, %v1369
        %v1371 = vpop.f32.mrb[0].mxu0
        %1372 = vdwg.mxu0
        %v1373 = vrcp.pop %v1315
        %v1374 = vrcp.pop %v1318
        %v1375 = vmul.f32 %v1367, %v1373
        %v1376 = vmul.f32 %v1370, %v1374
        %v1377 = vpack.c.bf16 %v1376, %v1375
        %s1378 = scalar_lea.vmem %s14, 16
        %v1379 = vld [vmem:[%s1378] sm:$0xf]
        %v1380 = vld [vmem:[%s1378 + $0x4] sm:$0xf]
        %v1381 = vld [vmem:[%s1378 + $0x8] sm:$0xf]
        %v1382 = vld [vmem:[%s1378 + $0xc] sm:$0xf]
        %v1387 = vunpack.c.l.b16 %v1379
        %v1388 = vunpack.c.l.b16 %v1380
        %v1389 = vunpack.c.l.b16 %v1381
        %v1390 = vunpack.c.l.b16 %v1382
        %v1391 = vpack.c.b16 %v1388, %v1387
        %v1392 = vpack.c.b16 %v1390, %v1389
        %v1396 = vsel %vm749, %v1377, 0
        %1398 = vmatprep.subr.bf16.mxu0 0
        %1399 = vmatpush1.bf16.msra.mxu0 %v1391
        %1400 = vmatprep.subr.bf16.mxu0 0
        %1401 = vmatpush1.bf16.msra.mxu0 %v1392
        %1402 = vmatprep.subr.bf16.mxu0 0
        %1403 = vmatpush1.bf16.msra.mxu0 0
        %1404 = vmatprep.subr.bf16.mxu0 0
        %1405 = vmatpush1.bf16.msra.mxu0 0
        %1406 = vmatprep.subr.bf16.mxu0 0
        %1407 = vmatpush1.bf16.msra.mxu0 0
        %1408 = vmatprep.subr.bf16.mxu0 0
        %1409 = vmatpush1.bf16.msra.mxu0 0
        %1410 = vmatprep.subr.bf16.mxu0 0
        %1411 = vmatpush1.bf16.msra.mxu0 0
        %1412 = vmatprep.subr.bf16.mxu0 0
        %1413 = vmatpush1.bf16.msra.mxu0 0
        %1414 = vmatprep.subr.bf16.mxu0 0
        %1415 = vmatpush1.bf16.msra.mxu0 0
        %1416 = vmatprep.subr.bf16.mxu0 0
        %1417 = vmatpush1.bf16.msra.mxu0 0
        %1418 = vmatprep.subr.bf16.mxu0 0
        %1419 = vmatpush1.bf16.msra.mxu0 0
        %1420 = vmatprep.subr.bf16.mxu0 0
        %1421 = vmatpush1.bf16.msra.mxu0 0
        %1422 = vmatprep.subr.bf16.mxu0 0
        %1423 = vmatpush1.bf16.msra.mxu0 0
        %1424 = vmatprep.subr.bf16.mxu0 0
        %1425 = vmatpush1.bf16.msra.mxu0 0
        %1426 = vmatprep.subr.bf16.mxu0 0
        %1427 = vmatpush1.bf16.msra.mxu0 0
        %1428 = vmatprep.subr.bf16.mxu0 0
        %1429 = vmatpush1.bf16.msra.mxu0 0
        %1430 = vmatprep.mubr.bf16.mxu0 0
        %1431 = vmatmul.mubr.bf16.gmra.mrb[0].mxu0 %v1396
        %v1432 = vpop.f32.mrb[0].mxu0
        %v1433 = vadd.f32 0.0, %v1432
        %v1434 = vpop.f32.mrb[0].mxu0
        %v1435 = vpop.f32.mrb[0].mxu0
        %v1436 = vadd.f32 0.0, %v1435
        %v1437 = vpop.f32.mrb[0].mxu0
        %1438 = vdwg.mxu0
        %v1443 = vunpack.c.l.b16 %v1125
        %v1444 = vunpack.c.l.b16 %v1126
        %v1445 = vunpack.c.l.b16 %v1127
        %v1446 = vunpack.c.l.b16 %v1128
        %v1447 = vpack.c.b16 %v1444, %v1443
        %v1448 = vpack.c.b16 %v1446, %v1445
        %v1452 = vsel %vm749, %v1124, 0
        %1454 = vmatprep.subr.bf16.mxu0 0
        %1455 = vmatpush1.bf16.msra.mxu0 %v1447
        %1456 = vmatprep.subr.bf16.mxu0 0
        %1457 = vmatpush1.bf16.msra.mxu0 %v1448
        %1458 = vmatprep.subr.bf16.mxu0 0
        %1459 = vmatpush1.bf16.msra.mxu0 0
        %1460 = vmatprep.subr.bf16.mxu0 0
        %1461 = vmatpush1.bf16.msra.mxu0 0
        %1462 = vmatprep.subr.bf16.mxu0 0
        %1463 = vmatpush1.bf16.msra.mxu0 0
        %1464 = vmatprep.subr.bf16.mxu0 0
        %1465 = vmatpush1.bf16.msra.mxu0 0
        %1466 = vmatprep.subr.bf16.mxu0 0
        %1467 = vmatpush1.bf16.msra.mxu0 0
        %1468 = vmatprep.subr.bf16.mxu0 0
        %1469 = vmatpush1.bf16.msra.mxu0 0
        %1470 = vmatprep.subr.bf16.mxu0 0
        %1471 = vmatpush1.bf16.msra.mxu0 0
        %1472 = vmatprep.subr.bf16.mxu0 0
        %1473 = vmatpush1.bf16.msra.mxu0 0
        %1474 = vmatprep.subr.bf16.mxu0 0
        %1475 = vmatpush1.bf16.msra.mxu0 0
        %1476 = vmatprep.subr.bf16.mxu0 0
        %1477 = vmatpush1.bf16.msra.mxu0 0
        %1478 = vmatprep.subr.bf16.mxu0 0
        %1479 = vmatpush1.bf16.msra.mxu0 0
        %1480 = vmatprep.subr.bf16.mxu0 0
        %1481 = vmatpush1.bf16.msra.mxu0 0
        %1482 = vmatprep.subr.bf16.mxu0 0
        %1483 = vmatpush1.bf16.msra.mxu0 0
        %1484 = vmatprep.subr.bf16.mxu0 0
        %1485 = vmatpush1.bf16.msra.mxu0 0
        %1486 = vmatprep.mubr.bf16.mxu0 0
        %1487 = vmatmul.mubr.bf16.gmra.mrb[0].mxu0 %v1452
        %v1488 = vpop.f32.mrb[0].mxu0
        %v1489 = vadd.f32 %v1433, %v1488
        %v1490 = vpop.f32.mrb[0].mxu0
        %v1491 = vpop.f32.mrb[0].mxu0
        %v1492 = vadd.f32 %v1436, %v1491
        %v1493 = vpop.f32.mrb[0].mxu0
        %1494 = vdwg.mxu0
        %v1495 = vld [vmem:[%s15] sm:$0x1]
        %v1497 = vlaneseq
        %v1498 = vshrl.u32 %v1497, 7
        %v1499 = vsub.s32 0, %v1498
        %v1500 = vrot.slane %v1495, %v1499
        %v1502 = vadd.f32 %v1489, %v1500
        %v1503 = vadd.f32 %v1492, %v1500
        %v1504 = vmax.f32 %v1502, 0.0
        %v1505 = vmax.f32 %v1503, 0.0
        %v1506 = vpack.c.bf16 %v1505, %v1504
        %v1507 = vld [vmem:[%s16] sm:$0xf]
        %v1508 = vld [vmem:[%s16 + $0x4] sm:$0xf]
        %v1509 = vld [vmem:[%s16 + $0x8] sm:$0xf]
        %v1510 = vld [vmem:[%s16 + $0xc] sm:$0xf]
        %v1511 = vld [vmem:[%s16 + $0x10] sm:$0xf]
        %v1512 = vld [vmem:[%s16 + $0x14] sm:$0xf]
        %v1513 = vld [vmem:[%s16 + $0x18] sm:$0xf]
        %v1514 = vld [vmem:[%s16 + $0x1c] sm:$0xf]
        %v1515 = vld [vmem:[%s17] sm:$0x1]
        %v1517 = vlaneseq
        %v1518 = vshrl.u32 %v1517, 7
        %v1519 = vsub.s32 0, %v1518
        %v1520 = vrot.slane %v1515, %v1519
        %v1530 = vunpack.c.l.b16 %v1507
        %v1531 = vunpack.c.l.b16 %v1508
        %v1532 = vunpack.c.l.b16 %v1509
        %v1533 = vunpack.c.l.b16 %v1510
        %v1534 = vunpack.c.l.b16 %v1511
        %v1535 = vunpack.c.l.b16 %v1512
        %v1536 = vunpack.c.l.b16 %v1513
        %v1537 = vunpack.c.l.b16 %v1514
        %v1538 = vpack.c.b16 %v1531, %v1530
        %v1539 = vpack.c.b16 %v1533, %v1532
        %v1540 = vpack.c.b16 %v1535, %v1534
        %v1541 = vpack.c.b16 %v1537, %v1536
        %vm1546 = vcmask 523264
        %v1548 = vsel %vm1546, %v1506, 0
        %1550 = vmatprep.subr.bf16.mxu0 0
        %1551 = vmatpush1.bf16.msra.mxu0 %v1538
        %1552 = vmatprep.subr.bf16.mxu0 0
        %1553 = vmatpush1.bf16.msra.mxu0 %v1539
        %1554 = vmatprep.subr.bf16.mxu0 0
        %1555 = vmatpush1.bf16.msra.mxu0 %v1540
        %1556 = vmatprep.subr.bf16.mxu0 0
        %1557 = vmatpush1.bf16.msra.mxu0 %v1541
        %1558 = vmatprep.subr.bf16.mxu0 0
        %1559 = vmatpush1.bf16.msra.mxu0 0
        %1560 = vmatprep.subr.bf16.mxu0 0
        %1561 = vmatpush1.bf16.msra.mxu0 0
        %1562 = vmatprep.subr.bf16.mxu0 0
        %1563 = vmatpush1.bf16.msra.mxu0 0
        %1564 = vmatprep.subr.bf16.mxu0 0
        %1565 = vmatpush1.bf16.msra.mxu0 0
        %1566 = vmatprep.subr.bf16.mxu0 0
        %1567 = vmatpush1.bf16.msra.mxu0 0
        %1568 = vmatprep.subr.bf16.mxu0 0
        %1569 = vmatpush1.bf16.msra.mxu0 0
        %1570 = vmatprep.subr.bf16.mxu0 0
        %1571 = vmatpush1.bf16.msra.mxu0 0
        %1572 = vmatprep.subr.bf16.mxu0 0
        %1573 = vmatpush1.bf16.msra.mxu0 0
        %1574 = vmatprep.subr.bf16.mxu0 0
        %1575 = vmatpush1.bf16.msra.mxu0 0
        %1576 = vmatprep.subr.bf16.mxu0 0
        %1577 = vmatpush1.bf16.msra.mxu0 0
        %1578 = vmatprep.subr.bf16.mxu0 0
        %1579 = vmatpush1.bf16.msra.mxu0 0
        %1580 = vmatprep.subr.bf16.mxu0 0
        %1581 = vmatpush1.bf16.msra.mxu0 0
        %1582 = vmatprep.mubr.bf16.mxu0 0
        %1583 = vmatmul.mubr.bf16.gmra.mrb[0].mxu0 %v1548
        %v1584 = vpop.f32.mrb[0].mxu0
        %v1585 = vadd.f32 %v1520, %v1584
        %v1586 = vpop.f32.mrb[0].mxu0
        %v1587 = vpop.f32.mrb[0].mxu0
        %v1588 = vadd.f32 %v1520, %v1587
        %v1589 = vpop.f32.mrb[0].mxu0
        %1590 = vdwg.mxu0
        %v1591 = vmax.f32 %v1585, 0.0
        %v1592 = vmax.f32 %v1588, 0.0
        %v1593 = vpack.c.bf16 %v1592, %v1591
        %v1594 = vld [vmem:[%s18] sm:$0xf]
        %v1595 = vld [vmem:[%s18 + $0x4] sm:$0xf]
        %v1596 = vld [vmem:[%s18 + $0x8] sm:$0xf]
        %v1597 = vld [vmem:[%s18 + $0xc] sm:$0xf]
        %v1598 = vld [vmem:[%s19] sm:$0x1]
        %v1600 = vlaneseq
        %v1601 = vshrl.u32 %v1600, 7
        %v1602 = vsub.s32 0, %v1601
        %v1603 = vrot.slane %v1598, %v1602
        %v1609 = vunpack.c.l.b16 %v1594
        %v1610 = vunpack.c.l.b16 %v1595
        %v1611 = vunpack.c.l.b16 %v1596
        %v1612 = vunpack.c.l.b16 %v1597
        %v1613 = vpack.c.b16 %v1610, %v1609
        %v1614 = vpack.c.b16 %v1612, %v1611
        %v1618 = vsel %vm749, %v1593, 0
        %1620 = vmatprep.subr.bf16.mxu0 0
        %1621 = vmatpush1.bf16.msra.mxu0 %v1613
        %1622 = vmatprep.subr.bf16.mxu0 0
        %1623 = vmatpush1.bf16.msra.mxu0 %v1614
        %1624 = vmatprep.subr.bf16.mxu0 0
        %1625 = vmatpush1.bf16.msra.mxu0 0
        %1626 = vmatprep.subr.bf16.mxu0 0
        %1627 = vmatpush1.bf16.msra.mxu0 0
        %1628 = vmatprep.subr.bf16.mxu0 0
        %1629 = vmatpush1.bf16.msra.mxu0 0
        %1630 = vmatprep.subr.bf16.mxu0 0
        %1631 = vmatpush1.bf16.msra.mxu0 0
        %1632 = vmatprep.subr.bf16.mxu0 0
        %1633 = vmatpush1.bf16.msra.mxu0 0
        %1634 = vmatprep.subr.bf16.mxu0 0
        %1635 = vmatpush1.bf16.msra.mxu0 0
        %1636 = vmatprep.subr.bf16.mxu0 0
        %1637 = vmatpush1.bf16.msra.mxu0 0
        %1638 = vmatprep.subr.bf16.mxu0 0
        %1639 = vmatpush1.bf16.msra.mxu0 0
        %1640 = vmatprep.subr.bf16.mxu0 0
        %1641 = vmatpush1.bf16.msra.mxu0 0
        %1642 = vmatprep.subr.bf16.mxu0 0
        %1643 = vmatpush1.bf16.msra.mxu0 0
        %1644 = vmatprep.subr.bf16.mxu0 0
        %1645 = vmatpush1.bf16.msra.mxu0 0
        %1646 = vmatprep.subr.bf16.mxu0 0
        %1647 = vmatpush1.bf16.msra.mxu0 0
        %1648 = vmatprep.subr.bf16.mxu0 0
        %1649 = vmatpush1.bf16.msra.mxu0 0
        %1650 = vmatprep.subr.bf16.mxu0 0
        %1651 = vmatpush1.bf16.msra.mxu0 0
        %1652 = vmatprep.mubr.bf16.mxu0 0
        %1653 = vmatmul.mubr.bf16.gmra.mrb[0].mxu0 %v1618
        %v1654 = vpop.f32.mrb[0].mxu0
        %v1655 = vadd.f32 %v1603, %v1654
        %v1656 = vpop.f32.mrb[0].mxu0
        %v1657 = vpop.f32.mrb[0].mxu0
        %v1658 = vadd.f32 %v1603, %v1657
        %v1659 = vpop.f32.mrb[0].mxu0
        %1660 = vdwg.mxu0
        %1661 = vst [vmem:[%s639] sm:$0xff] %v1655
        %1662 = vst [vmem:[%s639 + $0x8] sm:$0xff] %v1658
        %s1663 = sand.u32 %s472, 1
        %s1664 = scalar_lea.sflag [#allocation3], %s1663
        %s1665 = sand.u32 %s472, 1
        %s1666 = smul.addr %s1665, 16
        %s1667 = scalar_lea.vmem [#allocation2], %s1666
        // Predicated region
        $region101: #{tpu_custom_call.1} parent=99 // pred_check
          %p1668 = pneg %p482
        $region102: #{tpu_custom_call.1} parent=99 // pred_check_branch
          %1670 = sbr.rel (%p1668) target = $region104
        $region103: #{tpu_custom_call.1} parent=99 // pred_region
          %s1671 = smul.u32 2, %s34
          %s1673 = ssub.s32 256, 256
          %1674 = vsyncadd %s1664, %s1673
          %s1675 = smul.addr %s1671, 128
          %s1676 = scalar_lea.hbm %s20, %s1675
          %s1677 = sshll.u32 %s1667, 4
          %s1678 = int_to_ptr.vmem [resolvable:$true] %s1677
          %1683 = dma.vmem_to_hbm [thread:$0]  %s1678, 256, %s1676, %s1664, 128, 128, 8
        $region104: #{tpu_custom_call.1} parent=99 // pred_fallthru
          _
      $region100: #{tpu_custom_call.1} parent=5 // pred_fallthru
        _
      %p1684 = scmp.le.s32.totalorder 2, %s29
      // Predicated region
      $region105: #{tpu_custom_call.1} parent=5 // pred_check
        %p1685 = pneg %p1684
      $region106: #{tpu_custom_call.1} parent=5 // pred_check_branch
        %1687 = sbr.rel (%p1685) target = $region108
      $region107: #{tpu_custom_call.1} parent=5 // pred_region
        %s1688 = ssub.s32 %s29, 2
        // Predicated region
        $region109: #{tpu_custom_call.1} parent=107 // pred_check
          %p1689 = pneg %p488
        $region110: #{tpu_custom_call.1} parent=107 // pred_check_branch
          %1691 = sbr.rel (%p1689) target = $region112
        $region111: #{tpu_custom_call.1} parent=107 // pred_region
          %s1692 = sand.u32 %s473, 1
          %s1693 = scalar_lea.sflag [#allocation3], %s1692
          %s1694 = sand.u32 %s473, 1
          %s1695 = smul.addr %s1694, 16
          %s1696 = scalar_lea.vmem [#allocation2], %s1695
          %1697 = dma.done %s1693, 256
        $region112: #{tpu_custom_call.1} parent=107 // pred_fallthru
          _
      $region108: #{tpu_custom_call.1} parent=5 // pred_fallthru
        _
    $region6: #{tpu_custom_call.1} parent=1 // loop_footer
      %s33 = sadd.s32 1, %s29
    $region7: #{tpu_custom_call.1} parent=1 // loop_footer_branch
      %28 = sbr.rel target = $region3
    $region8: #{tpu_custom_call.1} parent=1 // loop_exit
      _
    %1698 = vsyncpa [#allocation3], 1
    %s1699 = scalar_lea.sflag [#allocation3], 1
    %1700 = vsyncpa %s1699, 1

</llo_original>
